<compile_context>
chip_gen: v7x
topology: tpu7x:2x2x1
jax: 0.10.0
libtpu: 0.0.40
codegen_flags: <defaults>
</compile_context>

<pallas_src>
import jax
import jax.numpy as jnp
from jax import lax
from jax.experimental import pallas as pl
from jax.experimental.pallas import tpu as pltpu


# ----------------------------- Pallas kernel ---------------------------------

def bilstm_head_kernel(
    x_ref,        # (T*BP, D)   bf16 time-major flattened input (row = t*BP + b)
    wih01_ref,    # (D, 8H)     bf16 layer-0 input weights, [fwd 4H | rev 4H], gates (i,f,g,o)
    b01_ref,      # (1, 8H)     f32  layer-0 fused biases (b_ih + b_hh), fwd | rev
    whh0_ref,     # (2H, 8H)    bf16 block-diag(whh_f0, whh_r0)
    wih1_ref,     # (2H, 8H)    bf16 block-diag(wih1[:H], wih1[H:])  (layer-1 rev input weights)
    b1_ref,       # (1, 4H)     f32  layer-1 reverse fused bias
    whh1_ref,     # (H, 4H)     bf16 layer-1 reverse recurrent weights
    wlin_ref,     # (H, O)      f32  linear head
    blin_ref,     # (1, O)      f32
    out_ref,      # (BP, O)     f32
    xw0_ref,      # scratch (T*BP, 8H) f32: layer-0 input projections (fwd | rev)
    xw1_ref,      # scratch (T*BP, 8H) f32: layer-1 projection halves (fwd-contrib | rev-contrib)
):
    TB = x_ref.shape[0]
    BP = out_ref.shape[0]
    T = TB // BP
    H = whh1_ref.shape[0]
    G = 4 * H

    # ---- bulk layer-0 input projection: both directions, all timesteps, one MXU matmul ----
    xw0_ref[...] = (
        jnp.dot(x_ref[...], wih01_ref[...], preferred_element_type=jnp.float32)
        + b01_ref[...]
    )

    # Loop-invariant weights loaded once.
    whh0 = whh0_ref[...]          # (2H, 8H) bf16 block-diag
    wih1 = wih1_ref[...]          # (2H, 8H) bf16 block-diag
    whh1 = whh1_ref[...]          # (H, 4H)  bf16
    b1 = b1_ref[...]              # (1, 4H)  f32

    def lstm_gates(pre, c):
        # pre: (BP, 4H) fused pre-activations, PyTorch gate order (i, f, g, o).
        sig = jax.nn.sigmoid(pre)                    # one EUP pass over the 4H tile
        g = jnp.tanh(pre[:, 2 * H:3 * H])
        c_new = sig[:, H:2 * H] * c + sig[:, 0:H] * g
        h_new = sig[:, 3 * H:4 * H] * jnp.tanh(c_new)
        return h_new, c_new

    zeros = jnp.zeros((BP, H), jnp.float32)

    # ---- layer 0: fwd & rev recurrences interleaved, one fused block-diag matmul / step ----
    c_f, c_r = zeros, zeros
    for i in range(T):
        rf = i * BP                    # forward-direction time row (8-sublane aligned)
        rr = (T - 1 - i) * BP          # reverse-direction time row
        if i == 0:
            pre_f = xw0_ref[rf:rf + BP, 0:G]
            pre_r = xw0_ref[rr:rr + BP, G:2 * G]
        else:
            rec = jnp.dot(h_cat.astype(jnp.bfloat16), whh0,
                          preferred_element_type=jnp.float32)      # (BP, 8H)
            pre_f = xw0_ref[rf:rf + BP, 0:G] + rec[:, 0:G]
            pre_r = xw0_ref[rr:rr + BP, G:2 * G] + rec[:, G:2 * G]
        h_f, c_f = lstm_gates(pre_f, c_f)
        h_r, c_r = lstm_gates(pre_r, c_r)
        h_cat = jnp.concatenate([h_f, h_r], axis=1)                # (BP, 2H)
        # Layer-1 input projection folded into the loop; independent of the next
        # iteration's recurrent matmul (which only needs h_cat), so it hides in MXU slack.
        proj = jnp.dot(h_cat.astype(jnp.bfloat16), wih1,
                       preferred_element_type=jnp.float32)         # (BP, 8H)
        xw1_ref[rf:rf + BP, 0:G] = proj[:, 0:G]          # h_f(t=i)      contribution
        xw1_ref[rr:rr + BP, G:2 * G] = proj[:, G:2 * G]  # h_r(t=T-1-i)  contribution

    # ---- layer 1, reverse recurrence: final state == PyTorch hidden[-1] ----
    h1, c1 = zeros, zeros
    for i in range(T):
        r = (T - 1 - i) * BP
        pre = xw1_ref[r:r + BP, 0:G] + xw1_ref[r:r + BP, G:2 * G] + b1
        if i > 0:
            pre = pre + jnp.dot(h1.astype(jnp.bfloat16), whh1,
                                preferred_element_type=jnp.float32)
        h1, c1 = lstm_gates(pre, c1)

    # ---- linear head (tiny, kept f32), fused after h1 ----
    out_ref[...] = (
        jnp.dot(h1, wlin_ref[...], preferred_element_type=jnp.float32)
        + blin_ref[...]
    )


# ------------------------------ parameter init --------------------------------

def init_params(key, input_dim, hidden_dim, output_dim):
    """PyTorch-style uniform(-1/sqrt(H), 1/sqrt(H)) init, fused into kernel layout (f32)."""
    H, D, O = hidden_dim, input_dim, output_dim
    k = 1.0 / jnp.sqrt(jnp.float32(H))
    names_shapes = [
        ("w_ih_l0",     (4 * H, D)),     ("w_hh_l0",     (4 * H, H)),
        ("b_ih_l0",     (4 * H,)),       ("b_hh_l0",     (4 * H,)),
        ("w_ih_l0_rev", (4 * H, D)),     ("w_hh_l0_rev", (4 * H, H)),
        ("b_ih_l0_rev", (4 * H,)),       ("b_hh_l0_rev", (4 * H,)),
        ("w_ih_l1_rev", (4 * H, 2 * H)), ("w_hh_l1_rev", (4 * H, H)),
        ("b_ih_l1_rev", (4 * H,)),       ("b_hh_l1_rev", (4 * H,)),
        ("w_lin",       (O, H)),         ("b_lin",       (O,)),
    ]
    keys = jax.random.split(key, len(names_shapes))
    raw = {n: jax.random.uniform(kk, s, jnp.float32, -k, k)
           for kk, (n, s) in zip(keys, names_shapes)}

    # Transposing PyTorch (4H, in) -> (in, 4H) keeps gate order (i,f,g,o) along lanes.
    params = {
        "wih01": jnp.concatenate([raw["w_ih_l0"].T, raw["w_ih_l0_rev"].T], axis=1),  # (D, 8H)
        "b01": jnp.concatenate([raw["b_ih_l0"] + raw["b_hh_l0"],
                                raw["b_ih_l0_rev"] + raw["b_hh_l0_rev"]]
                               ).reshape(1, 8 * H),
        "whh_f0": raw["w_hh_l0"].T,            # (H, 4H)
        "whh_r0": raw["w_hh_l0_rev"].T,        # (H, 4H)
        "wih1": raw["w_ih_l1_rev"].T,          # (2H, 4H); rows [0:H]=fwd half, [H:2H]=rev half
        "b1": (raw["b_ih_l1_rev"] + raw["b_hh_l1_rev"]).reshape(1, 4 * H),
        "whh_r1": raw["w_hh_l1_rev"].T,        # (H, 4H)
        "wlin": raw["w_lin"].T,                # (H, O)
        "blin": raw["b_lin"].reshape(1, O),    # (1, O)
    }
    return params


# ------------------------------ JAX wrapper -----------------------------------

def bidirectional_rnn_forward(x, params):
    """x: (batch, seq, input_dim) float32 -> (batch, output_dim) float32."""
    B, T, D = x.shape
    H = params["whh_f0"].shape[0]
    O = params["wlin"].shape[1]
    G = 4 * H
    BP = ((B + 7) // 8) * 8                      # pad batch to the 8-sublane f32 tile
    bf16 = jnp.bfloat16

    # time-major, batch padded; row index = t*BP + b (all per-step tiles 8-aligned)
    x_p = jnp.pad(x.astype(jnp.float32), ((0, BP - B), (0, 0), (0, 0)))
    x2d = jnp.transpose(x_p, (1, 0, 2)).reshape(T * BP, D).astype(bf16)

    # block-diagonal fused recurrent weights: [h_f | h_r] @ diag(whh_f, whh_r) -> (B, 8H)
    whh_blk0 = jnp.zeros((2 * H, 2 * G), jnp.float32)
    whh_blk0 = whh_blk0.at[:H, :G].set(params["whh_f0"]).at[H:, G:].set(params["whh_r0"])
    # block-diagonal layer-1 input weights: [h_f | h_r] -> [proj_f | proj_r]
    wih1_blk = jnp.zeros((2 * H, 2 * G), jnp.float32)
    wih1_blk = wih1_blk.at[:H, :G].set(params["wih1"][:H]).at[H:, G:].set(params["wih1"][H:])

    args = (
        x2d,
        params["wih01"].astype(bf16), params["b01"],
        whh_blk0.astype(bf16), wih1_blk.astype(bf16),
        params["b1"], params["whh_r1"].astype(bf16),
        params["wlin"], params["blin"],
    )

    out = pl.pallas_call(
        bilstm_head_kernel,
        out_shape=jax.ShapeDtypeStruct((BP, O), jnp.float32),
        in_specs=[pl.BlockSpec(memory_space=pltpu.MemorySpace.VMEM)] * len(args),
        out_specs=pl.BlockSpec(memory_space=pltpu.MemorySpace.VMEM),
        scratch_shapes=[
            pltpu.VMEM((T * BP, 2 * G), jnp.float32),   # layer-0 input projections (fwd|rev)
            pltpu.VMEM((T * BP, 2 * G), jnp.float32),   # layer-1 projection halves
        ],
    )(*args)
    return out[:B]


# --------------------------- pure-JAX reference --------------------------------

def reference_forward(x, params, lstm_matmul_dtype=jnp.float32):
    """Reference.  lstm_matmul_dtype=bf16 mirrors the kernel's MXU operand casting."""
    B, T, D = x.shape
    H = params["whh_f0"].shape[0]
    G = 4 * H
    hi = lax.Precision.HIGHEST
    cast = lambda a: a.astype(lstm_matmul_dtype)
    xs = jnp.transpose(x, (1, 0, 2)).astype(jnp.float32)        # (T, B, D)

    def cell(pre, c):
        i = jax.nn.sigmoid(pre[:, 0:H])
        f = jax.nn.sigmoid(pre[:, H:2 * H])
        g = jnp.tanh(pre[:, 2 * H:3 * H])
        o = jax.nn.sigmoid(pre[:, 3 * H:4 * H])
        c = f * c + i * g
        return o * jnp.tanh(c), c

    def run(xw_seq, whh):
        whc = cast(whh)
        def step(carry, xw):
            h, c = carry
            h, c = cell(xw + jnp.dot(cast(h), whc, precision=hi,
                                     preferred_element_type=jnp.float32), c)
            return (h, c), h
        init = (jnp.zeros((B, H), jnp.float32), jnp.zeros((B, H), jnp.float32))
        (h, _), hs = lax.scan(step, init, xw_seq)
        return hs, h

    proj0 = jnp.einsum("tbd,dg->tbg", cast(xs), cast(params["wih01"]), precision=hi,
                       preferred_element_type=jnp.float32) + params["b01"]
    hs_f, _ = run(proj0[:, :, :G], params["whh_f0"])
    hs_r_rev, _ = run(proj0[::-1, :, G:], params["whh_r0"])
    hs_r = hs_r_rev[::-1]
    l1_in = jnp.concatenate([hs_f, hs_r], axis=-1)              # (T, B, 2H)
    proj1 = jnp.einsum("tbh,hg->tbg", cast(l1_in), cast(params["wih1"]), precision=hi,
                       preferred_element_type=jnp.float32) + params["b1"]
    _, h1 = run(proj1[::-1], params["whh_r1"])
    return jnp.dot(h1, params["wlin"], precision=hi) + params["blin"]


# --------------------------------- main ---------------------------------------

if __name__ == "__main__":
    B, T, D, H, O = 2, 8, 16, 32, 1   # batch, seq, input_dim, hidden_dim, output_dim

    key = jax.random.PRNGKey(0)
    k_x, k_p = jax.random.split(key)
    x = jax.random.normal(k_x, (B, T, D), jnp.float32)
    params = init_params(k_p, D, H, O)

    out = jax.block_until_ready(bidirectional_rnn_forward(x, params))
    assert out.shape == (B, O), out.shape
    assert bool(jnp.all(jnp.isfinite(out)))

    # Strict check against a reference with identical bf16 MXU-operand numerics:
    # verifies the kernel's recurrence / gate / layout logic.
    ref_bf = jax.block_until_ready(reference_forward(x, params, jnp.bfloat16))
    d_bf = float(jnp.max(jnp.abs(out - ref_bf)))
    assert bool(jnp.allclose(out, ref_bf, atol=1e-3, rtol=1e-3)), (
        "bf16-matched ref max abs diff %e" % d_bf)

    # Semantic check against the full-f32 HIGHEST-precision reference (PyTorch eval
    # semantics); tolerance accounts for bf16 matmul operands (TPU-native MXU input dtype).
    ref_f32 = jax.block_until_ready(reference_forward(x, params, jnp.float32))
    d_f32 = float(jnp.max(jnp.abs(out - ref_f32)))
    assert bool(jnp.allclose(out, ref_f32, atol=2e-2, rtol=2e-2)), (
        "f32 ref max abs diff %e" % d_f32)

    print("KERNEL_OK")
</pallas_src>

<mosaic_0001>
module attributes {stable_mosaic.version = 11 : i64} {
  func.func @bilstm_head_kernel(%arg0: memref<64x16xbf16, #tpu.memory_space<vmem>>, %arg1: memref<16x256xbf16, #tpu.memory_space<vmem>>, %arg2: memref<1x256xf32, #tpu.memory_space<vmem>>, %arg3: memref<64x256xbf16, #tpu.memory_space<vmem>>, %arg4: memref<64x256xbf16, #tpu.memory_space<vmem>>, %arg5: memref<1x128xf32, #tpu.memory_space<vmem>>, %arg6: memref<32x128xbf16, #tpu.memory_space<vmem>>, %arg7: memref<32x1xf32, #tpu.memory_space<vmem>>, %arg8: memref<1x1xf32, #tpu.memory_space<vmem>>, %arg9: memref<8x1xf32, #tpu.memory_space<vmem>>, %arg10: memref<64x256xf32, #tpu.memory_space<vmem>>, %arg11: memref<64x256xf32, #tpu.memory_space<vmem>>) attributes {dimension_semantics = [], scalar_prefetch = 0 : i64, scratch_operands = 2 : i64, tpu.core_type = #tpu.core_type<tc>} {
    %c0 = arith.constant 0 : index
    %c0_0 = arith.constant 0 : index
    %0 = vector.load %arg0[%c0, %c0_0] : memref<64x16xbf16, #tpu.memory_space<vmem>>, vector<64x16xbf16>
    %c0_1 = arith.constant 0 : index
    %c0_2 = arith.constant 0 : index
    %1 = vector.load %arg1[%c0_1, %c0_2] : memref<16x256xbf16, #tpu.memory_space<vmem>>, vector<16x256xbf16>
    %cst = arith.constant dense<0.000000e+00> : vector<64x256xf32>
    %2 = tpu.matmul %0, %1, %cst {dimension_numbers = #tpu.dot_dimension_numbers<[1], [0], [0], [1], [0, 0, 1, 1], [], []>} : vector<64x16xbf16>, vector<16x256xbf16>, vector<64x256xf32> -> vector<64x256xf32>
    %c0_3 = arith.constant 0 : index
    %c0_4 = arith.constant 0 : index
    %3 = vector.load %arg2[%c0_3, %c0_4] : memref<1x256xf32, #tpu.memory_space<vmem>>, vector<1x256xf32>
    %4 = vector.broadcast %3 : vector<1x256xf32> to vector<64x256xf32>
    %5 = arith.addf %2, %4 : vector<64x256xf32>
    %c0_5 = arith.constant 0 : index
    %c0_6 = arith.constant 0 : index
    %6 = vector.load %arg10[%c0_5, %c0_6] : memref<64x256xf32, #tpu.memory_space<vmem>>, vector<64x256xf32>
    tpu.vector_store %arg10[%c0_5, %c0_6], %5 {strides = array<i32>} : memref<64x256xf32, #tpu.memory_space<vmem>>, vector<64x256xf32>,
    %c0_7 = arith.constant 0 : index
    %c0_8 = arith.constant 0 : index
    %7 = vector.load %arg3[%c0_7, %c0_8] : memref<64x256xbf16, #tpu.memory_space<vmem>>, vector<64x256xbf16>
    %c0_9 = arith.constant 0 : index
    %c0_10 = arith.constant 0 : index
    %8 = vector.load %arg4[%c0_9, %c0_10] : memref<64x256xbf16, #tpu.memory_space<vmem>>, vector<64x256xbf16>
    %c0_11 = arith.constant 0 : index
    %c0_12 = arith.constant 0 : index
    %9 = vector.load %arg6[%c0_11, %c0_12] : memref<32x128xbf16, #tpu.memory_space<vmem>>, vector<32x128xbf16>
    %c0_13 = arith.constant 0 : index
    %c0_14 = arith.constant 0 : index
    %10 = vector.load %arg5[%c0_13, %c0_14] : memref<1x128xf32, #tpu.memory_space<vmem>>, vector<1x128xf32>
    %cst_15 = arith.constant 0.000000e+00 : f32
    %11 = vector.broadcast %cst_15 : f32 to vector<8x32xf32>
    %c0_16 = arith.constant 0 : index
    %c0_17 = arith.constant 0 : index
    %12 = vector.load %arg10[%c0_16, %c0_17] : memref<64x256xf32, #tpu.memory_space<vmem>>, vector<8x128xf32>
    %c56 = arith.constant 56 : index
    %c128 = arith.constant 128 : index
    %13 = vector.load %arg10[%c56, %c128] : memref<64x256xf32, #tpu.memory_space<vmem>>, vector<8x128xf32>
    %14 = arith.negf %12 : vector<8x128xf32>
    %15 = math.exp %14 : vector<8x128xf32>
    %cst_18 = arith.constant 1.000000e+00 : f32
    %16 = vector.broadcast %cst_18 : f32 to vector<8x128xf32>
    %17 = arith.addf %16, %15 : vector<8x128xf32>
    %18 = arith.divf %16, %17 : vector<8x128xf32>
    %19 = vector.extract_strided_slice %12 {offsets = [0, 64], sizes = [8, 32], strides = [1, 1]} : vector<8x128xf32> to vector<8x32xf32>
    %20 = math.tanh %19 : vector<8x32xf32>
    %21 = vector.extract_strided_slice %18 {offsets = [0, 32], sizes = [8, 32], strides = [1, 1]} : vector<8x128xf32> to vector<8x32xf32>
    %22 = arith.mulf %21, %11 : vector<8x32xf32>
    %23 = vector.extract_strided_slice %18 {offsets = [0, 0], sizes = [8, 32], strides = [1, 1]} : vector<8x128xf32> to vector<8x32xf32>
    %24 = arith.mulf %23, %20 : vector<8x32xf32>
    %25 = arith.addf %22, %24 : vector<8x32xf32>
    %26 = vector.extract_strided_slice %18 {offsets = [0, 96], sizes = [8, 32], strides = [1, 1]} : vector<8x128xf32> to vector<8x32xf32>
    %27 = math.tanh %25 : vector<8x32xf32>
    %28 = arith.mulf %26, %27 : vector<8x32xf32>
    %29 = arith.negf %13 : vector<8x128xf32>
    %30 = math.exp %29 : vector<8x128xf32>
    %cst_19 = arith.constant 1.000000e+00 : f32
    %31 = vector.broadcast %cst_19 : f32 to vector<8x128xf32>
    %32 = arith.addf %31, %30 : vector<8x128xf32>
    %33 = arith.divf %31, %32 : vector<8x128xf32>
    %34 = vector.extract_strided_slice %13 {offsets = [0, 64], sizes = [8, 32], strides = [1, 1]} : vector<8x128xf32> to vector<8x32xf32>
    %35 = math.tanh %34 : vector<8x32xf32>
    %36 = vector.extract_strided_slice %33 {offsets = [0, 32], sizes = [8, 32], strides = [1, 1]} : vector<8x128xf32> to vector<8x32xf32>
    %37 = arith.mulf %36, %11 : vector<8x32xf32>
    %38 = vector.extract_strided_slice %33 {offsets = [0, 0], sizes = [8, 32], strides = [1, 1]} : vector<8x128xf32> to vector<8x32xf32>
    %39 = arith.mulf %38, %35 : vector<8x32xf32>
    %40 = arith.addf %37, %39 : vector<8x32xf32>
    %41 = vector.extract_strided_slice %33 {offsets = [0, 96], sizes = [8, 32], strides = [1, 1]} : vector<8x128xf32> to vector<8x32xf32>
    %42 = math.tanh %40 : vector<8x32xf32>
    %43 = arith.mulf %41, %42 : vector<8x32xf32>
    %44 = tpu.concatenate %28, %43 in 1 : vector<8x32xf32>, vector<8x32xf32> -> vector<8x64xf32>
    %45 = arith.truncf %44 : vector<8x64xf32> to vector<8x64xbf16>
    %cst_20 = arith.constant dense<0.000000e+00> : vector<8x256xf32>
    %46 = tpu.matmul %45, %8, %cst_20 {dimension_numbers = #tpu.dot_dimension_numbers<[1], [0], [0], [1], [0, 0, 1, 1], [], []>} : vector<8x64xbf16>, vector<64x256xbf16>, vector<8x256xf32> -> vector<8x256xf32>
    %47 = vector.extract_strided_slice %46 {offsets = [0, 0], sizes = [8, 128], strides = [1, 1]} : vector<8x256xf32> to vector<8x128xf32>
    %c0_21 = arith.constant 0 : index
    %c0_22 = arith.constant 0 : index
    %48 = vector.load %arg11[%c0_21, %c0_22] : memref<64x256xf32, #tpu.memory_space<vmem>>, vector<8x128xf32>
    tpu.vector_store %arg11[%c0_21, %c0_22], %47 {strides = array<i32>} : memref<64x256xf32, #tpu.memory_space<vmem>>, vector<8x128xf32>,
    %49 = vector.extract_strided_slice %46 {offsets = [0, 128], sizes = [8, 128], strides = [1, 1]} : vector<8x256xf32> to vector<8x128xf32>
    %c56_23 = arith.constant 56 : index
    %c128_24 = arith.constant 128 : index
    %50 = vector.load %arg11[%c56_23, %c128_24] : memref<64x256xf32, #tpu.memory_space<vmem>>, vector<8x128xf32>
    tpu.vector_store %arg11[%c56_23, %c128_24], %49 {strides = array<i32>} : memref<64x256xf32, #tpu.memory_space<vmem>>, vector<8x128xf32>,
    %51 = arith.truncf %44 : vector<8x64xf32> to vector<8x64xbf16>
    %cst_25 = arith.constant dense<0.000000e+00> : vector<8x256xf32>
    %52 = tpu.matmul %51, %7, %cst_25 {dimension_numbers = #tpu.dot_dimension_numbers<[1], [0], [0], [1], [0, 0, 1, 1], [], []>} : vector<8x64xbf16>, vector<64x256xbf16>, vector<8x256xf32> -> vector<8x256xf32>
    %c8 = arith.constant 8 : index
    %c0_26 = arith.constant 0 : index
    %53 = vector.load %arg10[%c8, %c0_26] : memref<64x256xf32, #tpu.memory_space<vmem>>, vector<8x128xf32>
    %54 = vector.extract_strided_slice %52 {offsets = [0, 0], sizes = [8, 128], strides = [1, 1]} : vector<8x256xf32> to vector<8x128xf32>
    %55 = arith.addf %53, %54 : vector<8x128xf32>
    %c48 = arith.constant 48 : index
    %c128_27 = arith.constant 128 : index
    %56 = vector.load %arg10[%c48, %c128_27] : memref<64x256xf32, #tpu.memory_space<vmem>>, vector<8x128xf32>
    %57 = vector.extract_strided_slice %52 {offsets = [0, 128], sizes = [8, 128], strides = [1, 1]} : vector<8x256xf32> to vector<8x128xf32>
    %58 = arith.addf %56, %57 : vector<8x128xf32>
    %59 = arith.negf %55 : vector<8x128xf32>
    %60 = math.exp %59 : vector<8x128xf32>
    %cst_28 = arith.constant 1.000000e+00 : f32
    %61 = vector.broadcast %cst_28 : f32 to vector<8x128xf32>
    %62 = arith.addf %61, %60 : vector<8x128xf32>
    %63 = arith.divf %61, %62 : vector<8x128xf32>
    %64 = vector.extract_strided_slice %55 {offsets = [0, 64], sizes = [8, 32], strides = [1, 1]} : vector<8x128xf32> to vector<8x32xf32>
    %65 = math.tanh %64 : vector<8x32xf32>
    %66 = vector.extract_strided_slice %63 {offsets = [0, 32], sizes = [8, 32], strides = [1, 1]} : vector<8x128xf32> to vector<8x32xf32>
    %67 = arith.mulf %66, %25 : vector<8x32xf32>
    %68 = vector.extract_strided_slice %63 {offsets = [0, 0], sizes = [8, 32], strides = [1, 1]} : vector<8x128xf32> to vector<8x32xf32>
    %69 = arith.mulf %68, %65 : vector<8x32xf32>
    %70 = arith.addf %67, %69 : vector<8x32xf32>
    %71 = vector.extract_strided_slice %63 {offsets = [0, 96], sizes = [8, 32], strides = [1, 1]} : vector<8x128xf32> to vector<8x32xf32>
    %72 = math.tanh %70 : vector<8x32xf32>
    %73 = arith.mulf %71, %72 : vector<8x32xf32>
    %74 = arith.negf %58 : vector<8x128xf32>
    %75 = math.exp %74 : vector<8x128xf32>
    %cst_29 = arith.constant 1.000000e+00 : f32
    %76 = vector.broadcast %cst_29 : f32 to vector<8x128xf32>
    %77 = arith.addf %76, %75 : vector<8x128xf32>
    %78 = arith.divf %76, %77 : vector<8x128xf32>
    %79 = vector.extract_strided_slice %58 {offsets = [0, 64], sizes = [8, 32], strides = [1, 1]} : vector<8x128xf32> to vector<8x32xf32>
    %80 = math.tanh %79 : vector<8x32xf32>
    %81 = vector.extract_strided_slice %78 {offsets = [0, 32], sizes = [8, 32], strides = [1, 1]} : vector<8x128xf32> to vector<8x32xf32>
    %82 = arith.mulf %81, %40 : vector<8x32xf32>
    %83 = vector.extract_strided_slice %78 {offsets = [0, 0], sizes = [8, 32], strides = [1, 1]} : vector<8x128xf32> to vector<8x32xf32>
    %84 = arith.mulf %83, %80 : vector<8x32xf32>
    %85 = arith.addf %82, %84 : vector<8x32xf32>
    %86 = vector.extract_strided_slice %78 {offsets = [0, 96], sizes = [8, 32], strides = [1, 1]} : vector<8x128xf32> to vector<8x32xf32>
    %87 = math.tanh %85 : vector<8x32xf32>
    %88 = arith.mulf %86, %87 : vector<8x32xf32>
    %89 = tpu.concatenate %73, %88 in 1 : vector<8x32xf32>, vector<8x32xf32> -> vector<8x64xf32>
    %90 = arith.truncf %89 : vector<8x64xf32> to vector<8x64xbf16>
    %cst_30 = arith.constant dense<0.000000e+00> : vector<8x256xf32>
    %91 = tpu.matmul %90, %8, %cst_30 {dimension_numbers = #tpu.dot_dimension_numbers<[1], [0], [0], [1], [0, 0, 1, 1], [], []>} : vector<8x64xbf16>, vector<64x256xbf16>, vector<8x256xf32> -> vector<8x256xf32>
    %92 = vector.extract_strided_slice %91 {offsets = [0, 0], sizes = [8, 128], strides = [1, 1]} : vector<8x256xf32> to vector<8x128xf32>
    %c8_31 = arith.constant 8 : index
    %c0_32 = arith.constant 0 : index
    %93 = vector.load %arg11[%c8_31, %c0_32] : memref<64x256xf32, #tpu.memory_space<vmem>>, vector<8x128xf32>
    tpu.vector_store %arg11[%c8_31, %c0_32], %92 {strides = array<i32>} : memref<64x256xf32, #tpu.memory_space<vmem>>, vector<8x128xf32>,
    %94 = vector.extract_strided_slice %91 {offsets = [0, 128], sizes = [8, 128], strides = [1, 1]} : vector<8x256xf32> to vector<8x128xf32>
    %c48_33 = arith.constant 48 : index
    %c128_34 = arith.constant 128 : index
    %95 = vector.load %arg11[%c48_33, %c128_34] : memref<64x256xf32, #tpu.memory_space<vmem>>, vector<8x128xf32>
    tpu.vector_store %arg11[%c48_33, %c128_34], %94 {strides = array<i32>} : memref<64x256xf32, #tpu.memory_space<vmem>>, vector<8x128xf32>,
    %96 = arith.truncf %89 : vector<8x64xf32> to vector<8x64xbf16>
    %cst_35 = arith.constant dense<0.000000e+00> : vector<8x256xf32>
    %97 = tpu.matmul %96, %7, %cst_35 {dimension_numbers = #tpu.dot_dimension_numbers<[1], [0], [0], [1], [0, 0, 1, 1], [], []>} : vector<8x64xbf16>, vector<64x256xbf16>, vector<8x256xf32> -> vector<8x256xf32>
    %c16 = arith.constant 16 : index
    %c0_36 = arith.constant 0 : index
    %98 = vector.load %arg10[%c16, %c0_36] : memref<64x256xf32, #tpu.memory_space<vmem>>, vector<8x128xf32>
    %99 = vector.extract_strided_slice %97 {offsets = [0, 0], sizes = [8, 128], strides = [1, 1]} : vector<8x256xf32> to vector<8x128xf32>
    %100 = arith.addf %98, %99 : vector<8x128xf32>
    %c40 = arith.constant 40 : index
    %c128_37 = arith.constant 128 : index
    %101 = vector.load %arg10[%c40, %c128_37] : memref<64x256xf32, #tpu.memory_space<vmem>>, vector<8x128xf32>
    %102 = vector.extract_strided_slice %97 {offsets = [0, 128], sizes = [8, 128], strides = [1, 1]} : vector<8x256xf32> to vector<8x128xf32>
    %103 = arith.addf %101, %102 : vector<8x128xf32>
    %104 = arith.negf %100 : vector<8x128xf32>
    %105 = math.exp %104 : vector<8x128xf32>
    %cst_38 = arith.constant 1.000000e+00 : f32
    %106 = vector.broadcast %cst_38 : f32 to vector<8x128xf32>
    %107 = arith.addf %106, %105 : vector<8x128xf32>
    %108 = arith.divf %106, %107 : vector<8x128xf32>
    %109 = vector.extract_strided_slice %100 {offsets = [0, 64], sizes = [8, 32], strides = [1, 1]} : vector<8x128xf32> to vector<8x32xf32>
    %110 = math.tanh %109 : vector<8x32xf32>
    %111 = vector.extract_strided_slice %108 {offsets = [0, 32], sizes = [8, 32], strides = [1, 1]} : vector<8x128xf32> to vector<8x32xf32>
    %112 = arith.mulf %111, %70 : vector<8x32xf32>
    %113 = vector.extract_strided_slice %108 {offsets = [0, 0], sizes = [8, 32], strides = [1, 1]} : vector<8x128xf32> to vector<8x32xf32>
    %114 = arith.mulf %113, %110 : vector<8x32xf32>
    %115 = arith.addf %112, %114 : vector<8x32xf32>
    %116 = vector.extract_strided_slice %108 {offsets = [0, 96], sizes = [8, 32], strides = [1, 1]} : vector<8x128xf32> to vector<8x32xf32>
    %117 = math.tanh %115 : vector<8x32xf32>
    %118 = arith.mulf %116, %117 : vector<8x32xf32>
    %119 = arith.negf %103 : vector<8x128xf32>
    %120 = math.exp %119 : vector<8x128xf32>
    %cst_39 = arith.constant 1.000000e+00 : f32
    %121 = vector.broadcast %cst_39 : f32 to vector<8x128xf32>
    %122 = arith.addf %121, %120 : vector<8x128xf32>
    %123 = arith.divf %121, %122 : vector<8x128xf32>
    %124 = vector.extract_strided_slice %103 {offsets = [0, 64], sizes = [8, 32], strides = [1, 1]} : vector<8x128xf32> to vector<8x32xf32>
    %125 = math.tanh %124 : vector<8x32xf32>
    %126 = vector.extract_strided_slice %123 {offsets = [0, 32], sizes = [8, 32], strides = [1, 1]} : vector<8x128xf32> to vector<8x32xf32>
    %127 = arith.mulf %126, %85 : vector<8x32xf32>
    %128 = vector.extract_strided_slice %123 {offsets = [0, 0], sizes = [8, 32], strides = [1, 1]} : vector<8x128xf32> to vector<8x32xf32>
    %129 = arith.mulf %128, %125 : vector<8x32xf32>
    %130 = arith.addf %127, %129 : vector<8x32xf32>
    %131 = vector.extract_strided_slice %123 {offsets = [0, 96], sizes = [8, 32], strides = [1, 1]} : vector<8x128xf32> to vector<8x32xf32>
    %132 = math.tanh %130 : vector<8x32xf32>
    %133 = arith.mulf %131, %132 : vector<8x32xf32>
    %134 = tpu.concatenate %118, %133 in 1 : vector<8x32xf32>, vector<8x32xf32> -> vector<8x64xf32>
    %135 = arith.truncf %134 : vector<8x64xf32> to vector<8x64xbf16>
    %cst_40 = arith.constant dense<0.000000e+00> : vector<8x256xf32>
    %136 = tpu.matmul %135, %8, %cst_40 {dimension_numbers = #tpu.dot_dimension_numbers<[1], [0], [0], [1], [0, 0, 1, 1], [], []>} : vector<8x64xbf16>, vector<64x256xbf16>, vector<8x256xf32> -> vector<8x256xf32>
    %137 = vector.extract_strided_slice %136 {offsets = [0, 0], sizes = [8, 128], strides = [1, 1]} : vector<8x256xf32> to vector<8x128xf32>
    %c16_41 = arith.constant 16 : index
    %c0_42 = arith.constant 0 : index
    %138 = vector.load %arg11[%c16_41, %c0_42] : memref<64x256xf32, #tpu.memory_space<vmem>>, vector<8x128xf32>
    tpu.vector_store %arg11[%c16_41, %c0_42], %137 {strides = array<i32>} : memref<64x256xf32, #tpu.memory_space<vmem>>, vector<8x128xf32>,
    %139 = vector.extract_strided_slice %136 {offsets = [0, 128], sizes = [8, 128], strides = [1, 1]} : vector<8x256xf32> to vector<8x128xf32>
    %c40_43 = arith.constant 40 : index
    %c128_44 = arith.constant 128 : index
    %140 = vector.load %arg11[%c40_43, %c128_44] : memref<64x256xf32, #tpu.memory_space<vmem>>, vector<8x128xf32>
    tpu.vector_store %arg11[%c40_43, %c128_44], %139 {strides = array<i32>} : memref<64x256xf32, #tpu.memory_space<vmem>>, vector<8x128xf32>,
    %141 = arith.truncf %134 : vector<8x64xf32> to vector<8x64xbf16>
    %cst_45 = arith.constant dense<0.000000e+00> : vector<8x256xf32>
    %142 = tpu.matmul %141, %7, %cst_45 {dimension_numbers = #tpu.dot_dimension_numbers<[1], [0], [0], [1], [0, 0, 1, 1], [], []>} : vector<8x64xbf16>, vector<64x256xbf16>, vector<8x256xf32> -> vector<8x256xf32>
    %c24 = arith.constant 24 : index
    %c0_46 = arith.constant 0 : index
    %143 = vector.load %arg10[%c24, %c0_46] : memref<64x256xf32, #tpu.memory_space<vmem>>, vector<8x128xf32>
    %144 = vector.extract_strided_slice %142 {offsets = [0, 0], sizes = [8, 128], strides = [1, 1]} : vector<8x256xf32> to vector<8x128xf32>
    %145 = arith.addf %143, %144 : vector<8x128xf32>
    %c32 = arith.constant 32 : index
    %c128_47 = arith.constant 128 : index
    %146 = vector.load %arg10[%c32, %c128_47] : memref<64x256xf32, #tpu.memory_space<vmem>>, vector<8x128xf32>
    %147 = vector.extract_strided_slice %142 {offsets = [0, 128], sizes = [8, 128], strides = [1, 1]} : vector<8x256xf32> to vector<8x128xf32>
    %148 = arith.addf %146, %147 : vector<8x128xf32>
    %149 = arith.negf %145 : vector<8x128xf32>
    %150 = math.exp %149 : vector<8x128xf32>
    %cst_48 = arith.constant 1.000000e+00 : f32
    %151 = vector.broadcast %cst_48 : f32 to vector<8x128xf32>
    %152 = arith.addf %151, %150 : vector<8x128xf32>
    %153 = arith.divf %151, %152 : vector<8x128xf32>
    %154 = vector.extract_strided_slice %145 {offsets = [0, 64], sizes = [8, 32], strides = [1, 1]} : vector<8x128xf32> to vector<8x32xf32>
    %155 = math.tanh %154 : vector<8x32xf32>
    %156 = vector.extract_strided_slice %153 {offsets = [0, 32], sizes = [8, 32], strides = [1, 1]} : vector<8x128xf32> to vector<8x32xf32>
    %157 = arith.mulf %156, %115 : vector<8x32xf32>
    %158 = vector.extract_strided_slice %153 {offsets = [0, 0], sizes = [8, 32], strides = [1, 1]} : vector<8x128xf32> to vector<8x32xf32>
    %159 = arith.mulf %158, %155 : vector<8x32xf32>
    %160 = arith.addf %157, %159 : vector<8x32xf32>
    %161 = vector.extract_strided_slice %153 {offsets = [0, 96], sizes = [8, 32], strides = [1, 1]} : vector<8x128xf32> to vector<8x32xf32>
    %162 = math.tanh %160 : vector<8x32xf32>
    %163 = arith.mulf %161, %162 : vector<8x32xf32>
    %164 = arith.negf %148 : vector<8x128xf32>
    %165 = math.exp %164 : vector<8x128xf32>
    %cst_49 = arith.constant 1.000000e+00 : f32
    %166 = vector.broadcast %cst_49 : f32 to vector<8x128xf32>
    %167 = arith.addf %166, %165 : vector<8x128xf32>
    %168 = arith.divf %166, %167 : vector<8x128xf32>
    %169 = vector.extract_strided_slice %148 {offsets = [0, 64], sizes = [8, 32], strides = [1, 1]} : vector<8x128xf32> to vector<8x32xf32>
    %170 = math.tanh %169 : vector<8x32xf32>
    %171 = vector.extract_strided_slice %168 {offsets = [0, 32], sizes = [8, 32], strides = [1, 1]} : vector<8x128xf32> to vector<8x32xf32>
    %172 = arith.mulf %171, %130 : vector<8x32xf32>
    %173 = vector.extract_strided_slice %168 {offsets = [0, 0], sizes = [8, 32], strides = [1, 1]} : vector<8x128xf32> to vector<8x32xf32>
    %174 = arith.mulf %173, %170 : vector<8x32xf32>
    %175 = arith.addf %172, %174 : vector<8x32xf32>
    %176 = vector.extract_strided_slice %168 {offsets = [0, 96], sizes = [8, 32], strides = [1, 1]} : vector<8x128xf32> to vector<8x32xf32>
    %177 = math.tanh %175 : vector<8x32xf32>
    %178 = arith.mulf %176, %177 : vector<8x32xf32>
    %179 = tpu.concatenate %163, %178 in 1 : vector<8x32xf32>, vector<8x32xf32> -> vector<8x64xf32>
    %180 = arith.truncf %179 : vector<8x64xf32> to vector<8x64xbf16>
    %cst_50 = arith.constant dense<0.000000e+00> : vector<8x256xf32>
    %181 = tpu.matmul %180, %8, %cst_50 {dimension_numbers = #tpu.dot_dimension_numbers<[1], [0], [0], [1], [0, 0, 1, 1], [], []>} : vector<8x64xbf16>, vector<64x256xbf16>, vector<8x256xf32> -> vector<8x256xf32>
    %182 = vector.extract_strided_slice %181 {offsets = [0, 0], sizes = [8, 128], strides = [1, 1]} : vector<8x256xf32> to vector<8x128xf32>
    %c24_51 = arith.constant 24 : index
    %c0_52 = arith.constant 0 : index
    %183 = vector.load %arg11[%c24_51, %c0_52] : memref<64x256xf32, #tpu.memory_space<vmem>>, vector<8x128xf32>
    tpu.vector_store %arg11[%c24_51, %c0_52], %182 {strides = array<i32>} : memref<64x256xf32, #tpu.memory_space<vmem>>, vector<8x128xf32>,
    %184 = vector.extract_strided_slice %181 {offsets = [0, 128], sizes = [8, 128], strides = [1, 1]} : vector<8x256xf32> to vector<8x128xf32>
    %c32_53 = arith.constant 32 : index
    %c128_54 = arith.constant 128 : index
    %185 = vector.load %arg11[%c32_53, %c128_54] : memref<64x256xf32, #tpu.memory_space<vmem>>, vector<8x128xf32>
    tpu.vector_store %arg11[%c32_53, %c128_54], %184 {strides = array<i32>} : memref<64x256xf32, #tpu.memory_space<vmem>>, vector<8x128xf32>,
    %186 = arith.truncf %179 : vector<8x64xf32> to vector<8x64xbf16>
    %cst_55 = arith.constant dense<0.000000e+00> : vector<8x256xf32>
    %187 = tpu.matmul %186, %7, %cst_55 {dimension_numbers = #tpu.dot_dimension_numbers<[1], [0], [0], [1], [0, 0, 1, 1], [], []>} : vector<8x64xbf16>, vector<64x256xbf16>, vector<8x256xf32> -> vector<8x256xf32>
    %c32_56 = arith.constant 32 : index
    %c0_57 = arith.constant 0 : index
    %188 = vector.load %arg10[%c32_56, %c0_57] : memref<64x256xf32, #tpu.memory_space<vmem>>, vector<8x128xf32>
    %189 = vector.extract_strided_slice %187 {offsets = [0, 0], sizes = [8, 128], strides = [1, 1]} : vector<8x256xf32> to vector<8x128xf32>
    %190 = arith.addf %188, %189 : vector<8x128xf32>
    %c24_58 = arith.constant 24 : index
    %c128_59 = arith.constant 128 : index
    %191 = vector.load %arg10[%c24_58, %c128_59] : memref<64x256xf32, #tpu.memory_space<vmem>>, vector<8x128xf32>
    %192 = vector.extract_strided_slice %187 {offsets = [0, 128], sizes = [8, 128], strides = [1, 1]} : vector<8x256xf32> to vector<8x128xf32>
    %193 = arith.addf %191, %192 : vector<8x128xf32>
    %194 = arith.negf %190 : vector<8x128xf32>
    %195 = math.exp %194 : vector<8x128xf32>
    %cst_60 = arith.constant 1.000000e+00 : f32
    %196 = vector.broadcast %cst_60 : f32 to vector<8x128xf32>
    %197 = arith.addf %196, %195 : vector<8x128xf32>
    %198 = arith.divf %196, %197 : vector<8x128xf32>
    %199 = vector.extract_strided_slice %190 {offsets = [0, 64], sizes = [8, 32], strides = [1, 1]} : vector<8x128xf32> to vector<8x32xf32>
    %200 = math.tanh %199 : vector<8x32xf32>
    %201 = vector.extract_strided_slice %198 {offsets = [0, 32], sizes = [8, 32], strides = [1, 1]} : vector<8x128xf32> to vector<8x32xf32>
    %202 = arith.mulf %201, %160 : vector<8x32xf32>
    %203 = vector.extract_strided_slice %198 {offsets = [0, 0], sizes = [8, 32], strides = [1, 1]} : vector<8x128xf32> to vector<8x32xf32>
    %204 = arith.mulf %203, %200 : vector<8x32xf32>
    %205 = arith.addf %202, %204 : vector<8x32xf32>
    %206 = vector.extract_strided_slice %198 {offsets = [0, 96], sizes = [8, 32], strides = [1, 1]} : vector<8x128xf32> to vector<8x32xf32>
    %207 = math.tanh %205 : vector<8x32xf32>
    %208 = arith.mulf %206, %207 : vector<8x32xf32>
    %209 = arith.negf %193 : vector<8x128xf32>
    %210 = math.exp %209 : vector<8x128xf32>
    %cst_61 = arith.constant 1.000000e+00 : f32
    %211 = vector.broadcast %cst_61 : f32 to vector<8x128xf32>
    %212 = arith.addf %211, %210 : vector<8x128xf32>
    %213 = arith.divf %211, %212 : vector<8x128xf32>
    %214 = vector.extract_strided_slice %193 {offsets = [0, 64], sizes = [8, 32], strides = [1, 1]} : vector<8x128xf32> to vector<8x32xf32>
    %215 = math.tanh %214 : vector<8x32xf32>
    %216 = vector.extract_strided_slice %213 {offsets = [0, 32], sizes = [8, 32], strides = [1, 1]} : vector<8x128xf32> to vector<8x32xf32>
    %217 = arith.mulf %216, %175 : vector<8x32xf32>
    %218 = vector.extract_strided_slice %213 {offsets = [0, 0], sizes = [8, 32], strides = [1, 1]} : vector<8x128xf32> to vector<8x32xf32>
    %219 = arith.mulf %218, %215 : vector<8x32xf32>
    %220 = arith.addf %217, %219 : vector<8x32xf32>
    %221 = vector.extract_strided_slice %213 {offsets = [0, 96], sizes = [8, 32], strides = [1, 1]} : vector<8x128xf32> to vector<8x32xf32>
    %222 = math.tanh %220 : vector<8x32xf32>
    %223 = arith.mulf %221, %222 : vector<8x32xf32>
    %224 = tpu.concatenate %208, %223 in 1 : vector<8x32xf32>, vector<8x32xf32> -> vector<8x64xf32>
    %225 = arith.truncf %224 : vector<8x64xf32> to vector<8x64xbf16>
    %cst_62 = arith.constant dense<0.000000e+00> : vector<8x256xf32>
    %226 = tpu.matmul %225, %8, %cst_62 {dimension_numbers = #tpu.dot_dimension_numbers<[1], [0], [0], [1], [0, 0, 1, 1], [], []>} : vector<8x64xbf16>, vector<64x256xbf16>, vector<8x256xf32> -> vector<8x256xf32>
    %227 = vector.extract_strided_slice %226 {offsets = [0, 0], sizes = [8, 128], strides = [1, 1]} : vector<8x256xf32> to vector<8x128xf32>
    %c32_63 = arith.constant 32 : index
    %c0_64 = arith.constant 0 : index
    %228 = vector.load %arg11[%c32_63, %c0_64] : memref<64x256xf32, #tpu.memory_space<vmem>>, vector<8x128xf32>
    tpu.vector_store %arg11[%c32_63, %c0_64], %227 {strides = array<i32>} : memref<64x256xf32, #tpu.memory_space<vmem>>, vector<8x128xf32>,
    %229 = vector.extract_strided_slice %226 {offsets = [0, 128], sizes = [8, 128], strides = [1, 1]} : vector<8x256xf32> to vector<8x128xf32>
    %c24_65 = arith.constant 24 : index
    %c128_66 = arith.constant 128 : index
    %230 = vector.load %arg11[%c24_65, %c128_66] : memref<64x256xf32, #tpu.memory_space<vmem>>, vector<8x128xf32>
    tpu.vector_store %arg11[%c24_65, %c128_66], %229 {strides = array<i32>} : memref<64x256xf32, #tpu.memory_space<vmem>>, vector<8x128xf32>,
    %231 = arith.truncf %224 : vector<8x64xf32> to vector<8x64xbf16>
    %cst_67 = arith.constant dense<0.000000e+00> : vector<8x256xf32>
    %232 = tpu.matmul %231, %7, %cst_67 {dimension_numbers = #tpu.dot_dimension_numbers<[1], [0], [0], [1], [0, 0, 1, 1], [], []>} : vector<8x64xbf16>, vector<64x256xbf16>, vector<8x256xf32> -> vector<8x256xf32>
    %c40_68 = arith.constant 40 : index
    %c0_69 = arith.constant 0 : index
    %233 = vector.load %arg10[%c40_68, %c0_69] : memref<64x256xf32, #tpu.memory_space<vmem>>, vector<8x128xf32>
    %234 = vector.extract_strided_slice %232 {offsets = [0, 0], sizes = [8, 128], strides = [1, 1]} : vector<8x256xf32> to vector<8x128xf32>
    %235 = arith.addf %233, %234 : vector<8x128xf32>
    %c16_70 = arith.constant 16 : index
    %c128_71 = arith.constant 128 : index
    %236 = vector.load %arg10[%c16_70, %c128_71] : memref<64x256xf32, #tpu.memory_space<vmem>>, vector<8x128xf32>
    %237 = vector.extract_strided_slice %232 {offsets = [0, 128], sizes = [8, 128], strides = [1, 1]} : vector<8x256xf32> to vector<8x128xf32>
    %238 = arith.addf %236, %237 : vector<8x128xf32>
    %239 = arith.negf %235 : vector<8x128xf32>
    %240 = math.exp %239 : vector<8x128xf32>
    %cst_72 = arith.constant 1.000000e+00 : f32
    %241 = vector.broadcast %cst_72 : f32 to vector<8x128xf32>
    %242 = arith.addf %241, %240 : vector<8x128xf32>
    %243 = arith.divf %241, %242 : vector<8x128xf32>
    %244 = vector.extract_strided_slice %235 {offsets = [0, 64], sizes = [8, 32], strides = [1, 1]} : vector<8x128xf32> to vector<8x32xf32>
    %245 = math.tanh %244 : vector<8x32xf32>
    %246 = vector.extract_strided_slice %243 {offsets = [0, 32], sizes = [8, 32], strides = [1, 1]} : vector<8x128xf32> to vector<8x32xf32>
    %247 = arith.mulf %246, %205 : vector<8x32xf32>
    %248 = vector.extract_strided_slice %243 {offsets = [0, 0], sizes = [8, 32], strides = [1, 1]} : vector<8x128xf32> to vector<8x32xf32>
    %249 = arith.mulf %248, %245 : vector<8x32xf32>
    %250 = arith.addf %247, %249 : vector<8x32xf32>
    %251 = vector.extract_strided_slice %243 {offsets = [0, 96], sizes = [8, 32], strides = [1, 1]} : vector<8x128xf32> to vector<8x32xf32>
    %252 = math.tanh %250 : vector<8x32xf32>
    %253 = arith.mulf %251, %252 : vector<8x32xf32>
    %254 = arith.negf %238 : vector<8x128xf32>
    %255 = math.exp %254 : vector<8x128xf32>
    %cst_73 = arith.constant 1.000000e+00 : f32
    %256 = vector.broadcast %cst_73 : f32 to vector<8x128xf32>
    %257 = arith.addf %256, %255 : vector<8x128xf32>
    %258 = arith.divf %256, %257 : vector<8x128xf32>
    %259 = vector.extract_strided_slice %238 {offsets = [0, 64], sizes = [8, 32], strides = [1, 1]} : vector<8x128xf32> to vector<8x32xf32>
    %260 = math.tanh %259 : vector<8x32xf32>
    %261 = vector.extract_strided_slice %258 {offsets = [0, 32], sizes = [8, 32], strides = [1, 1]} : vector<8x128xf32> to vector<8x32xf32>
    %262 = arith.mulf %261, %220 : vector<8x32xf32>
    %263 = vector.extract_strided_slice %258 {offsets = [0, 0], sizes = [8, 32], strides = [1, 1]} : vector<8x128xf32> to vector<8x32xf32>
    %264 = arith.mulf %263, %260 : vector<8x32xf32>
    %265 = arith.addf %262, %264 : vector<8x32xf32>
    %266 = vector.extract_strided_slice %258 {offsets = [0, 96], sizes = [8, 32], strides = [1, 1]} : vector<8x128xf32> to vector<8x32xf32>
    %267 = math.tanh %265 : vector<8x32xf32>
    %268 = arith.mulf %266, %267 : vector<8x32xf32>
    %269 = tpu.concatenate %253, %268 in 1 : vector<8x32xf32>, vector<8x32xf32> -> vector<8x64xf32>
    %270 = arith.truncf %269 : vector<8x64xf32> to vector<8x64xbf16>
    %cst_74 = arith.constant dense<0.000000e+00> : vector<8x256xf32>
    %271 = tpu.matmul %270, %8, %cst_74 {dimension_numbers = #tpu.dot_dimension_numbers<[1], [0], [0], [1], [0, 0, 1, 1], [], []>} : vector<8x64xbf16>, vector<64x256xbf16>, vector<8x256xf32> -> vector<8x256xf32>
    %272 = vector.extract_strided_slice %271 {offsets = [0, 0], sizes = [8, 128], strides = [1, 1]} : vector<8x256xf32> to vector<8x128xf32>
    %c40_75 = arith.constant 40 : index
    %c0_76 = arith.constant 0 : index
    %273 = vector.load %arg11[%c40_75, %c0_76] : memref<64x256xf32, #tpu.memory_space<vmem>>, vector<8x128xf32>
    tpu.vector_store %arg11[%c40_75, %c0_76], %272 {strides = array<i32>} : memref<64x256xf32, #tpu.memory_space<vmem>>, vector<8x128xf32>,
    %274 = vector.extract_strided_slice %271 {offsets = [0, 128], sizes = [8, 128], strides = [1, 1]} : vector<8x256xf32> to vector<8x128xf32>
    %c16_77 = arith.constant 16 : index
    %c128_78 = arith.constant 128 : index
    %275 = vector.load %arg11[%c16_77, %c128_78] : memref<64x256xf32, #tpu.memory_space<vmem>>, vector<8x128xf32>
    tpu.vector_store %arg11[%c16_77, %c128_78], %274 {strides = array<i32>} : memref<64x256xf32, #tpu.memory_space<vmem>>, vector<8x128xf32>,
    %276 = arith.truncf %269 : vector<8x64xf32> to vector<8x64xbf16>
    %cst_79 = arith.constant dense<0.000000e+00> : vector<8x256xf32>
    %277 = tpu.matmul %276, %7, %cst_79 {dimension_numbers = #tpu.dot_dimension_numbers<[1], [0], [0], [1], [0, 0, 1, 1], [], []>} : vector<8x64xbf16>, vector<64x256xbf16>, vector<8x256xf32> -> vector<8x256xf32>
    %c48_80 = arith.constant 48 : index
    %c0_81 = arith.constant 0 : index
    %278 = vector.load %arg10[%c48_80, %c0_81] : memref<64x256xf32, #tpu.memory_space<vmem>>, vector<8x128xf32>
    %279 = vector.extract_strided_slice %277 {offsets = [0, 0], sizes = [8, 128], strides = [1, 1]} : vector<8x256xf32> to vector<8x128xf32>
    %280 = arith.addf %278, %279 : vector<8x128xf32>
    %c8_82 = arith.constant 8 : index
    %c128_83 = arith.constant 128 : index
    %281 = vector.load %arg10[%c8_82, %c128_83] : memref<64x256xf32, #tpu.memory_space<vmem>>, vector<8x128xf32>
    %282 = vector.extract_strided_slice %277 {offsets = [0, 128], sizes = [8, 128], strides = [1, 1]} : vector<8x256xf32> to vector<8x128xf32>
    %283 = arith.addf %281, %282 : vector<8x128xf32>
    %284 = arith.negf %280 : vector<8x128xf32>
    %285 = math.exp %284 : vector<8x128xf32>
    %cst_84 = arith.constant 1.000000e+00 : f32
    %286 = vector.broadcast %cst_84 : f32 to vector<8x128xf32>
    %287 = arith.addf %286, %285 : vector<8x128xf32>
    %288 = arith.divf %286, %287 : vector<8x128xf32>
    %289 = vector.extract_strided_slice %280 {offsets = [0, 64], sizes = [8, 32], strides = [1, 1]} : vector<8x128xf32> to vector<8x32xf32>
    %290 = math.tanh %289 : vector<8x32xf32>
    %291 = vector.extract_strided_slice %288 {offsets = [0, 32], sizes = [8, 32], strides = [1, 1]} : vector<8x128xf32> to vector<8x32xf32>
    %292 = arith.mulf %291, %250 : vector<8x32xf32>
    %293 = vector.extract_strided_slice %288 {offsets = [0, 0], sizes = [8, 32], strides = [1, 1]} : vector<8x128xf32> to vector<8x32xf32>
    %294 = arith.mulf %293, %290 : vector<8x32xf32>
    %295 = arith.addf %292, %294 : vector<8x32xf32>
    %296 = vector.extract_strided_slice %288 {offsets = [0, 96], sizes = [8, 32], strides = [1, 1]} : vector<8x128xf32> to vector<8x32xf32>
    %297 = math.tanh %295 : vector<8x32xf32>
    %298 = arith.mulf %296, %297 : vector<8x32xf32>
    %299 = arith.negf %283 : vector<8x128xf32>
    %300 = math.exp %299 : vector<8x128xf32>
    %cst_85 = arith.constant 1.000000e+00 : f32
    %301 = vector.broadcast %cst_85 : f32 to vector<8x128xf32>
    %302 = arith.addf %301, %300 : vector<8x128xf32>
    %303 = arith.divf %301, %302 : vector<8x128xf32>
    %304 = vector.extract_strided_slice %283 {offsets = [0, 64], sizes = [8, 32], strides = [1, 1]} : vector<8x128xf32> to vector<8x32xf32>
    %305 = math.tanh %304 : vector<8x32xf32>
    %306 = vector.extract_strided_slice %303 {offsets = [0, 32], sizes = [8, 32], strides = [1, 1]} : vector<8x128xf32> to vector<8x32xf32>
    %307 = arith.mulf %306, %265 : vector<8x32xf32>
    %308 = vector.extract_strided_slice %303 {offsets = [0, 0], sizes = [8, 32], strides = [1, 1]} : vector<8x128xf32> to vector<8x32xf32>
    %309 = arith.mulf %308, %305 : vector<8x32xf32>
    %310 = arith.addf %307, %309 : vector<8x32xf32>
    %311 = vector.extract_strided_slice %303 {offsets = [0, 96], sizes = [8, 32], strides = [1, 1]} : vector<8x128xf32> to vector<8x32xf32>
    %312 = math.tanh %310 : vector<8x32xf32>
    %313 = arith.mulf %311, %312 : vector<8x32xf32>
    %314 = tpu.concatenate %298, %313 in 1 : vector<8x32xf32>, vector<8x32xf32> -> vector<8x64xf32>
    %315 = arith.truncf %314 : vector<8x64xf32> to vector<8x64xbf16>
    %cst_86 = arith.constant dense<0.000000e+00> : vector<8x256xf32>
    %316 = tpu.matmul %315, %8, %cst_86 {dimension_numbers = #tpu.dot_dimension_numbers<[1], [0], [0], [1], [0, 0, 1, 1], [], []>} : vector<8x64xbf16>, vector<64x256xbf16>, vector<8x256xf32> -> vector<8x256xf32>
    %317 = vector.extract_strided_slice %316 {offsets = [0, 0], sizes = [8, 128], strides = [1, 1]} : vector<8x256xf32> to vector<8x128xf32>
    %c48_87 = arith.constant 48 : index
    %c0_88 = arith.constant 0 : index
    %318 = vector.load %arg11[%c48_87, %c0_88] : memref<64x256xf32, #tpu.memory_space<vmem>>, vector<8x128xf32>
    tpu.vector_store %arg11[%c48_87, %c0_88], %317 {strides = array<i32>} : memref<64x256xf32, #tpu.memory_space<vmem>>, vector<8x128xf32>,
    %319 = vector.extract_strided_slice %316 {offsets = [0, 128], sizes = [8, 128], strides = [1, 1]} : vector<8x256xf32> to vector<8x128xf32>
    %c8_89 = arith.constant 8 : index
    %c128_90 = arith.constant 128 : index
    %320 = vector.load %arg11[%c8_89, %c128_90] : memref<64x256xf32, #tpu.memory_space<vmem>>, vector<8x128xf32>
    tpu.vector_store %arg11[%c8_89, %c128_90], %319 {strides = array<i32>} : memref<64x256xf32, #tpu.memory_space<vmem>>, vector<8x128xf32>,
    %321 = arith.truncf %314 : vector<8x64xf32> to vector<8x64xbf16>
    %cst_91 = arith.constant dense<0.000000e+00> : vector<8x256xf32>
    %322 = tpu.matmul %321, %7, %cst_91 {dimension_numbers = #tpu.dot_dimension_numbers<[1], [0], [0], [1], [0, 0, 1, 1], [], []>} : vector<8x64xbf16>, vector<64x256xbf16>, vector<8x256xf32> -> vector<8x256xf32>
    %c56_92 = arith.constant 56 : index
    %c0_93 = arith.constant 0 : index
    %323 = vector.load %arg10[%c56_92, %c0_93] : memref<64x256xf32, #tpu.memory_space<vmem>>, vector<8x128xf32>
    %324 = vector.extract_strided_slice %322 {offsets = [0, 0], sizes = [8, 128], strides = [1, 1]} : vector<8x256xf32> to vector<8x128xf32>
    %325 = arith.addf %323, %324 : vector<8x128xf32>
    %c0_94 = arith.constant 0 : index
    %c128_95 = arith.constant 128 : index
    %326 = vector.load %arg10[%c0_94, %c128_95] : memref<64x256xf32, #tpu.memory_space<vmem>>, vector<8x128xf32>
    %327 = vector.extract_strided_slice %322 {offsets = [0, 128], sizes = [8, 128], strides = [1, 1]} : vector<8x256xf32> to vector<8x128xf32>
    %328 = arith.addf %326, %327 : vector<8x128xf32>
    %329 = arith.negf %325 : vector<8x128xf32>
    %330 = math.exp %329 : vector<8x128xf32>
    %cst_96 = arith.constant 1.000000e+00 : f32
    %331 = vector.broadcast %cst_96 : f32 to vector<8x128xf32>
    %332 = arith.addf %331, %330 : vector<8x128xf32>
    %333 = arith.divf %331, %332 : vector<8x128xf32>
    %334 = vector.extract_strided_slice %325 {offsets = [0, 64], sizes = [8, 32], strides = [1, 1]} : vector<8x128xf32> to vector<8x32xf32>
    %335 = math.tanh %334 : vector<8x32xf32>
    %336 = vector.extract_strided_slice %333 {offsets = [0, 32], sizes = [8, 32], strides = [1, 1]} : vector<8x128xf32> to vector<8x32xf32>
    %337 = arith.mulf %336, %295 : vector<8x32xf32>
    %338 = vector.extract_strided_slice %333 {offsets = [0, 0], sizes = [8, 32], strides = [1, 1]} : vector<8x128xf32> to vector<8x32xf32>
    %339 = arith.mulf %338, %335 : vector<8x32xf32>
    %340 = arith.addf %337, %339 : vector<8x32xf32>
    %341 = vector.extract_strided_slice %333 {offsets = [0, 96], sizes = [8, 32], strides = [1, 1]} : vector<8x128xf32> to vector<8x32xf32>
    %342 = math.tanh %340 : vector<8x32xf32>
    %343 = arith.mulf %341, %342 : vector<8x32xf32>
    %344 = arith.negf %328 : vector<8x128xf32>
    %345 = math.exp %344 : vector<8x128xf32>
    %cst_97 = arith.constant 1.000000e+00 : f32
    %346 = vector.broadcast %cst_97 : f32 to vector<8x128xf32>
    %347 = arith.addf %346, %345 : vector<8x128xf32>
    %348 = arith.divf %346, %347 : vector<8x128xf32>
    %349 = vector.extract_strided_slice %328 {offsets = [0, 64], sizes = [8, 32], strides = [1, 1]} : vector<8x128xf32> to vector<8x32xf32>
    %350 = math.tanh %349 : vector<8x32xf32>
    %351 = vector.extract_strided_slice %348 {offsets = [0, 32], sizes = [8, 32], strides = [1, 1]} : vector<8x128xf32> to vector<8x32xf32>
    %352 = arith.mulf %351, %310 : vector<8x32xf32>
    %353 = vector.extract_strided_slice %348 {offsets = [0, 0], sizes = [8, 32], strides = [1, 1]} : vector<8x128xf32> to vector<8x32xf32>
    %354 = arith.mulf %353, %350 : vector<8x32xf32>
    %355 = arith.addf %352, %354 : vector<8x32xf32>
    %356 = vector.extract_strided_slice %348 {offsets = [0, 96], sizes = [8, 32], strides = [1, 1]} : vector<8x128xf32> to vector<8x32xf32>
    %357 = math.tanh %355 : vector<8x32xf32>
    %358 = arith.mulf %356, %357 : vector<8x32xf32>
    %359 = tpu.concatenate %343, %358 in 1 : vector<8x32xf32>, vector<8x32xf32> -> vector<8x64xf32>
    %360 = arith.truncf %359 : vector<8x64xf32> to vector<8x64xbf16>
    %cst_98 = arith.constant dense<0.000000e+00> : vector<8x256xf32>
    %361 = tpu.matmul %360, %8, %cst_98 {dimension_numbers = #tpu.dot_dimension_numbers<[1], [0], [0], [1], [0, 0, 1, 1], [], []>} : vector<8x64xbf16>, vector<64x256xbf16>, vector<8x256xf32> -> vector<8x256xf32>
    %362 = vector.extract_strided_slice %361 {offsets = [0, 0], sizes = [8, 128], strides = [1, 1]} : vector<8x256xf32> to vector<8x128xf32>
    %c56_99 = arith.constant 56 : index
    %c0_100 = arith.constant 0 : index
    %363 = vector.load %arg11[%c56_99, %c0_100] : memref<64x256xf32, #tpu.memory_space<vmem>>, vector<8x128xf32>
    tpu.vector_store %arg11[%c56_99, %c0_100], %362 {strides = array<i32>} : memref<64x256xf32, #tpu.memory_space<vmem>>, vector<8x128xf32>,
    %364 = vector.extract_strided_slice %361 {offsets = [0, 128], sizes = [8, 128], strides = [1, 1]} : vector<8x256xf32> to vector<8x128xf32>
    %c0_101 = arith.constant 0 : index
    %c128_102 = arith.constant 128 : index
    %365 = vector.load %arg11[%c0_101, %c128_102] : memref<64x256xf32, #tpu.memory_space<vmem>>, vector<8x128xf32>
    tpu.vector_store %arg11[%c0_101, %c128_102], %364 {strides = array<i32>} : memref<64x256xf32, #tpu.memory_space<vmem>>, vector<8x128xf32>,
    %c56_103 = arith.constant 56 : index
    %c0_104 = arith.constant 0 : index
    %366 = vector.load %arg11[%c56_103, %c0_104] : memref<64x256xf32, #tpu.memory_space<vmem>>, vector<8x128xf32>
    %c56_105 = arith.constant 56 : index
    %c128_106 = arith.constant 128 : index
    %367 = vector.load %arg11[%c56_105, %c128_106] : memref<64x256xf32, #tpu.memory_space<vmem>>, vector<8x128xf32>
    %368 = arith.addf %366, %367 : vector<8x128xf32>
    %369 = vector.broadcast %10 : vector<1x128xf32> to vector<8x128xf32>
    %370 = arith.addf %368, %369 : vector<8x128xf32>
    %371 = arith.negf %370 : vector<8x128xf32>
    %372 = math.exp %371 : vector<8x128xf32>
    %cst_107 = arith.constant 1.000000e+00 : f32
    %373 = vector.broadcast %cst_107 : f32 to vector<8x128xf32>
    %374 = arith.addf %373, %372 : vector<8x128xf32>
    %375 = arith.divf %373, %374 : vector<8x128xf32>
    %376 = vector.extract_strided_slice %370 {offsets = [0, 64], sizes = [8, 32], strides = [1, 1]} : vector<8x128xf32> to vector<8x32xf32>
    %377 = math.tanh %376 : vector<8x32xf32>
    %378 = vector.extract_strided_slice %375 {offsets = [0, 32], sizes = [8, 32], strides = [1, 1]} : vector<8x128xf32> to vector<8x32xf32>
    %379 = arith.mulf %378, %11 : vector<8x32xf32>
    %380 = vector.extract_strided_slice %375 {offsets = [0, 0], sizes = [8, 32], strides = [1, 1]} : vector<8x128xf32> to vector<8x32xf32>
    %381 = arith.mulf %380, %377 : vector<8x32xf32>
    %382 = arith.addf %379, %381 : vector<8x32xf32>
    %383 = vector.extract_strided_slice %375 {offsets = [0, 96], sizes = [8, 32], strides = [1, 1]} : vector<8x128xf32> to vector<8x32xf32>
    %384 = math.tanh %382 : vector<8x32xf32>
    %385 = arith.mulf %383, %384 : vector<8x32xf32>
    %c48_108 = arith.constant 48 : index
    %c0_109 = arith.constant 0 : index
    %386 = vector.load %arg11[%c48_108, %c0_109] : memref<64x256xf32, #tpu.memory_space<vmem>>, vector<8x128xf32>
    %c48_110 = arith.constant 48 : index
    %c128_111 = arith.constant 128 : index
    %387 = vector.load %arg11[%c48_110, %c128_111] : memref<64x256xf32, #tpu.memory_space<vmem>>, vector<8x128xf32>
    %388 = arith.addf %386, %387 : vector<8x128xf32>
    %389 = vector.broadcast %10 : vector<1x128xf32> to vector<8x128xf32>
    %390 = arith.addf %388, %389 : vector<8x128xf32>
    %391 = arith.truncf %385 : vector<8x32xf32> to vector<8x32xbf16>
    %cst_112 = arith.constant dense<0.000000e+00> : vector<8x128xf32>
    %392 = tpu.matmul %391, %9, %cst_112 {dimension_numbers = #tpu.dot_dimension_numbers<[1], [0], [0], [1], [0, 0, 1, 1], [], []>} : vector<8x32xbf16>, vector<32x128xbf16>, vector<8x128xf32> -> vector<8x128xf32>
    %393 = arith.addf %390, %392 : vector<8x128xf32>
    %394 = arith.negf %393 : vector<8x128xf32>
    %395 = math.exp %394 : vector<8x128xf32>
    %cst_113 = arith.constant 1.000000e+00 : f32
    %396 = vector.broadcast %cst_113 : f32 to vector<8x128xf32>
    %397 = arith.addf %396, %395 : vector<8x128xf32>
    %398 = arith.divf %396, %397 : vector<8x128xf32>
    %399 = vector.extract_strided_slice %393 {offsets = [0, 64], sizes = [8, 32], strides = [1, 1]} : vector<8x128xf32> to vector<8x32xf32>
    %400 = math.tanh %399 : vector<8x32xf32>
    %401 = vector.extract_strided_slice %398 {offsets = [0, 32], sizes = [8, 32], strides = [1, 1]} : vector<8x128xf32> to vector<8x32xf32>
    %402 = arith.mulf %401, %382 : vector<8x32xf32>
    %403 = vector.extract_strided_slice %398 {offsets = [0, 0], sizes = [8, 32], strides = [1, 1]} : vector<8x128xf32> to vector<8x32xf32>
    %404 = arith.mulf %403, %400 : vector<8x32xf32>
    %405 = arith.addf %402, %404 : vector<8x32xf32>
    %406 = vector.extract_strided_slice %398 {offsets = [0, 96], sizes = [8, 32], strides = [1, 1]} : vector<8x128xf32> to vector<8x32xf32>
    %407 = math.tanh %405 : vector<8x32xf32>
    %408 = arith.mulf %406, %407 : vector<8x32xf32>
    %c40_114 = arith.constant 40 : index
    %c0_115 = arith.constant 0 : index
    %409 = vector.load %arg11[%c40_114, %c0_115] : memref<64x256xf32, #tpu.memory_space<vmem>>, vector<8x128xf32>
    %c40_116 = arith.constant 40 : index
    %c128_117 = arith.constant 128 : index
    %410 = vector.load %arg11[%c40_116, %c128_117] : memref<64x256xf32, #tpu.memory_space<vmem>>, vector<8x128xf32>
    %411 = arith.addf %409, %410 : vector<8x128xf32>
    %412 = vector.broadcast %10 : vector<1x128xf32> to vector<8x128xf32>
    %413 = arith.addf %411, %412 : vector<8x128xf32>
    %414 = arith.truncf %408 : vector<8x32xf32> to vector<8x32xbf16>
    %cst_118 = arith.constant dense<0.000000e+00> : vector<8x128xf32>
    %415 = tpu.matmul %414, %9, %cst_118 {dimension_numbers = #tpu.dot_dimension_numbers<[1], [0], [0], [1], [0, 0, 1, 1], [], []>} : vector<8x32xbf16>, vector<32x128xbf16>, vector<8x128xf32> -> vector<8x128xf32>
    %416 = arith.addf %413, %415 : vector<8x128xf32>
    %417 = arith.negf %416 : vector<8x128xf32>
    %418 = math.exp %417 : vector<8x128xf32>
    %cst_119 = arith.constant 1.000000e+00 : f32
    %419 = vector.broadcast %cst_119 : f32 to vector<8x128xf32>
    %420 = arith.addf %419, %418 : vector<8x128xf32>
    %421 = arith.divf %419, %420 : vector<8x128xf32>
    %422 = vector.extract_strided_slice %416 {offsets = [0, 64], sizes = [8, 32], strides = [1, 1]} : vector<8x128xf32> to vector<8x32xf32>
    %423 = math.tanh %422 : vector<8x32xf32>
    %424 = vector.extract_strided_slice %421 {offsets = [0, 32], sizes = [8, 32], strides = [1, 1]} : vector<8x128xf32> to vector<8x32xf32>
    %425 = arith.mulf %424, %405 : vector<8x32xf32>
    %426 = vector.extract_strided_slice %421 {offsets = [0, 0], sizes = [8, 32], strides = [1, 1]} : vector<8x128xf32> to vector<8x32xf32>
    %427 = arith.mulf %426, %423 : vector<8x32xf32>
    %428 = arith.addf %425, %427 : vector<8x32xf32>
    %429 = vector.extract_strided_slice %421 {offsets = [0, 96], sizes = [8, 32], strides = [1, 1]} : vector<8x128xf32> to vector<8x32xf32>
    %430 = math.tanh %428 : vector<8x32xf32>
    %431 = arith.mulf %429, %430 : vector<8x32xf32>
    %c32_120 = arith.constant 32 : index
    %c0_121 = arith.constant 0 : index
    %432 = vector.load %arg11[%c32_120, %c0_121] : memref<64x256xf32, #tpu.memory_space<vmem>>, vector<8x128xf32>
    %c32_122 = arith.constant 32 : index
    %c128_123 = arith.constant 128 : index
    %433 = vector.load %arg11[%c32_122, %c128_123] : memref<64x256xf32, #tpu.memory_space<vmem>>, vector<8x128xf32>
    %434 = arith.addf %432, %433 : vector<8x128xf32>
    %435 = vector.broadcast %10 : vector<1x128xf32> to vector<8x128xf32>
    %436 = arith.addf %434, %435 : vector<8x128xf32>
    %437 = arith.truncf %431 : vector<8x32xf32> to vector<8x32xbf16>
    %cst_124 = arith.constant dense<0.000000e+00> : vector<8x128xf32>
    %438 = tpu.matmul %437, %9, %cst_124 {dimension_numbers = #tpu.dot_dimension_numbers<[1], [0], [0], [1], [0, 0, 1, 1], [], []>} : vector<8x32xbf16>, vector<32x128xbf16>, vector<8x128xf32> -> vector<8x128xf32>
    %439 = arith.addf %436, %438 : vector<8x128xf32>
    %440 = arith.negf %439 : vector<8x128xf32>
    %441 = math.exp %440 : vector<8x128xf32>
    %cst_125 = arith.constant 1.000000e+00 : f32
    %442 = vector.broadcast %cst_125 : f32 to vector<8x128xf32>
    %443 = arith.addf %442, %441 : vector<8x128xf32>
    %444 = arith.divf %442, %443 : vector<8x128xf32>
    %445 = vector.extract_strided_slice %439 {offsets = [0, 64], sizes = [8, 32], strides = [1, 1]} : vector<8x128xf32> to vector<8x32xf32>
    %446 = math.tanh %445 : vector<8x32xf32>
    %447 = vector.extract_strided_slice %444 {offsets = [0, 32], sizes = [8, 32], strides = [1, 1]} : vector<8x128xf32> to vector<8x32xf32>
    %448 = arith.mulf %447, %428 : vector<8x32xf32>
    %449 = vector.extract_strided_slice %444 {offsets = [0, 0], sizes = [8, 32], strides = [1, 1]} : vector<8x128xf32> to vector<8x32xf32>
    %450 = arith.mulf %449, %446 : vector<8x32xf32>
    %451 = arith.addf %448, %450 : vector<8x32xf32>
    %452 = vector.extract_strided_slice %444 {offsets = [0, 96], sizes = [8, 32], strides = [1, 1]} : vector<8x128xf32> to vector<8x32xf32>
    %453 = math.tanh %451 : vector<8x32xf32>
    %454 = arith.mulf %452, %453 : vector<8x32xf32>
    %c24_126 = arith.constant 24 : index
    %c0_127 = arith.constant 0 : index
    %455 = vector.load %arg11[%c24_126, %c0_127] : memref<64x256xf32, #tpu.memory_space<vmem>>, vector<8x128xf32>
    %c24_128 = arith.constant 24 : index
    %c128_129 = arith.constant 128 : index
    %456 = vector.load %arg11[%c24_128, %c128_129] : memref<64x256xf32, #tpu.memory_space<vmem>>, vector<8x128xf32>
    %457 = arith.addf %455, %456 : vector<8x128xf32>
    %458 = vector.broadcast %10 : vector<1x128xf32> to vector<8x128xf32>
    %459 = arith.addf %457, %458 : vector<8x128xf32>
    %460 = arith.truncf %454 : vector<8x32xf32> to vector<8x32xbf16>
    %cst_130 = arith.constant dense<0.000000e+00> : vector<8x128xf32>
    %461 = tpu.matmul %460, %9, %cst_130 {dimension_numbers = #tpu.dot_dimension_numbers<[1], [0], [0], [1], [0, 0, 1, 1], [], []>} : vector<8x32xbf16>, vector<32x128xbf16>, vector<8x128xf32> -> vector<8x128xf32>
    %462 = arith.addf %459, %461 : vector<8x128xf32>
    %463 = arith.negf %462 : vector<8x128xf32>
    %464 = math.exp %463 : vector<8x128xf32>
    %cst_131 = arith.constant 1.000000e+00 : f32
    %465 = vector.broadcast %cst_131 : f32 to vector<8x128xf32>
    %466 = arith.addf %465, %464 : vector<8x128xf32>
    %467 = arith.divf %465, %466 : vector<8x128xf32>
    %468 = vector.extract_strided_slice %462 {offsets = [0, 64], sizes = [8, 32], strides = [1, 1]} : vector<8x128xf32> to vector<8x32xf32>
    %469 = math.tanh %468 : vector<8x32xf32>
    %470 = vector.extract_strided_slice %467 {offsets = [0, 32], sizes = [8, 32], strides = [1, 1]} : vector<8x128xf32> to vector<8x32xf32>
    %471 = arith.mulf %470, %451 : vector<8x32xf32>
    %472 = vector.extract_strided_slice %467 {offsets = [0, 0], sizes = [8, 32], strides = [1, 1]} : vector<8x128xf32> to vector<8x32xf32>
    %473 = arith.mulf %472, %469 : vector<8x32xf32>
    %474 = arith.addf %471, %473 : vector<8x32xf32>
    %475 = vector.extract_strided_slice %467 {offsets = [0, 96], sizes = [8, 32], strides = [1, 1]} : vector<8x128xf32> to vector<8x32xf32>
    %476 = math.tanh %474 : vector<8x32xf32>
    %477 = arith.mulf %475, %476 : vector<8x32xf32>
    %c16_132 = arith.constant 16 : index
    %c0_133 = arith.constant 0 : index
    %478 = vector.load %arg11[%c16_132, %c0_133] : memref<64x256xf32, #tpu.memory_space<vmem>>, vector<8x128xf32>
    %c16_134 = arith.constant 16 : index
    %c128_135 = arith.constant 128 : index
    %479 = vector.load %arg11[%c16_134, %c128_135] : memref<64x256xf32, #tpu.memory_space<vmem>>, vector<8x128xf32>
    %480 = arith.addf %478, %479 : vector<8x128xf32>
    %481 = vector.broadcast %10 : vector<1x128xf32> to vector<8x128xf32>
    %482 = arith.addf %480, %481 : vector<8x128xf32>
    %483 = arith.truncf %477 : vector<8x32xf32> to vector<8x32xbf16>
    %cst_136 = arith.constant dense<0.000000e+00> : vector<8x128xf32>
    %484 = tpu.matmul %483, %9, %cst_136 {dimension_numbers = #tpu.dot_dimension_numbers<[1], [0], [0], [1], [0, 0, 1, 1], [], []>} : vector<8x32xbf16>, vector<32x128xbf16>, vector<8x128xf32> -> vector<8x128xf32>
    %485 = arith.addf %482, %484 : vector<8x128xf32>
    %486 = arith.negf %485 : vector<8x128xf32>
    %487 = math.exp %486 : vector<8x128xf32>
    %cst_137 = arith.constant 1.000000e+00 : f32
    %488 = vector.broadcast %cst_137 : f32 to vector<8x128xf32>
    %489 = arith.addf %488, %487 : vector<8x128xf32>
    %490 = arith.divf %488, %489 : vector<8x128xf32>
    %491 = vector.extract_strided_slice %485 {offsets = [0, 64], sizes = [8, 32], strides = [1, 1]} : vector<8x128xf32> to vector<8x32xf32>
    %492 = math.tanh %491 : vector<8x32xf32>
    %493 = vector.extract_strided_slice %490 {offsets = [0, 32], sizes = [8, 32], strides = [1, 1]} : vector<8x128xf32> to vector<8x32xf32>
    %494 = arith.mulf %493, %474 : vector<8x32xf32>
    %495 = vector.extract_strided_slice %490 {offsets = [0, 0], sizes = [8, 32], strides = [1, 1]} : vector<8x128xf32> to vector<8x32xf32>
    %496 = arith.mulf %495, %492 : vector<8x32xf32>
    %497 = arith.addf %494, %496 : vector<8x32xf32>
    %498 = vector.extract_strided_slice %490 {offsets = [0, 96], sizes = [8, 32], strides = [1, 1]} : vector<8x128xf32> to vector<8x32xf32>
    %499 = math.tanh %497 : vector<8x32xf32>
    %500 = arith.mulf %498, %499 : vector<8x32xf32>
    %c8_138 = arith.constant 8 : index
    %c0_139 = arith.constant 0 : index
    %501 = vector.load %arg11[%c8_138, %c0_139] : memref<64x256xf32, #tpu.memory_space<vmem>>, vector<8x128xf32>
    %c8_140 = arith.constant 8 : index
    %c128_141 = arith.constant 128 : index
    %502 = vector.load %arg11[%c8_140, %c128_141] : memref<64x256xf32, #tpu.memory_space<vmem>>, vector<8x128xf32>
    %503 = arith.addf %501, %502 : vector<8x128xf32>
    %504 = vector.broadcast %10 : vector<1x128xf32> to vector<8x128xf32>
    %505 = arith.addf %503, %504 : vector<8x128xf32>
    %506 = arith.truncf %500 : vector<8x32xf32> to vector<8x32xbf16>
    %cst_142 = arith.constant dense<0.000000e+00> : vector<8x128xf32>
    %507 = tpu.matmul %506, %9, %cst_142 {dimension_numbers = #tpu.dot_dimension_numbers<[1], [0], [0], [1], [0, 0, 1, 1], [], []>} : vector<8x32xbf16>, vector<32x128xbf16>, vector<8x128xf32> -> vector<8x128xf32>
    %508 = arith.addf %505, %507 : vector<8x128xf32>
    %509 = arith.negf %508 : vector<8x128xf32>
    %510 = math.exp %509 : vector<8x128xf32>
    %cst_143 = arith.constant 1.000000e+00 : f32
    %511 = vector.broadcast %cst_143 : f32 to vector<8x128xf32>
    %512 = arith.addf %511, %510 : vector<8x128xf32>
    %513 = arith.divf %511, %512 : vector<8x128xf32>
    %514 = vector.extract_strided_slice %508 {offsets = [0, 64], sizes = [8, 32], strides = [1, 1]} : vector<8x128xf32> to vector<8x32xf32>
    %515 = math.tanh %514 : vector<8x32xf32>
    %516 = vector.extract_strided_slice %513 {offsets = [0, 32], sizes = [8, 32], strides = [1, 1]} : vector<8x128xf32> to vector<8x32xf32>
    %517 = arith.mulf %516, %497 : vector<8x32xf32>
    %518 = vector.extract_strided_slice %513 {offsets = [0, 0], sizes = [8, 32], strides = [1, 1]} : vector<8x128xf32> to vector<8x32xf32>
    %519 = arith.mulf %518, %515 : vector<8x32xf32>
    %520 = arith.addf %517, %519 : vector<8x32xf32>
    %521 = vector.extract_strided_slice %513 {offsets = [0, 96], sizes = [8, 32], strides = [1, 1]} : vector<8x128xf32> to vector<8x32xf32>
    %522 = math.tanh %520 : vector<8x32xf32>
    %523 = arith.mulf %521, %522 : vector<8x32xf32>
    %c0_144 = arith.constant 0 : index
    %c0_145 = arith.constant 0 : index
    %524 = vector.load %arg11[%c0_144, %c0_145] : memref<64x256xf32, #tpu.memory_space<vmem>>, vector<8x128xf32>
    %c0_146 = arith.constant 0 : index
    %c128_147 = arith.constant 128 : index
    %525 = vector.load %arg11[%c0_146, %c128_147] : memref<64x256xf32, #tpu.memory_space<vmem>>, vector<8x128xf32>
    %526 = arith.addf %524, %525 : vector<8x128xf32>
    %527 = vector.broadcast %10 : vector<1x128xf32> to vector<8x128xf32>
    %528 = arith.addf %526, %527 : vector<8x128xf32>
    %529 = arith.truncf %523 : vector<8x32xf32> to vector<8x32xbf16>
    %cst_148 = arith.constant dense<0.000000e+00> : vector<8x128xf32>
    %530 = tpu.matmul %529, %9, %cst_148 {dimension_numbers = #tpu.dot_dimension_numbers<[1], [0], [0], [1], [0, 0, 1, 1], [], []>} : vector<8x32xbf16>, vector<32x128xbf16>, vector<8x128xf32> -> vector<8x128xf32>
    %531 = arith.addf %528, %530 : vector<8x128xf32>
    %532 = arith.negf %531 : vector<8x128xf32>
    %533 = math.exp %532 : vector<8x128xf32>
    %cst_149 = arith.constant 1.000000e+00 : f32
    %534 = vector.broadcast %cst_149 : f32 to vector<8x128xf32>
    %535 = arith.addf %534, %533 : vector<8x128xf32>
    %536 = arith.divf %534, %535 : vector<8x128xf32>
    %537 = vector.extract_strided_slice %531 {offsets = [0, 64], sizes = [8, 32], strides = [1, 1]} : vector<8x128xf32> to vector<8x32xf32>
    %538 = math.tanh %537 : vector<8x32xf32>
    %539 = vector.extract_strided_slice %536 {offsets = [0, 32], sizes = [8, 32], strides = [1, 1]} : vector<8x128xf32> to vector<8x32xf32>
    %540 = arith.mulf %539, %520 : vector<8x32xf32>
    %541 = vector.extract_strided_slice %536 {offsets = [0, 0], sizes = [8, 32], strides = [1, 1]} : vector<8x128xf32> to vector<8x32xf32>
    %542 = arith.mulf %541, %538 : vector<8x32xf32>
    %543 = arith.addf %540, %542 : vector<8x32xf32>
    %544 = vector.extract_strided_slice %536 {offsets = [0, 96], sizes = [8, 32], strides = [1, 1]} : vector<8x128xf32> to vector<8x32xf32>
    %545 = math.tanh %543 : vector<8x32xf32>
    %546 = arith.mulf %544, %545 : vector<8x32xf32>
    %c0_150 = arith.constant 0 : index
    %c0_151 = arith.constant 0 : index
    %547 = vector.load %arg7[%c0_150, %c0_151] : memref<32x1xf32, #tpu.memory_space<vmem>>, vector<32x1xf32>
    %cst_152 = arith.constant dense<0.000000e+00> : vector<8x1xf32>
    %548 = tpu.matmul %546, %547, %cst_152 {dimension_numbers = #tpu.dot_dimension_numbers<[1], [0], [0], [1], [0, 0, 1, 1], [], []>} : vector<8x32xf32>, vector<32x1xf32>, vector<8x1xf32> -> vector<8x1xf32>
    %c0_153 = arith.constant 0 : index
    %c0_154 = arith.constant 0 : index
    %549 = vector.load %arg8[%c0_153, %c0_154] : memref<1x1xf32, #tpu.memory_space<vmem>>, vector<1x1xf32>
    %550 = vector.broadcast %549 : vector<1x1xf32> to vector<8x1xf32>
    %551 = arith.addf %548, %550 : vector<8x1xf32>
    %c0_155 = arith.constant 0 : index
    %c0_156 = arith.constant 0 : index
    %552 = vector.load %arg9[%c0_155, %c0_156] : memref<8x1xf32, #tpu.memory_space<vmem>>, vector<8x1xf32>
    tpu.vector_store %arg9[%c0_155, %c0_156], %551 {strides = array<i32>} : memref<8x1xf32, #tpu.memory_space<vmem>>, vector<8x1xf32>,
    return
  }
}

</mosaic_0001>

<llo_original>
// kernel: tpu_custom_call.1
$region0: #{tpu_custom_call.1}
  #allocation0 [shape = 'u32[]', space=smem, size = 0x4, offset = 0x4, fixed_abs, tag = 'smem constant byte address 0x4 - core index']
  #allocation1 [shape = 'u32[144,128]{1,0:T(1,128)}', space=vmem, size = 0x12000, scoped, tag = 'internal scratch']
  #allocation2 [shape = 'f32[64,256]{1,0:T(8,128)}', space=vmem, size = 0x10000, scoped, tag = 'scratch operand']
  #allocation3 [shape = 'f32[64,256]{1,0:T(8,128)}', space=vmem, size = 0x10000, scoped, tag = 'scratch operand']
  #allocation4 [shape = 'f32[1,1]{1,0:T(1,128)S(1)}', space=vmem, size = 0x200, scoped, tag = 'scoped memory for tpu_custom_call.1']
  %s0 = inlined_call_operand.vmem [shape: bf16[64,16], index: 0, kind: input, shape index: {}]
  %s1 = inlined_call_operand.vmem [shape: bf16[16,256], index: 1, kind: input, shape index: {}]
  %s2 = inlined_call_operand.vmem [shape: f32[1,256], index: 2, kind: input, shape index: {}]
  %s3 = inlined_call_operand.vmem [shape: bf16[64,256], index: 3, kind: input, shape index: {}]
  %s4 = inlined_call_operand.hbm [shape: bf16[64,256], index: 4, kind: input, shape index: {}]
  %s5 = inlined_call_operand.vmem [shape: f32[1,128], index: 5, kind: input, shape index: {}]
  %s6 = inlined_call_operand.vmem [shape: bf16[32,128], index: 6, kind: input, shape index: {}]
  %s7 = inlined_call_operand.vmem [shape: f32[32,1], index: 7, kind: input, shape index: {}]
  %s8 = inlined_call_operand.<no memory space> [shape: f32[1,1], index: 8, kind: input, shape index: {}]
  %s9 = inlined_call_operand.vmem [shape: f32[8,1], index: 9, kind: output, shape index: {}]
  %s10 = sld [smem:[#allocation0]]
  $region50: #{tpu_custom_call.1} parent=0
    _
  %s12 = ssub.s32 1, %s10
  %s13 = scalar_select 0, %s12, %s10
  %v14 = vstv %s8
  %15 = vst [vmem:[#allocation4] sm:$0x1] %v14
  $region1: #{tpu_custom_call.1} parent=0
    #allocation5 [shape = 'u8[32768]{0}', space=vmem, size = 0x8000, scoped, tag = 'input window, operand 4, single buffered']
    #allocation6 [shape = 's32[1]{0}', space=sflag, size = 0x4, scoped, tag = 'scoped memory for tpu_custom_call.1']
    %16 = vsyncpa [#allocation6], 0
    // Predicated region
    $region2: #{tpu_custom_call.1} parent=1 // pred_check
      _
    $region3: #{tpu_custom_call.1} parent=1 // pred_check_branch
      %18 = sbr.rel (0) target = $region5
    $region4: #{tpu_custom_call.1} parent=1 // pred_region
      _
    $region5: #{tpu_custom_call.1} parent=1 // pred_fallthru
      _
    // Predicated region
    $region6: #{tpu_custom_call.1} parent=1 // pred_check
      _
    $region7: #{tpu_custom_call.1} parent=1 // pred_check_branch
      %20 = sbr.rel (0) target = $region9
    $region8: #{tpu_custom_call.1} parent=1 // pred_region
      _
    $region9: #{tpu_custom_call.1} parent=1 // pred_fallthru
      _
    // Predicated region
    $region10: #{tpu_custom_call.1} parent=1 // pred_check
      _
    $region11: #{tpu_custom_call.1} parent=1 // pred_check_branch
      %22 = sbr.rel (0) target = $region13
    $region12: #{tpu_custom_call.1} parent=1 // pred_region
      _
    $region13: #{tpu_custom_call.1} parent=1 // pred_fallthru
      _
    // Predicated region
    $region14: #{tpu_custom_call.1} parent=1 // pred_check
      _
    $region15: #{tpu_custom_call.1} parent=1 // pred_check_branch
      %24 = sbr.rel (0) target = $region17
    $region16: #{tpu_custom_call.1} parent=1 // pred_region
      _
    $region17: #{tpu_custom_call.1} parent=1 // pred_fallthru
      _
    // Predicated region
    $region18: #{tpu_custom_call.1} parent=1 // pred_check
      _
    $region19: #{tpu_custom_call.1} parent=1 // pred_check_branch
      %26 = sbr.rel (0) target = $region21
    $region20: #{tpu_custom_call.1} parent=1 // pred_region
      %s28 = ssub.s32 1024, 1024
      %29 = vsyncadd [#allocation6], %s28
      %s30 = sshll.u32 [#allocation5], 4
      %s31 = int_to_ptr.vmem [resolvable:$true] %s30
      %36 = dma.hbm_to_vmem [thread:$0]  %s4, 1024, %s31, [#allocation6], 128, 128, 8
    $region21: #{tpu_custom_call.1} parent=1 // pred_fallthru
      _
    // Predicated region
    $region22: #{tpu_custom_call.1} parent=1 // pred_check
      _
    $region23: #{tpu_custom_call.1} parent=1 // pred_check_branch
      %38 = sbr.rel (0) target = $region25
    $region24: #{tpu_custom_call.1} parent=1 // pred_region
      _
    $region25: #{tpu_custom_call.1} parent=1 // pred_fallthru
      _
    // Predicated region
    $region26: #{tpu_custom_call.1} parent=1 // pred_check
      _
    $region27: #{tpu_custom_call.1} parent=1 // pred_check_branch
      %40 = sbr.rel (0) target = $region29
    $region28: #{tpu_custom_call.1} parent=1 // pred_region
      _
    $region29: #{tpu_custom_call.1} parent=1 // pred_fallthru
      _
    // Predicated region
    $region30: #{tpu_custom_call.1} parent=1 // pred_check
      _
    $region31: #{tpu_custom_call.1} parent=1 // pred_check_branch
      %42 = sbr.rel (0) target = $region33
    $region32: #{tpu_custom_call.1} parent=1 // pred_region
      _
    $region33: #{tpu_custom_call.1} parent=1 // pred_fallthru
      _
    // Predicated region
    $region34: #{tpu_custom_call.1} parent=1 // pred_check
      _
    $region35: #{tpu_custom_call.1} parent=1 // pred_check_branch
      %44 = sbr.rel (0) target = $region37
    $region36: #{tpu_custom_call.1} parent=1 // pred_region
      _
    $region37: #{tpu_custom_call.1} parent=1 // pred_fallthru
      _
    // Predicated region
    $region38: #{tpu_custom_call.1} parent=1 // pred_check
      _
    $region39: #{tpu_custom_call.1} parent=1 // pred_check_branch
      %46 = sbr.rel (0) target = $region41
    $region40: #{tpu_custom_call.1} parent=1 // pred_region
      %47 = dma.done [#allocation6], 1024
    $region41: #{tpu_custom_call.1} parent=1 // pred_fallthru
      _
    %v49 = vld [vmem:[%s0] sm:$0xf]
    %v50 = vld [vmem:[%s0 + $0x4] sm:$0xf]
    %v51 = vld [vmem:[%s0 + $0x8] sm:$0xf]
    %v52 = vld [vmem:[%s0 + $0xc] sm:$0xf]
    %v53 = vld [vmem:[%s0 + $0x10] sm:$0xf]
    %v54 = vld [vmem:[%s0 + $0x14] sm:$0xf]
    %v55 = vld [vmem:[%s0 + $0x18] sm:$0xf]
    %v56 = vld [vmem:[%s0 + $0x1c] sm:$0xf]
    %v57 = vld [vmem:[%s1] sm:$0xff]
    %v58 = vld [vmem:[%s1 + $0x8] sm:$0xff]
    %v59 = vld [vmem:[%s2] sm:$0x3]
    %v61 = vlaneseq
    %v62 = vshrl.u32 %v61, 7
    %v63 = vsub.s32 0, %v62
    %v64 = vrot.slane %v59, %v63
    %v65 = vlaneseq
    %v66 = vshrl.u32 %v65, 7
    %v67 = vsub.s32 1, %v66
    %v68 = vrot.slane %v59, %v67
    %v79 = vunpack.c.l.b16 %v49
    %v80 = vunpack.c.l.b16 %v50
    %v81 = vunpack.c.l.b16 %v51
    %v82 = vunpack.c.l.b16 %v52
    %v83 = vunpack.c.l.b16 %v53
    %v84 = vunpack.c.l.b16 %v54
    %v85 = vunpack.c.l.b16 %v55
    %v86 = vunpack.c.l.b16 %v56
    %v87 = vpack.c.b16 %v80, %v79
    %v88 = vpack.c.b16 %v82, %v81
    %v89 = vpack.c.b16 %v84, %v83
    %v90 = vpack.c.b16 %v86, %v85
    %v93 = vunpack.c.l.b16 %v57
    %v94 = vunpack.c.h.b16 %v57
    %v95 = vunpack.c.l.b16 %v58
    %v96 = vunpack.c.h.b16 %v58
    %v97 = vpack.c.b16 %v95, %v93
    %v98 = vpack.c.b16 %v96, %v94
    %vm101 = vcmask 130048
    %v103 = vsel %vm101, %v87, 0
    %v106 = vsel %vm101, %v88, 0
    %v109 = vsel %vm101, %v89, 0
    %v112 = vsel %vm101, %v90, 0
    %114 = vmatprep.subr.bf16.mxu0 %v98
    %115 = vmatpush1.bf16.msra.mxu0 %v97
    %116 = vmatprep.subr.bf16.mxu0 0
    %117 = vmatpush1.bf16.msra.mxu0 0
    %118 = vmatprep.subr.bf16.mxu0 0
    %119 = vmatpush1.bf16.msra.mxu0 0
    %120 = vmatprep.subr.bf16.mxu0 0
    %121 = vmatpush1.bf16.msra.mxu0 0
    %122 = vmatprep.subr.bf16.mxu0 0
    %123 = vmatpush1.bf16.msra.mxu0 0
    %124 = vmatprep.subr.bf16.mxu0 0
    %125 = vmatpush1.bf16.msra.mxu0 0
    %126 = vmatprep.subr.bf16.mxu0 0
    %127 = vmatpush1.bf16.msra.mxu0 0
    %128 = vmatprep.subr.bf16.mxu0 0
    %129 = vmatpush1.bf16.msra.mxu0 0
    %130 = vmatprep.subr.bf16.mxu0 0
    %131 = vmatpush1.bf16.msra.mxu0 0
    %132 = vmatprep.subr.bf16.mxu0 0
    %133 = vmatpush1.bf16.msra.mxu0 0
    %134 = vmatprep.subr.bf16.mxu0 0
    %135 = vmatpush1.bf16.msra.mxu0 0
    %136 = vmatprep.subr.bf16.mxu0 0
    %137 = vmatpush1.bf16.msra.mxu0 0
    %138 = vmatprep.subr.bf16.mxu0 0
    %139 = vmatpush1.bf16.msra.mxu0 0
    %140 = vmatprep.subr.bf16.mxu0 0
    %141 = vmatpush1.bf16.msra.mxu0 0
    %142 = vmatprep.subr.bf16.mxu0 0
    %143 = vmatpush1.bf16.msra.mxu0 0
    %144 = vmatprep.subr.bf16.mxu0 0
    %145 = vmatpush1.bf16.msra.mxu0 0
    %146 = vmatprep.mubr.bf16.mxu0 0
    %147 = vmatmul.mubr.bf16.gmra.mrb[0].mxu0 %v103
    %v148 = vpop.f32.mrb[0].mxu0
    %v149 = vadd.f32 %v64, %v148
    %v150 = vpop.f32.mrb[0].mxu0
    %v151 = vadd.f32 %v68, %v150
    %v152 = vpop.f32.mrb[0].mxu0
    %v153 = vadd.f32 %v64, %v152
    %v154 = vpop.f32.mrb[0].mxu0
    %v155 = vadd.f32 %v68, %v154
    %156 = vmatprep.mubr.bf16.mxu0 0
    %157 = vmatmul.mubr.bf16.gmra.mrb[0].mxu0 %v106
    %v158 = vpop.f32.mrb[0].mxu0
    %v159 = vadd.f32 %v64, %v158
    %v160 = vpop.f32.mrb[0].mxu0
    %v161 = vadd.f32 %v68, %v160
    %v162 = vpop.f32.mrb[0].mxu0
    %v163 = vadd.f32 %v64, %v162
    %v164 = vpop.f32.mrb[0].mxu0
    %v165 = vadd.f32 %v68, %v164
    %166 = vmatprep.mubr.bf16.mxu0 0
    %167 = vmatmul.mubr.bf16.gmra.mrb[0].mxu0 %v109
    %v168 = vpop.f32.mrb[0].mxu0
    %v169 = vadd.f32 %v64, %v168
    %v170 = vpop.f32.mrb[0].mxu0
    %v171 = vadd.f32 %v68, %v170
    %v172 = vpop.f32.mrb[0].mxu0
    %v173 = vadd.f32 %v64, %v172
    %v174 = vpop.f32.mrb[0].mxu0
    %v175 = vadd.f32 %v68, %v174
    %176 = vmatprep.mubr.bf16.mxu0 0
    %177 = vmatmul.mubr.bf16.gmra.mrb[0].mxu0 %v112
    %v178 = vpop.f32.mrb[0].mxu0
    %v179 = vadd.f32 %v64, %v178
    %v180 = vpop.f32.mrb[0].mxu0
    %v181 = vadd.f32 %v68, %v180
    %v182 = vpop.f32.mrb[0].mxu0
    %v183 = vadd.f32 %v64, %v182
    %v184 = vpop.f32.mrb[0].mxu0
    %v185 = vadd.f32 %v68, %v184
    %186 = vdwg.mxu0
    %187 = vst [vmem:[#allocation2] sm:$0xff] %v149
    %188 = vst [vmem:[#allocation2 + $0x8] sm:$0xff] %v151
    %189 = vst [vmem:[#allocation2 + $0x10] sm:$0xff] %v153
    %190 = vst [vmem:[#allocation2 + $0x18] sm:$0xff] %v155
    %191 = vst [vmem:[#allocation2 + $0x20] sm:$0xff] %v159
    %192 = vst [vmem:[#allocation2 + $0x28] sm:$0xff] %v161
    %193 = vst [vmem:[#allocation2 + $0x30] sm:$0xff] %v163
    %194 = vst [vmem:[#allocation2 + $0x38] sm:$0xff] %v165
    %195 = vst [vmem:[#allocation2 + $0x40] sm:$0xff] %v169
    %196 = vst [vmem:[#allocation2 + $0x48] sm:$0xff] %v171
    %197 = vst [vmem:[#allocation2 + $0x50] sm:$0xff] %v173
    %198 = vst [vmem:[#allocation2 + $0x58] sm:$0xff] %v175
    %199 = vst [vmem:[#allocation2 + $0x60] sm:$0xff] %v179
    %200 = vst [vmem:[#allocation2 + $0x68] sm:$0xff] %v181
    %201 = vst [vmem:[#allocation2 + $0x70] sm:$0xff] %v183
    %202 = vst [vmem:[#allocation2 + $0x78] sm:$0xff] %v185
    %v203 = vld [vmem:[%s3] sm:$0xff]
    %v204 = vld [vmem:[%s3 + $0x8] sm:$0xff]
    %v205 = vld [vmem:[%s3 + $0x10] sm:$0xff]
    %v206 = vld [vmem:[%s3 + $0x18] sm:$0xff]
    %v207 = vld [vmem:[%s3 + $0x20] sm:$0xff]
    %v208 = vld [vmem:[%s3 + $0x28] sm:$0xff]
    %v209 = vld [vmem:[%s3 + $0x30] sm:$0xff]
    %v210 = vld [vmem:[%s3 + $0x38] sm:$0xff]
    %v211 = vld [vmem:[#allocation5] sm:$0xff]
    %v212 = vld [vmem:[#allocation5 + $0x8] sm:$0xff]
    %v213 = vld [vmem:[#allocation5 + $0x10] sm:$0xff]
    %v214 = vld [vmem:[#allocation5 + $0x18] sm:$0xff]
    %v215 = vld [vmem:[#allocation5 + $0x20] sm:$0xff]
    %v216 = vld [vmem:[#allocation5 + $0x28] sm:$0xff]
    %v217 = vld [vmem:[#allocation5 + $0x30] sm:$0xff]
    %v218 = vld [vmem:[#allocation5 + $0x38] sm:$0xff]
    %v219 = vld [vmem:[%s6] sm:$0xf]
    %v220 = vld [vmem:[%s6 + $0x4] sm:$0xf]
    %v221 = vld [vmem:[%s6 + $0x8] sm:$0xf]
    %v222 = vld [vmem:[%s6 + $0xc] sm:$0xf]
    %v223 = vld [vmem:[%s5] sm:$0x1]
    %v224 = vld [vmem:[#allocation2] sm:$0xff]
    %v225 = vld [vmem:[#allocation2 + $0x78] sm:$0xff]
    %v226 = vxor.u32 %v224, 2147483648
    %v227 = vmul.f32 %v226, 1.442695
    %v228 = vpow.pop %v227
    %v229 = vadd.f32 %v228, 1.0
    %v230 = vrcp.pop %v229
    %v231 = vmul.f32 1.0, %v230
    %v232 = vtanh.pop %v224
    %v233 = vmul.f32 %v231, 0.0
    %235 = vrot.lane.b32.xlu0 %v232, 64
    %v236 = vpop.permute.xlu0 %235
    %v238 = vmul.f32 %v231, %v236
    %240 = vrot.lane.b32.xlu0 %v238, 32
    %v241 = vpop.permute.xlu0 %240
    %v243 = vadd.f32 %v233, %v241
    %v244 = vtanh.pop %v243
    %246 = vrot.lane.b32.xlu0 %v244, 64
    %v247 = vpop.permute.xlu0 %246
    %v249 = vmul.f32 %v231, %v247
    %v250 = vxor.u32 %v225, 2147483648
    %v251 = vmul.f32 %v250, 1.442695
    %v252 = vpow.pop %v251
    %v253 = vadd.f32 %v252, 1.0
    %v254 = vrcp.pop %v253
    %v255 = vmul.f32 1.0, %v254
    %v256 = vtanh.pop %v225
    %v257 = vmul.f32 %v255, 0.0
    %259 = vrot.lane.b32.xlu0 %v256, 64
    %v260 = vpop.permute.xlu0 %259
    %v262 = vmul.f32 %v255, %v260
    %264 = vrot.lane.b32.xlu0 %v262, 32
    %v265 = vpop.permute.xlu0 %264
    %v267 = vadd.f32 %v257, %v265
    %v268 = vtanh.pop %v267
    %270 = vrot.lane.b32.xlu0 %v268, 64
    %v271 = vpop.permute.xlu0 %270
    %v273 = vmul.f32 %v255, %v271
    %275 = vrot.lane.b32.xlu0 %v249, 32
    %v276 = vpop.permute.xlu0 %275
    %279 = vrot.lane.b32.xlu0 %v273, 64
    %v280 = vpop.permute.xlu0 %279
    %vm282 = vcmask 261120
    %v283 = vsel %vm282, %v276, %v280
    %v284 = vpack.c.bf16 %v283, %v283
    %v293 = vunpack.c.l.b16 %v211
    %v294 = vunpack.c.h.b16 %v211
    %v295 = vunpack.c.l.b16 %v212
    %v296 = vunpack.c.h.b16 %v212
    %v297 = vunpack.c.l.b16 %v213
    %v298 = vunpack.c.h.b16 %v213
    %v299 = vunpack.c.l.b16 %v214
    %v300 = vunpack.c.h.b16 %v214
    %v301 = vunpack.c.l.b16 %v215
    %v302 = vunpack.c.h.b16 %v215
    %v303 = vunpack.c.l.b16 %v216
    %v304 = vunpack.c.h.b16 %v216
    %v305 = vunpack.c.l.b16 %v217
    %v306 = vunpack.c.h.b16 %v217
    %v307 = vunpack.c.l.b16 %v218
    %v308 = vunpack.c.h.b16 %v218
    %v309 = vpack.c.b16 %v295, %v293
    %v310 = vpack.c.b16 %v296, %v294
    %v311 = vpack.c.b16 %v299, %v297
    %v312 = vpack.c.b16 %v300, %v298
    %v313 = vpack.c.b16 %v303, %v301
    %v314 = vpack.c.b16 %v304, %v302
    %v315 = vpack.c.b16 %v307, %v305
    %v316 = vpack.c.b16 %v308, %v306
    %vm325 = vcmask 523264
    %v327 = vsel %vm325, %v284, 0
    %329 = vmatprep.subr.bf16.mxu0 %v310
    %330 = vmatpush1.bf16.msra.mxu0 %v309
    %331 = vmatprep.subr.bf16.mxu0 %v312
    %332 = vmatpush1.bf16.msra.mxu0 %v311
    %333 = vmatprep.subr.bf16.mxu0 %v314
    %334 = vmatpush1.bf16.msra.mxu0 %v313
    %335 = vmatprep.subr.bf16.mxu0 %v316
    %336 = vmatpush1.bf16.msra.mxu0 %v315
    %337 = vmatprep.subr.bf16.mxu0 0
    %338 = vmatpush1.bf16.msra.mxu0 0
    %339 = vmatprep.subr.bf16.mxu0 0
    %340 = vmatpush1.bf16.msra.mxu0 0
    %341 = vmatprep.subr.bf16.mxu0 0
    %342 = vmatpush1.bf16.msra.mxu0 0
    %343 = vmatprep.subr.bf16.mxu0 0
    %344 = vmatpush1.bf16.msra.mxu0 0
    %345 = vmatprep.subr.bf16.mxu0 0
    %346 = vmatpush1.bf16.msra.mxu0 0
    %347 = vmatprep.subr.bf16.mxu0 0
    %348 = vmatpush1.bf16.msra.mxu0 0
    %349 = vmatprep.subr.bf16.mxu0 0
    %350 = vmatpush1.bf16.msra.mxu0 0
    %351 = vmatprep.subr.bf16.mxu0 0
    %352 = vmatpush1.bf16.msra.mxu0 0
    %353 = vmatprep.subr.bf16.mxu0 0
    %354 = vmatpush1.bf16.msra.mxu0 0
    %355 = vmatprep.subr.bf16.mxu0 0
    %356 = vmatpush1.bf16.msra.mxu0 0
    %357 = vmatprep.subr.bf16.mxu0 0
    %358 = vmatpush1.bf16.msra.mxu0 0
    %359 = vmatprep.subr.bf16.mxu0 0
    %360 = vmatpush1.bf16.msra.mxu0 0
    %361 = vmatprep.mubr.bf16.mxu0 0
    %362 = vmatmul.mubr.bf16.gmra.mrb[0].mxu0 %v327
    %v363 = vpop.f32.mrb[0].mxu0
    %v364 = vadd.f32 0.0, %v363
    %v365 = vpop.f32.mrb[0].mxu0
    %v366 = vadd.f32 0.0, %v365
    %v367 = vpop.f32.mrb[0].mxu0
    %v368 = vpop.f32.mrb[0].mxu0
    %369 = vdwg.mxu0
    %370 = vst [vmem:[#allocation3] sm:$0xff] %v364
    %371 = vst [vmem:[#allocation3 + $0x78] sm:$0xff] %v366
    %v380 = vunpack.c.l.b16 %v203
    %v381 = vunpack.c.h.b16 %v203
    %v382 = vunpack.c.l.b16 %v204
    %v383 = vunpack.c.h.b16 %v204
    %v384 = vunpack.c.l.b16 %v205
    %v385 = vunpack.c.h.b16 %v205
    %v386 = vunpack.c.l.b16 %v206
    %v387 = vunpack.c.h.b16 %v206
    %v388 = vunpack.c.l.b16 %v207
    %v389 = vunpack.c.h.b16 %v207
    %v390 = vunpack.c.l.b16 %v208
    %v391 = vunpack.c.h.b16 %v208
    %v392 = vunpack.c.l.b16 %v209
    %v393 = vunpack.c.h.b16 %v209
    %v394 = vunpack.c.l.b16 %v210
    %v395 = vunpack.c.h.b16 %v210
    %v396 = vpack.c.b16 %v382, %v380
    %v397 = vpack.c.b16 %v383, %v381
    %v398 = vpack.c.b16 %v386, %v384
    %v399 = vpack.c.b16 %v387, %v385
    %v400 = vpack.c.b16 %v390, %v388
    %v401 = vpack.c.b16 %v391, %v389
    %v402 = vpack.c.b16 %v394, %v392
    %v403 = vpack.c.b16 %v395, %v393
    %412 = vmatprep.subr.bf16.mxu0 %v397
    %413 = vmatpush1.bf16.msra.mxu0 %v396
    %414 = vmatprep.subr.bf16.mxu0 %v399
    %415 = vmatpush1.bf16.msra.mxu0 %v398
    %416 = vmatprep.subr.bf16.mxu0 %v401
    %417 = vmatpush1.bf16.msra.mxu0 %v400
    %418 = vmatprep.subr.bf16.mxu0 %v403
    %419 = vmatpush1.bf16.msra.mxu0 %v402
    %420 = vmatprep.subr.bf16.mxu0 0
    %421 = vmatpush1.bf16.msra.mxu0 0
    %422 = vmatprep.subr.bf16.mxu0 0
    %423 = vmatpush1.bf16.msra.mxu0 0
    %424 = vmatprep.subr.bf16.mxu0 0
    %425 = vmatpush1.bf16.msra.mxu0 0
    %426 = vmatprep.subr.bf16.mxu0 0
    %427 = vmatpush1.bf16.msra.mxu0 0
    %428 = vmatprep.subr.bf16.mxu0 0
    %429 = vmatpush1.bf16.msra.mxu0 0
    %430 = vmatprep.subr.bf16.mxu0 0
    %431 = vmatpush1.bf16.msra.mxu0 0
    %432 = vmatprep.subr.bf16.mxu0 0
    %433 = vmatpush1.bf16.msra.mxu0 0
    %434 = vmatprep.subr.bf16.mxu0 0
    %435 = vmatpush1.bf16.msra.mxu0 0
    %436 = vmatprep.subr.bf16.mxu0 0
    %437 = vmatpush1.bf16.msra.mxu0 0
    %438 = vmatprep.subr.bf16.mxu0 0
    %439 = vmatpush1.bf16.msra.mxu0 0
    %440 = vmatprep.subr.bf16.mxu0 0
    %441 = vmatpush1.bf16.msra.mxu0 0
    %442 = vmatprep.subr.bf16.mxu0 0
    %443 = vmatpush1.bf16.msra.mxu0 0
    %444 = vmatprep.mubr.bf16.mxu0 0
    %445 = vmatmul.mubr.bf16.gmra.mrb[0].mxu0 %v327
    %v446 = vpop.f32.mrb[0].mxu0
    %v447 = vadd.f32 0.0, %v446
    %v448 = vpop.f32.mrb[0].mxu0
    %v449 = vadd.f32 0.0, %v448
    %v450 = vpop.f32.mrb[0].mxu0
    %v451 = vpop.f32.mrb[0].mxu0
    %452 = vdwg.mxu0
    %v453 = vld [vmem:[#allocation2 + $0x10] sm:$0xff]
    %v454 = vadd.f32 %v453, %v447
    %v455 = vld [vmem:[#allocation2 + $0x68] sm:$0xff]
    %v456 = vadd.f32 %v455, %v449
    %v457 = vxor.u32 %v454, 2147483648
    %v458 = vmul.f32 %v457, 1.442695
    %v459 = vpow.pop %v458
    %v460 = vadd.f32 %v459, 1.0
    %v461 = vrcp.pop %v460
    %v462 = vmul.f32 1.0, %v461
    %v463 = vtanh.pop %v454
    %v464 = vmul.f32 %v462, %v243
    %466 = vrot.lane.b32.xlu0 %v463, 64
    %v467 = vpop.permute.xlu0 %466
    %v469 = vmul.f32 %v462, %v467
    %471 = vrot.lane.b32.xlu0 %v469, 32
    %v472 = vpop.permute.xlu0 %471
    %v474 = vadd.f32 %v464, %v472
    %v475 = vtanh.pop %v474
    %477 = vrot.lane.b32.xlu0 %v475, 64
    %v478 = vpop.permute.xlu0 %477
    %v480 = vmul.f32 %v462, %v478
    %v481 = vxor.u32 %v456, 2147483648
    %v482 = vmul.f32 %v481, 1.442695
    %v483 = vpow.pop %v482
    %v484 = vadd.f32 %v483, 1.0
    %v485 = vrcp.pop %v484
    %v486 = vmul.f32 1.0, %v485
    %v487 = vtanh.pop %v456
    %v488 = vmul.f32 %v486, %v267
    %490 = vrot.lane.b32.xlu0 %v487, 64
    %v491 = vpop.permute.xlu0 %490
    %v493 = vmul.f32 %v486, %v491
    %495 = vrot.lane.b32.xlu0 %v493, 32
    %v496 = vpop.permute.xlu0 %495
    %v498 = vadd.f32 %v488, %v496
    %v499 = vtanh.pop %v498
    %501 = vrot.lane.b32.xlu0 %v499, 64
    %v502 = vpop.permute.xlu0 %501
    %v504 = vmul.f32 %v486, %v502
    %506 = vrot.lane.b32.xlu0 %v480, 32
    %v507 = vpop.permute.xlu0 %506
    %510 = vrot.lane.b32.xlu0 %v504, 64
    %v511 = vpop.permute.xlu0 %510
    %v513 = vsel %vm282, %v507, %v511
    %v514 = vpack.c.bf16 %v513, %v513
    %v516 = vsel %vm325, %v514, 0
    %518 = vmatprep.subr.bf16.mxu0 %v310
    %519 = vmatpush1.bf16.msra.mxu0 %v309
    %520 = vmatprep.subr.bf16.mxu0 %v312
    %521 = vmatpush1.bf16.msra.mxu0 %v311
    %522 = vmatprep.subr.bf16.mxu0 %v314
    %523 = vmatpush1.bf16.msra.mxu0 %v313
    %524 = vmatprep.subr.bf16.mxu0 %v316
    %525 = vmatpush1.bf16.msra.mxu0 %v315
    %526 = vmatprep.subr.bf16.mxu0 0
    %527 = vmatpush1.bf16.msra.mxu0 0
    %528 = vmatprep.subr.bf16.mxu0 0
    %529 = vmatpush1.bf16.msra.mxu0 0
    %530 = vmatprep.subr.bf16.mxu0 0
    %531 = vmatpush1.bf16.msra.mxu0 0
    %532 = vmatprep.subr.bf16.mxu0 0
    %533 = vmatpush1.bf16.msra.mxu0 0
    %534 = vmatprep.subr.bf16.mxu0 0
    %535 = vmatpush1.bf16.msra.mxu0 0
    %536 = vmatprep.subr.bf16.mxu0 0
    %537 = vmatpush1.bf16.msra.mxu0 0
    %538 = vmatprep.subr.bf16.mxu0 0
    %539 = vmatpush1.bf16.msra.mxu0 0
    %540 = vmatprep.subr.bf16.mxu0 0
    %541 = vmatpush1.bf16.msra.mxu0 0
    %542 = vmatprep.subr.bf16.mxu0 0
    %543 = vmatpush1.bf16.msra.mxu0 0
    %544 = vmatprep.subr.bf16.mxu0 0
    %545 = vmatpush1.bf16.msra.mxu0 0
    %546 = vmatprep.subr.bf16.mxu0 0
    %547 = vmatpush1.bf16.msra.mxu0 0
    %548 = vmatprep.subr.bf16.mxu0 0
    %549 = vmatpush1.bf16.msra.mxu0 0
    %550 = vmatprep.mubr.bf16.mxu0 0
    %551 = vmatmul.mubr.bf16.gmra.mrb[0].mxu0 %v516
    %v552 = vpop.f32.mrb[0].mxu0
    %v553 = vadd.f32 0.0, %v552
    %v554 = vpop.f32.mrb[0].mxu0
    %v555 = vadd.f32 0.0, %v554
    %v556 = vpop.f32.mrb[0].mxu0
    %v557 = vpop.f32.mrb[0].mxu0
    %558 = vdwg.mxu0
    %559 = vst [vmem:[#allocation3 + $0x10] sm:$0xff] %v553
    %560 = vst [vmem:[#allocation3 + $0x68] sm:$0xff] %v555
    %561 = vmatprep.subr.bf16.mxu0 %v397
    %562 = vmatpush1.bf16.msra.mxu0 %v396
    %563 = vmatprep.subr.bf16.mxu0 %v399
    %564 = vmatpush1.bf16.msra.mxu0 %v398
    %565 = vmatprep.subr.bf16.mxu0 %v401
    %566 = vmatpush1.bf16.msra.mxu0 %v400
    %567 = vmatprep.subr.bf16.mxu0 %v403
    %568 = vmatpush1.bf16.msra.mxu0 %v402
    %569 = vmatprep.subr.bf16.mxu0 0
    %570 = vmatpush1.bf16.msra.mxu0 0
    %571 = vmatprep.subr.bf16.mxu0 0
    %572 = vmatpush1.bf16.msra.mxu0 0
    %573 = vmatprep.subr.bf16.mxu0 0
    %574 = vmatpush1.bf16.msra.mxu0 0
    %575 = vmatprep.subr.bf16.mxu0 0
    %576 = vmatpush1.bf16.msra.mxu0 0
    %577 = vmatprep.subr.bf16.mxu0 0
    %578 = vmatpush1.bf16.msra.mxu0 0
    %579 = vmatprep.subr.bf16.mxu0 0
    %580 = vmatpush1.bf16.msra.mxu0 0
    %581 = vmatprep.subr.bf16.mxu0 0
    %582 = vmatpush1.bf16.msra.mxu0 0
    %583 = vmatprep.subr.bf16.mxu0 0
    %584 = vmatpush1.bf16.msra.mxu0 0
    %585 = vmatprep.subr.bf16.mxu0 0
    %586 = vmatpush1.bf16.msra.mxu0 0
    %587 = vmatprep.subr.bf16.mxu0 0
    %588 = vmatpush1.bf16.msra.mxu0 0
    %589 = vmatprep.subr.bf16.mxu0 0
    %590 = vmatpush1.bf16.msra.mxu0 0
    %591 = vmatprep.subr.bf16.mxu0 0
    %592 = vmatpush1.bf16.msra.mxu0 0
    %593 = vmatprep.mubr.bf16.mxu0 0
    %594 = vmatmul.mubr.bf16.gmra.mrb[0].mxu0 %v516
    %v595 = vpop.f32.mrb[0].mxu0
    %v596 = vadd.f32 0.0, %v595
    %v597 = vpop.f32.mrb[0].mxu0
    %v598 = vadd.f32 0.0, %v597
    %v599 = vpop.f32.mrb[0].mxu0
    %v600 = vpop.f32.mrb[0].mxu0
    %601 = vdwg.mxu0
    %v602 = vld [vmem:[#allocation2 + $0x20] sm:$0xff]
    %v603 = vadd.f32 %v602, %v596
    %v604 = vld [vmem:[#allocation2 + $0x58] sm:$0xff]
    %v605 = vadd.f32 %v604, %v598
    %v606 = vxor.u32 %v603, 2147483648
    %v607 = vmul.f32 %v606, 1.442695
    %v608 = vpow.pop %v607
    %v609 = vadd.f32 %v608, 1.0
    %v610 = vrcp.pop %v609
    %v611 = vmul.f32 1.0, %v610
    %v612 = vtanh.pop %v603
    %v613 = vmul.f32 %v611, %v474
    %615 = vrot.lane.b32.xlu0 %v612, 64
    %v616 = vpop.permute.xlu0 %615
    %v618 = vmul.f32 %v611, %v616
    %620 = vrot.lane.b32.xlu0 %v618, 32
    %v621 = vpop.permute.xlu0 %620
    %v623 = vadd.f32 %v613, %v621
    %v624 = vtanh.pop %v623
    %626 = vrot.lane.b32.xlu0 %v624, 64
    %v627 = vpop.permute.xlu0 %626
    %v629 = vmul.f32 %v611, %v627
    %v630 = vxor.u32 %v605, 2147483648
    %v631 = vmul.f32 %v630, 1.442695
    %v632 = vpow.pop %v631
    %v633 = vadd.f32 %v632, 1.0
    %v634 = vrcp.pop %v633
    %v635 = vmul.f32 1.0, %v634
    %v636 = vtanh.pop %v605
    %v637 = vmul.f32 %v635, %v498
    %639 = vrot.lane.b32.xlu0 %v636, 64
    %v640 = vpop.permute.xlu0 %639
    %v642 = vmul.f32 %v635, %v640
    %644 = vrot.lane.b32.xlu0 %v642, 32
    %v645 = vpop.permute.xlu0 %644
    %v647 = vadd.f32 %v637, %v645
    %v648 = vtanh.pop %v647
    %650 = vrot.lane.b32.xlu0 %v648, 64
    %v651 = vpop.permute.xlu0 %650
    %v653 = vmul.f32 %v635, %v651
    %655 = vrot.lane.b32.xlu0 %v629, 32
    %v656 = vpop.permute.xlu0 %655
    %659 = vrot.lane.b32.xlu0 %v653, 64
    %v660 = vpop.permute.xlu0 %659
    %v662 = vsel %vm282, %v656, %v660
    %v663 = vpack.c.bf16 %v662, %v662
    %v665 = vsel %vm325, %v663, 0
    %667 = vmatprep.subr.bf16.mxu0 %v310
    %668 = vmatpush1.bf16.msra.mxu0 %v309
    %669 = vmatprep.subr.bf16.mxu0 %v312
    %670 = vmatpush1.bf16.msra.mxu0 %v311
    %671 = vmatprep.subr.bf16.mxu0 %v314
    %672 = vmatpush1.bf16.msra.mxu0 %v313
    %673 = vmatprep.subr.bf16.mxu0 %v316
    %674 = vmatpush1.bf16.msra.mxu0 %v315
    %675 = vmatprep.subr.bf16.mxu0 0
    %676 = vmatpush1.bf16.msra.mxu0 0
    %677 = vmatprep.subr.bf16.mxu0 0
    %678 = vmatpush1.bf16.msra.mxu0 0
    %679 = vmatprep.subr.bf16.mxu0 0
    %680 = vmatpush1.bf16.msra.mxu0 0
    %681 = vmatprep.subr.bf16.mxu0 0
    %682 = vmatpush1.bf16.msra.mxu0 0
    %683 = vmatprep.subr.bf16.mxu0 0
    %684 = vmatpush1.bf16.msra.mxu0 0
    %685 = vmatprep.subr.bf16.mxu0 0
    %686 = vmatpush1.bf16.msra.mxu0 0
    %687 = vmatprep.subr.bf16.mxu0 0
    %688 = vmatpush1.bf16.msra.mxu0 0
    %689 = vmatprep.subr.bf16.mxu0 0
    %690 = vmatpush1.bf16.msra.mxu0 0
    %691 = vmatprep.subr.bf16.mxu0 0
    %692 = vmatpush1.bf16.msra.mxu0 0
    %693 = vmatprep.subr.bf16.mxu0 0
    %694 = vmatpush1.bf16.msra.mxu0 0
    %695 = vmatprep.subr.bf16.mxu0 0
    %696 = vmatpush1.bf16.msra.mxu0 0
    %697 = vmatprep.subr.bf16.mxu0 0
    %698 = vmatpush1.bf16.msra.mxu0 0
    %699 = vmatprep.mubr.bf16.mxu0 0
    %700 = vmatmul.mubr.bf16.gmra.mrb[0].mxu0 %v665
    %v701 = vpop.f32.mrb[0].mxu0
    %v702 = vadd.f32 0.0, %v701
    %v703 = vpop.f32.mrb[0].mxu0
    %v704 = vadd.f32 0.0, %v703
    %v705 = vpop.f32.mrb[0].mxu0
    %v706 = vpop.f32.mrb[0].mxu0
    %707 = vdwg.mxu0
    %708 = vst [vmem:[#allocation3 + $0x20] sm:$0xff] %v702
    %709 = vst [vmem:[#allocation3 + $0x58] sm:$0xff] %v704
    %710 = vmatprep.subr.bf16.mxu0 %v397
    %711 = vmatpush1.bf16.msra.mxu0 %v396
    %712 = vmatprep.subr.bf16.mxu0 %v399
    %713 = vmatpush1.bf16.msra.mxu0 %v398
    %714 = vmatprep.subr.bf16.mxu0 %v401
    %715 = vmatpush1.bf16.msra.mxu0 %v400
    %716 = vmatprep.subr.bf16.mxu0 %v403
    %717 = vmatpush1.bf16.msra.mxu0 %v402
    %718 = vmatprep.subr.bf16.mxu0 0
    %719 = vmatpush1.bf16.msra.mxu0 0
    %720 = vmatprep.subr.bf16.mxu0 0
    %721 = vmatpush1.bf16.msra.mxu0 0
    %722 = vmatprep.subr.bf16.mxu0 0
    %723 = vmatpush1.bf16.msra.mxu0 0
    %724 = vmatprep.subr.bf16.mxu0 0
    %725 = vmatpush1.bf16.msra.mxu0 0
    %726 = vmatprep.subr.bf16.mxu0 0
    %727 = vmatpush1.bf16.msra.mxu0 0
    %728 = vmatprep.subr.bf16.mxu0 0
    %729 = vmatpush1.bf16.msra.mxu0 0
    %730 = vmatprep.subr.bf16.mxu0 0
    %731 = vmatpush1.bf16.msra.mxu0 0
    %732 = vmatprep.subr.bf16.mxu0 0
    %733 = vmatpush1.bf16.msra.mxu0 0
    %734 = vmatprep.subr.bf16.mxu0 0
    %735 = vmatpush1.bf16.msra.mxu0 0
    %736 = vmatprep.subr.bf16.mxu0 0
    %737 = vmatpush1.bf16.msra.mxu0 0
    %738 = vmatprep.subr.bf16.mxu0 0
    %739 = vmatpush1.bf16.msra.mxu0 0
    %740 = vmatprep.subr.bf16.mxu0 0
    %741 = vmatpush1.bf16.msra.mxu0 0
    %742 = vmatprep.mubr.bf16.mxu0 0
    %743 = vmatmul.mubr.bf16.gmra.mrb[0].mxu0 %v665
    %v744 = vpop.f32.mrb[0].mxu0
    %v745 = vadd.f32 0.0, %v744
    %v746 = vpop.f32.mrb[0].mxu0
    %v747 = vadd.f32 0.0, %v746
    %v748 = vpop.f32.mrb[0].mxu0
    %v749 = vpop.f32.mrb[0].mxu0
    %750 = vdwg.mxu0
    %v751 = vld [vmem:[#allocation2 + $0x30] sm:$0xff]
    %v752 = vadd.f32 %v751, %v745
    %v753 = vld [vmem:[#allocation2 + $0x48] sm:$0xff]
    %v754 = vadd.f32 %v753, %v747
    %v755 = vxor.u32 %v752, 2147483648
    %v756 = vmul.f32 %v755, 1.442695
    %v757 = vpow.pop %v756
    %v758 = vadd.f32 %v757, 1.0
    %v759 = vrcp.pop %v758
    %v760 = vmul.f32 1.0, %v759
    %v761 = vtanh.pop %v752
    %v762 = vmul.f32 %v760, %v623
    %764 = vrot.lane.b32.xlu0 %v761, 64
    %v765 = vpop.permute.xlu0 %764
    %v767 = vmul.f32 %v760, %v765
    %769 = vrot.lane.b32.xlu0 %v767, 32
    %v770 = vpop.permute.xlu0 %769
    %v772 = vadd.f32 %v762, %v770
    %v773 = vtanh.pop %v772
    %775 = vrot.lane.b32.xlu0 %v773, 64
    %v776 = vpop.permute.xlu0 %775
    %v778 = vmul.f32 %v760, %v776
    %v779 = vxor.u32 %v754, 2147483648
    %v780 = vmul.f32 %v779, 1.442695
    %v781 = vpow.pop %v780
    %v782 = vadd.f32 %v781, 1.0
    %v783 = vrcp.pop %v782
    %v784 = vmul.f32 1.0, %v783
    %v785 = vtanh.pop %v754
    %v786 = vmul.f32 %v784, %v647
    %788 = vrot.lane.b32.xlu0 %v785, 64
    %v789 = vpop.permute.xlu0 %788
    %v791 = vmul.f32 %v784, %v789
    %793 = vrot.lane.b32.xlu0 %v791, 32
    %v794 = vpop.permute.xlu0 %793
    %v796 = vadd.f32 %v786, %v794
    %v797 = vtanh.pop %v796
    %799 = vrot.lane.b32.xlu0 %v797, 64
    %v800 = vpop.permute.xlu0 %799
    %v802 = vmul.f32 %v784, %v800
    %804 = vrot.lane.b32.xlu0 %v778, 32
    %v805 = vpop.permute.xlu0 %804
    %808 = vrot.lane.b32.xlu0 %v802, 64
    %v809 = vpop.permute.xlu0 %808
    %v811 = vsel %vm282, %v805, %v809
    %v812 = vpack.c.bf16 %v811, %v811
    %v814 = vsel %vm325, %v812, 0
    %816 = vmatprep.subr.bf16.mxu0 %v310
    %817 = vmatpush1.bf16.msra.mxu0 %v309
    %818 = vmatprep.subr.bf16.mxu0 %v312
    %819 = vmatpush1.bf16.msra.mxu0 %v311
    %820 = vmatprep.subr.bf16.mxu0 %v314
    %821 = vmatpush1.bf16.msra.mxu0 %v313
    %822 = vmatprep.subr.bf16.mxu0 %v316
    %823 = vmatpush1.bf16.msra.mxu0 %v315
    %824 = vmatprep.subr.bf16.mxu0 0
    %825 = vmatpush1.bf16.msra.mxu0 0
    %826 = vmatprep.subr.bf16.mxu0 0
    %827 = vmatpush1.bf16.msra.mxu0 0
    %828 = vmatprep.subr.bf16.mxu0 0
    %829 = vmatpush1.bf16.msra.mxu0 0
    %830 = vmatprep.subr.bf16.mxu0 0
    %831 = vmatpush1.bf16.msra.mxu0 0
    %832 = vmatprep.subr.bf16.mxu0 0
    %833 = vmatpush1.bf16.msra.mxu0 0
    %834 = vmatprep.subr.bf16.mxu0 0
    %835 = vmatpush1.bf16.msra.mxu0 0
    %836 = vmatprep.subr.bf16.mxu0 0
    %837 = vmatpush1.bf16.msra.mxu0 0
    %838 = vmatprep.subr.bf16.mxu0 0
    %839 = vmatpush1.bf16.msra.mxu0 0
    %840 = vmatprep.subr.bf16.mxu0 0
    %841 = vmatpush1.bf16.msra.mxu0 0
    %842 = vmatprep.subr.bf16.mxu0 0
    %843 = vmatpush1.bf16.msra.mxu0 0
    %844 = vmatprep.subr.bf16.mxu0 0
    %845 = vmatpush1.bf16.msra.mxu0 0
    %846 = vmatprep.subr.bf16.mxu0 0
    %847 = vmatpush1.bf16.msra.mxu0 0
    %848 = vmatprep.mubr.bf16.mxu0 0
    %849 = vmatmul.mubr.bf16.gmra.mrb[0].mxu0 %v814
    %v850 = vpop.f32.mrb[0].mxu0
    %v851 = vadd.f32 0.0, %v850
    %v852 = vpop.f32.mrb[0].mxu0
    %v853 = vadd.f32 0.0, %v852
    %v854 = vpop.f32.mrb[0].mxu0
    %v855 = vpop.f32.mrb[0].mxu0
    %856 = vdwg.mxu0
    %857 = vst [vmem:[#allocation3 + $0x30] sm:$0xff] %v851
    %858 = vst [vmem:[#allocation3 + $0x48] sm:$0xff] %v853
    %859 = vmatprep.subr.bf16.mxu0 %v397
    %860 = vmatpush1.bf16.msra.mxu0 %v396
    %861 = vmatprep.subr.bf16.mxu0 %v399
    %862 = vmatpush1.bf16.msra.mxu0 %v398
    %863 = vmatprep.subr.bf16.mxu0 %v401
    %864 = vmatpush1.bf16.msra.mxu0 %v400
    %865 = vmatprep.subr.bf16.mxu0 %v403
    %866 = vmatpush1.bf16.msra.mxu0 %v402
    %867 = vmatprep.subr.bf16.mxu0 0
    %868 = vmatpush1.bf16.msra.mxu0 0
    %869 = vmatprep.subr.bf16.mxu0 0
    %870 = vmatpush1.bf16.msra.mxu0 0
    %871 = vmatprep.subr.bf16.mxu0 0
    %872 = vmatpush1.bf16.msra.mxu0 0
    %873 = vmatprep.subr.bf16.mxu0 0
    %874 = vmatpush1.bf16.msra.mxu0 0
    %875 = vmatprep.subr.bf16.mxu0 0
    %876 = vmatpush1.bf16.msra.mxu0 0
    %877 = vmatprep.subr.bf16.mxu0 0
    %878 = vmatpush1.bf16.msra.mxu0 0
    %879 = vmatprep.subr.bf16.mxu0 0
    %880 = vmatpush1.bf16.msra.mxu0 0
    %881 = vmatprep.subr.bf16.mxu0 0
    %882 = vmatpush1.bf16.msra.mxu0 0
    %883 = vmatprep.subr.bf16.mxu0 0
    %884 = vmatpush1.bf16.msra.mxu0 0
    %885 = vmatprep.subr.bf16.mxu0 0
    %886 = vmatpush1.bf16.msra.mxu0 0
    %887 = vmatprep.subr.bf16.mxu0 0
    %888 = vmatpush1.bf16.msra.mxu0 0
    %889 = vmatprep.subr.bf16.mxu0 0
    %890 = vmatpush1.bf16.msra.mxu0 0
    %891 = vmatprep.mubr.bf16.mxu0 0
    %892 = vmatmul.mubr.bf16.gmra.mrb[0].mxu0 %v814
    %v893 = vpop.f32.mrb[0].mxu0
    %v894 = vadd.f32 0.0, %v893
    %v895 = vpop.f32.mrb[0].mxu0
    %v896 = vadd.f32 0.0, %v895
    %v897 = vpop.f32.mrb[0].mxu0
    %v898 = vpop.f32.mrb[0].mxu0
    %899 = vdwg.mxu0
    %v900 = vld [vmem:[#allocation2 + $0x40] sm:$0xff]
    %v901 = vadd.f32 %v900, %v894
    %v902 = vld [vmem:[#allocation2 + $0x38] sm:$0xff]
    %v903 = vadd.f32 %v902, %v896
    %v904 = vxor.u32 %v901, 2147483648
    %v905 = vmul.f32 %v904, 1.442695
    %v906 = vpow.pop %v905
    %v907 = vadd.f32 %v906, 1.0
    %v908 = vrcp.pop %v907
    %v909 = vmul.f32 1.0, %v908
    %v910 = vtanh.pop %v901
    %v911 = vmul.f32 %v909, %v772
    %913 = vrot.lane.b32.xlu0 %v910, 64
    %v914 = vpop.permute.xlu0 %913
    %v916 = vmul.f32 %v909, %v914
    %918 = vrot.lane.b32.xlu0 %v916, 32
    %v919 = vpop.permute.xlu0 %918
    %v921 = vadd.f32 %v911, %v919
    %v922 = vtanh.pop %v921
    %924 = vrot.lane.b32.xlu0 %v922, 64
    %v925 = vpop.permute.xlu0 %924
    %v927 = vmul.f32 %v909, %v925
    %v928 = vxor.u32 %v903, 2147483648
    %v929 = vmul.f32 %v928, 1.442695
    %v930 = vpow.pop %v929
    %v931 = vadd.f32 %v930, 1.0
    %v932 = vrcp.pop %v931
    %v933 = vmul.f32 1.0, %v932
    %v934 = vtanh.pop %v903
    %v935 = vmul.f32 %v933, %v796
    %937 = vrot.lane.b32.xlu0 %v934, 64
    %v938 = vpop.permute.xlu0 %937
    %v940 = vmul.f32 %v933, %v938
    %942 = vrot.lane.b32.xlu0 %v940, 32
    %v943 = vpop.permute.xlu0 %942
    %v945 = vadd.f32 %v935, %v943
    %v946 = vtanh.pop %v945
    %948 = vrot.lane.b32.xlu0 %v946, 64
    %v949 = vpop.permute.xlu0 %948
    %v951 = vmul.f32 %v933, %v949
    %953 = vrot.lane.b32.xlu0 %v927, 32
    %v954 = vpop.permute.xlu0 %953
    %957 = vrot.lane.b32.xlu0 %v951, 64
    %v958 = vpop.permute.xlu0 %957
    %v960 = vsel %vm282, %v954, %v958
    %v961 = vpack.c.bf16 %v960, %v960
    %v963 = vsel %vm325, %v961, 0
    %965 = vmatprep.subr.bf16.mxu0 %v310
    %966 = vmatpush1.bf16.msra.mxu0 %v309
    %967 = vmatprep.subr.bf16.mxu0 %v312
    %968 = vmatpush1.bf16.msra.mxu0 %v311
    %969 = vmatprep.subr.bf16.mxu0 %v314
    %970 = vmatpush1.bf16.msra.mxu0 %v313
    %971 = vmatprep.subr.bf16.mxu0 %v316
    %972 = vmatpush1.bf16.msra.mxu0 %v315
    %973 = vmatprep.subr.bf16.mxu0 0
    %974 = vmatpush1.bf16.msra.mxu0 0
    %975 = vmatprep.subr.bf16.mxu0 0
    %976 = vmatpush1.bf16.msra.mxu0 0
    %977 = vmatprep.subr.bf16.mxu0 0
    %978 = vmatpush1.bf16.msra.mxu0 0
    %979 = vmatprep.subr.bf16.mxu0 0
    %980 = vmatpush1.bf16.msra.mxu0 0
    %981 = vmatprep.subr.bf16.mxu0 0
    %982 = vmatpush1.bf16.msra.mxu0 0
    %983 = vmatprep.subr.bf16.mxu0 0
    %984 = vmatpush1.bf16.msra.mxu0 0
    %985 = vmatprep.subr.bf16.mxu0 0
    %986 = vmatpush1.bf16.msra.mxu0 0
    %987 = vmatprep.subr.bf16.mxu0 0
    %988 = vmatpush1.bf16.msra.mxu0 0
    %989 = vmatprep.subr.bf16.mxu0 0
    %990 = vmatpush1.bf16.msra.mxu0 0
    %991 = vmatprep.subr.bf16.mxu0 0
    %992 = vmatpush1.bf16.msra.mxu0 0
    %993 = vmatprep.subr.bf16.mxu0 0
    %994 = vmatpush1.bf16.msra.mxu0 0
    %995 = vmatprep.subr.bf16.mxu0 0
    %996 = vmatpush1.bf16.msra.mxu0 0
    %997 = vmatprep.mubr.bf16.mxu0 0
    %998 = vmatmul.mubr.bf16.gmra.mrb[0].mxu0 %v963
    %v999 = vpop.f32.mrb[0].mxu0
    %v1000 = vadd.f32 0.0, %v999
    %v1001 = vpop.f32.mrb[0].mxu0
    %v1002 = vadd.f32 0.0, %v1001
    %v1003 = vpop.f32.mrb[0].mxu0
    %v1004 = vpop.f32.mrb[0].mxu0
    %1005 = vdwg.mxu0
    %1006 = vst [vmem:[#allocation3 + $0x40] sm:$0xff] %v1000
    %1007 = vst [vmem:[#allocation3 + $0x38] sm:$0xff] %v1002
    %1008 = vmatprep.subr.bf16.mxu0 %v397
    %1009 = vmatpush1.bf16.msra.mxu0 %v396
    %1010 = vmatprep.subr.bf16.mxu0 %v399
    %1011 = vmatpush1.bf16.msra.mxu0 %v398
    %1012 = vmatprep.subr.bf16.mxu0 %v401
    %1013 = vmatpush1.bf16.msra.mxu0 %v400
    %1014 = vmatprep.subr.bf16.mxu0 %v403
    %1015 = vmatpush1.bf16.msra.mxu0 %v402
    %1016 = vmatprep.subr.bf16.mxu0 0
    %1017 = vmatpush1.bf16.msra.mxu0 0
    %1018 = vmatprep.subr.bf16.mxu0 0
    %1019 = vmatpush1.bf16.msra.mxu0 0
    %1020 = vmatprep.subr.bf16.mxu0 0
    %1021 = vmatpush1.bf16.msra.mxu0 0
    %1022 = vmatprep.subr.bf16.mxu0 0
    %1023 = vmatpush1.bf16.msra.mxu0 0
    %1024 = vmatprep.subr.bf16.mxu0 0
    %1025 = vmatpush1.bf16.msra.mxu0 0
    %1026 = vmatprep.subr.bf16.mxu0 0
    %1027 = vmatpush1.bf16.msra.mxu0 0
    %1028 = vmatprep.subr.bf16.mxu0 0
    %1029 = vmatpush1.bf16.msra.mxu0 0
    %1030 = vmatprep.subr.bf16.mxu0 0
    %1031 = vmatpush1.bf16.msra.mxu0 0
    %1032 = vmatprep.subr.bf16.mxu0 0
    %1033 = vmatpush1.bf16.msra.mxu0 0
    %1034 = vmatprep.subr.bf16.mxu0 0
    %1035 = vmatpush1.bf16.msra.mxu0 0
    %1036 = vmatprep.subr.bf16.mxu0 0
    %1037 = vmatpush1.bf16.msra.mxu0 0
    %1038 = vmatprep.subr.bf16.mxu0 0
    %1039 = vmatpush1.bf16.msra.mxu0 0
    %1040 = vmatprep.mubr.bf16.mxu0 0
    %1041 = vmatmul.mubr.bf16.gmra.mrb[0].mxu0 %v963
    %v1042 = vpop.f32.mrb[0].mxu0
    %v1043 = vadd.f32 0.0, %v1042
    %v1044 = vpop.f32.mrb[0].mxu0
    %v1045 = vadd.f32 0.0, %v1044
    %v1046 = vpop.f32.mrb[0].mxu0
    %v1047 = vpop.f32.mrb[0].mxu0
    %1048 = vdwg.mxu0
    %v1049 = vld [vmem:[#allocation2 + $0x50] sm:$0xff]
    %v1050 = vadd.f32 %v1049, %v1043
    %v1051 = vld [vmem:[#allocation2 + $0x28] sm:$0xff]
    %v1052 = vadd.f32 %v1051, %v1045
    %v1053 = vxor.u32 %v1050, 2147483648
    %v1054 = vmul.f32 %v1053, 1.442695
    %v1055 = vpow.pop %v1054
    %v1056 = vadd.f32 %v1055, 1.0
    %v1057 = vrcp.pop %v1056
    %v1058 = vmul.f32 1.0, %v1057
    %v1059 = vtanh.pop %v1050
    %v1060 = vmul.f32 %v1058, %v921
    %1062 = vrot.lane.b32.xlu0 %v1059, 64
    %v1063 = vpop.permute.xlu0 %1062
    %v1065 = vmul.f32 %v1058, %v1063
    %1067 = vrot.lane.b32.xlu0 %v1065, 32
    %v1068 = vpop.permute.xlu0 %1067
    %v1070 = vadd.f32 %v1060, %v1068
    %v1071 = vtanh.pop %v1070
    %1073 = vrot.lane.b32.xlu0 %v1071, 64
    %v1074 = vpop.permute.xlu0 %1073
    %v1076 = vmul.f32 %v1058, %v1074
    %v1077 = vxor.u32 %v1052, 2147483648
    %v1078 = vmul.f32 %v1077, 1.442695
    %v1079 = vpow.pop %v1078
    %v1080 = vadd.f32 %v1079, 1.0
    %v1081 = vrcp.pop %v1080
    %v1082 = vmul.f32 1.0, %v1081
    %v1083 = vtanh.pop %v1052
    %v1084 = vmul.f32 %v1082, %v945
    %1086 = vrot.lane.b32.xlu0 %v1083, 64
    %v1087 = vpop.permute.xlu0 %1086
    %v1089 = vmul.f32 %v1082, %v1087
    %1091 = vrot.lane.b32.xlu0 %v1089, 32
    %v1092 = vpop.permute.xlu0 %1091
    %v1094 = vadd.f32 %v1084, %v1092
    %v1095 = vtanh.pop %v1094
    %1097 = vrot.lane.b32.xlu0 %v1095, 64
    %v1098 = vpop.permute.xlu0 %1097
    %v1100 = vmul.f32 %v1082, %v1098
    %1102 = vrot.lane.b32.xlu0 %v1076, 32
    %v1103 = vpop.permute.xlu0 %1102
    %1106 = vrot.lane.b32.xlu0 %v1100, 64
    %v1107 = vpop.permute.xlu0 %1106
    %v1109 = vsel %vm282, %v1103, %v1107
    %v1110 = vpack.c.bf16 %v1109, %v1109
    %v1112 = vsel %vm325, %v1110, 0
    %1114 = vmatprep.subr.bf16.mxu0 %v310
    %1115 = vmatpush1.bf16.msra.mxu0 %v309
    %1116 = vmatprep.subr.bf16.mxu0 %v312
    %1117 = vmatpush1.bf16.msra.mxu0 %v311
    %1118 = vmatprep.subr.bf16.mxu0 %v314
    %1119 = vmatpush1.bf16.msra.mxu0 %v313
    %1120 = vmatprep.subr.bf16.mxu0 %v316
    %1121 = vmatpush1.bf16.msra.mxu0 %v315
    %1122 = vmatprep.subr.bf16.mxu0 0
    %1123 = vmatpush1.bf16.msra.mxu0 0
    %1124 = vmatprep.subr.bf16.mxu0 0
    %1125 = vmatpush1.bf16.msra.mxu0 0
    %1126 = vmatprep.subr.bf16.mxu0 0
    %1127 = vmatpush1.bf16.msra.mxu0 0
    %1128 = vmatprep.subr.bf16.mxu0 0
    %1129 = vmatpush1.bf16.msra.mxu0 0
    %1130 = vmatprep.subr.bf16.mxu0 0
    %1131 = vmatpush1.bf16.msra.mxu0 0
    %1132 = vmatprep.subr.bf16.mxu0 0
    %1133 = vmatpush1.bf16.msra.mxu0 0
    %1134 = vmatprep.subr.bf16.mxu0 0
    %1135 = vmatpush1.bf16.msra.mxu0 0
    %1136 = vmatprep.subr.bf16.mxu0 0
    %1137 = vmatpush1.bf16.msra.mxu0 0
    %1138 = vmatprep.subr.bf16.mxu0 0
    %1139 = vmatpush1.bf16.msra.mxu0 0
    %1140 = vmatprep.subr.bf16.mxu0 0
    %1141 = vmatpush1.bf16.msra.mxu0 0
    %1142 = vmatprep.subr.bf16.mxu0 0
    %1143 = vmatpush1.bf16.msra.mxu0 0
    %1144 = vmatprep.subr.bf16.mxu0 0
    %1145 = vmatpush1.bf16.msra.mxu0 0
    %1146 = vmatprep.mubr.bf16.mxu0 0
    %1147 = vmatmul.mubr.bf16.gmra.mrb[0].mxu0 %v1112
    %v1148 = vpop.f32.mrb[0].mxu0
    %v1149 = vadd.f32 0.0, %v1148
    %v1150 = vpop.f32.mrb[0].mxu0
    %v1151 = vadd.f32 0.0, %v1150
    %v1152 = vpop.f32.mrb[0].mxu0
    %v1153 = vpop.f32.mrb[0].mxu0
    %1154 = vdwg.mxu0
    %1155 = vst [vmem:[#allocation3 + $0x50] sm:$0xff] %v1149
    %1156 = vst [vmem:[#allocation3 + $0x28] sm:$0xff] %v1151
    %1157 = vmatprep.subr.bf16.mxu0 %v397
    %1158 = vmatpush1.bf16.msra.mxu0 %v396
    %1159 = vmatprep.subr.bf16.mxu0 %v399
    %1160 = vmatpush1.bf16.msra.mxu0 %v398
    %1161 = vmatprep.subr.bf16.mxu0 %v401
    %1162 = vmatpush1.bf16.msra.mxu0 %v400
    %1163 = vmatprep.subr.bf16.mxu0 %v403
    %1164 = vmatpush1.bf16.msra.mxu0 %v402
    %1165 = vmatprep.subr.bf16.mxu0 0
    %1166 = vmatpush1.bf16.msra.mxu0 0
    %1167 = vmatprep.subr.bf16.mxu0 0
    %1168 = vmatpush1.bf16.msra.mxu0 0
    %1169 = vmatprep.subr.bf16.mxu0 0
    %1170 = vmatpush1.bf16.msra.mxu0 0
    %1171 = vmatprep.subr.bf16.mxu0 0
    %1172 = vmatpush1.bf16.msra.mxu0 0
    %1173 = vmatprep.subr.bf16.mxu0 0
    %1174 = vmatpush1.bf16.msra.mxu0 0
    %1175 = vmatprep.subr.bf16.mxu0 0
    %1176 = vmatpush1.bf16.msra.mxu0 0
    %1177 = vmatprep.subr.bf16.mxu0 0
    %1178 = vmatpush1.bf16.msra.mxu0 0
    %1179 = vmatprep.subr.bf16.mxu0 0
    %1180 = vmatpush1.bf16.msra.mxu0 0
    %1181 = vmatprep.subr.bf16.mxu0 0
    %1182 = vmatpush1.bf16.msra.mxu0 0
    %1183 = vmatprep.subr.bf16.mxu0 0
    %1184 = vmatpush1.bf16.msra.mxu0 0
    %1185 = vmatprep.subr.bf16.mxu0 0
    %1186 = vmatpush1.bf16.msra.mxu0 0
    %1187 = vmatprep.subr.bf16.mxu0 0
    %1188 = vmatpush1.bf16.msra.mxu0 0
    %1189 = vmatprep.mubr.bf16.mxu0 0
    %1190 = vmatmul.mubr.bf16.gmra.mrb[0].mxu0 %v1112
    %v1191 = vpop.f32.mrb[0].mxu0
    %v1192 = vadd.f32 0.0, %v1191
    %v1193 = vpop.f32.mrb[0].mxu0
    %v1194 = vadd.f32 0.0, %v1193
    %v1195 = vpop.f32.mrb[0].mxu0
    %v1196 = vpop.f32.mrb[0].mxu0
    %1197 = vdwg.mxu0
    %v1198 = vld [vmem:[#allocation2 + $0x60] sm:$0xff]
    %v1199 = vadd.f32 %v1198, %v1192
    %v1200 = vld [vmem:[#allocation2 + $0x18] sm:$0xff]
    %v1201 = vadd.f32 %v1200, %v1194
    %v1202 = vxor.u32 %v1199, 2147483648
    %v1203 = vmul.f32 %v1202, 1.442695
    %v1204 = vpow.pop %v1203
    %v1205 = vadd.f32 %v1204, 1.0
    %v1206 = vrcp.pop %v1205
    %v1207 = vmul.f32 1.0, %v1206
    %v1208 = vtanh.pop %v1199
    %v1209 = vmul.f32 %v1207, %v1070
    %1211 = vrot.lane.b32.xlu0 %v1208, 64
    %v1212 = vpop.permute.xlu0 %1211
    %v1214 = vmul.f32 %v1207, %v1212
    %1216 = vrot.lane.b32.xlu0 %v1214, 32
    %v1217 = vpop.permute.xlu0 %1216
    %v1219 = vadd.f32 %v1209, %v1217
    %v1220 = vtanh.pop %v1219
    %1222 = vrot.lane.b32.xlu0 %v1220, 64
    %v1223 = vpop.permute.xlu0 %1222
    %v1225 = vmul.f32 %v1207, %v1223
    %v1226 = vxor.u32 %v1201, 2147483648
    %v1227 = vmul.f32 %v1226, 1.442695
    %v1228 = vpow.pop %v1227
    %v1229 = vadd.f32 %v1228, 1.0
    %v1230 = vrcp.pop %v1229
    %v1231 = vmul.f32 1.0, %v1230
    %v1232 = vtanh.pop %v1201
    %v1233 = vmul.f32 %v1231, %v1094
    %1235 = vrot.lane.b32.xlu0 %v1232, 64
    %v1236 = vpop.permute.xlu0 %1235
    %v1238 = vmul.f32 %v1231, %v1236
    %1240 = vrot.lane.b32.xlu0 %v1238, 32
    %v1241 = vpop.permute.xlu0 %1240
    %v1243 = vadd.f32 %v1233, %v1241
    %v1244 = vtanh.pop %v1243
    %1246 = vrot.lane.b32.xlu0 %v1244, 64
    %v1247 = vpop.permute.xlu0 %1246
    %v1249 = vmul.f32 %v1231, %v1247
    %1251 = vrot.lane.b32.xlu0 %v1225, 32
    %v1252 = vpop.permute.xlu0 %1251
    %1255 = vrot.lane.b32.xlu0 %v1249, 64
    %v1256 = vpop.permute.xlu0 %1255
    %v1258 = vsel %vm282, %v1252, %v1256
    %v1259 = vpack.c.bf16 %v1258, %v1258
    %v1261 = vsel %vm325, %v1259, 0
    %1263 = vmatprep.subr.bf16.mxu0 %v310
    %1264 = vmatpush1.bf16.msra.mxu0 %v309
    %1265 = vmatprep.subr.bf16.mxu0 %v312
    %1266 = vmatpush1.bf16.msra.mxu0 %v311
    %1267 = vmatprep.subr.bf16.mxu0 %v314
    %1268 = vmatpush1.bf16.msra.mxu0 %v313
    %1269 = vmatprep.subr.bf16.mxu0 %v316
    %1270 = vmatpush1.bf16.msra.mxu0 %v315
    %1271 = vmatprep.subr.bf16.mxu0 0
    %1272 = vmatpush1.bf16.msra.mxu0 0
    %1273 = vmatprep.subr.bf16.mxu0 0
    %1274 = vmatpush1.bf16.msra.mxu0 0
    %1275 = vmatprep.subr.bf16.mxu0 0
    %1276 = vmatpush1.bf16.msra.mxu0 0
    %1277 = vmatprep.subr.bf16.mxu0 0
    %1278 = vmatpush1.bf16.msra.mxu0 0
    %1279 = vmatprep.subr.bf16.mxu0 0
    %1280 = vmatpush1.bf16.msra.mxu0 0
    %1281 = vmatprep.subr.bf16.mxu0 0
    %1282 = vmatpush1.bf16.msra.mxu0 0
    %1283 = vmatprep.subr.bf16.mxu0 0
    %1284 = vmatpush1.bf16.msra.mxu0 0
    %1285 = vmatprep.subr.bf16.mxu0 0
    %1286 = vmatpush1.bf16.msra.mxu0 0
    %1287 = vmatprep.subr.bf16.mxu0 0
    %1288 = vmatpush1.bf16.msra.mxu0 0
    %1289 = vmatprep.subr.bf16.mxu0 0
    %1290 = vmatpush1.bf16.msra.mxu0 0
    %1291 = vmatprep.subr.bf16.mxu0 0
    %1292 = vmatpush1.bf16.msra.mxu0 0
    %1293 = vmatprep.subr.bf16.mxu0 0
    %1294 = vmatpush1.bf16.msra.mxu0 0
    %1295 = vmatprep.mubr.bf16.mxu0 0
    %1296 = vmatmul.mubr.bf16.gmra.mrb[0].mxu0 %v1261
    %v1297 = vpop.f32.mrb[0].mxu0
    %v1298 = vadd.f32 0.0, %v1297
    %v1299 = vpop.f32.mrb[0].mxu0
    %v1300 = vadd.f32 0.0, %v1299
    %v1301 = vpop.f32.mrb[0].mxu0
    %v1302 = vpop.f32.mrb[0].mxu0
    %1303 = vdwg.mxu0
    %1304 = vst [vmem:[#allocation3 + $0x60] sm:$0xff] %v1298
    %1305 = vst [vmem:[#allocation3 + $0x18] sm:$0xff] %v1300
    %1306 = vmatprep.subr.bf16.mxu0 %v397
    %1307 = vmatpush1.bf16.msra.mxu0 %v396
    %1308 = vmatprep.subr.bf16.mxu0 %v399
    %1309 = vmatpush1.bf16.msra.mxu0 %v398
    %1310 = vmatprep.subr.bf16.mxu0 %v401
    %1311 = vmatpush1.bf16.msra.mxu0 %v400
    %1312 = vmatprep.subr.bf16.mxu0 %v403
    %1313 = vmatpush1.bf16.msra.mxu0 %v402
    %1314 = vmatprep.subr.bf16.mxu0 0
    %1315 = vmatpush1.bf16.msra.mxu0 0
    %1316 = vmatprep.subr.bf16.mxu0 0
    %1317 = vmatpush1.bf16.msra.mxu0 0
    %1318 = vmatprep.subr.bf16.mxu0 0
    %1319 = vmatpush1.bf16.msra.mxu0 0
    %1320 = vmatprep.subr.bf16.mxu0 0
    %1321 = vmatpush1.bf16.msra.mxu0 0
    %1322 = vmatprep.subr.bf16.mxu0 0
    %1323 = vmatpush1.bf16.msra.mxu0 0
    %1324 = vmatprep.subr.bf16.mxu0 0
    %1325 = vmatpush1.bf16.msra.mxu0 0
    %1326 = vmatprep.subr.bf16.mxu0 0
    %1327 = vmatpush1.bf16.msra.mxu0 0
    %1328 = vmatprep.subr.bf16.mxu0 0
    %1329 = vmatpush1.bf16.msra.mxu0 0
    %1330 = vmatprep.subr.bf16.mxu0 0
    %1331 = vmatpush1.bf16.msra.mxu0 0
    %1332 = vmatprep.subr.bf16.mxu0 0
    %1333 = vmatpush1.bf16.msra.mxu0 0
    %1334 = vmatprep.subr.bf16.mxu0 0
    %1335 = vmatpush1.bf16.msra.mxu0 0
    %1336 = vmatprep.subr.bf16.mxu0 0
    %1337 = vmatpush1.bf16.msra.mxu0 0
    %1338 = vmatprep.mubr.bf16.mxu0 0
    %1339 = vmatmul.mubr.bf16.gmra.mrb[0].mxu0 %v1261
    %v1340 = vpop.f32.mrb[0].mxu0
    %v1341 = vadd.f32 0.0, %v1340
    %v1342 = vpop.f32.mrb[0].mxu0
    %v1343 = vadd.f32 0.0, %v1342
    %v1344 = vpop.f32.mrb[0].mxu0
    %v1345 = vpop.f32.mrb[0].mxu0
    %1346 = vdwg.mxu0
    %v1347 = vld [vmem:[#allocation2 + $0x70] sm:$0xff]
    %v1348 = vadd.f32 %v1347, %v1341
    %v1349 = vld [vmem:[#allocation2 + $0x8] sm:$0xff]
    %v1350 = vadd.f32 %v1349, %v1343
    %v1351 = vxor.u32 %v1348, 2147483648
    %v1352 = vmul.f32 %v1351, 1.442695
    %v1353 = vpow.pop %v1352
    %v1354 = vadd.f32 %v1353, 1.0
    %v1355 = vrcp.pop %v1354
    %v1356 = vmul.f32 1.0, %v1355
    %v1357 = vtanh.pop %v1348
    %v1358 = vmul.f32 %v1356, %v1219
    %1360 = vrot.lane.b32.xlu0 %v1357, 64
    %v1361 = vpop.permute.xlu0 %1360
    %v1363 = vmul.f32 %v1356, %v1361
    %1365 = vrot.lane.b32.xlu0 %v1363, 32
    %v1366 = vpop.permute.xlu0 %1365
    %v1368 = vadd.f32 %v1358, %v1366
    %v1369 = vtanh.pop %v1368
    %1371 = vrot.lane.b32.xlu0 %v1369, 64
    %v1372 = vpop.permute.xlu0 %1371
    %v1374 = vmul.f32 %v1356, %v1372
    %v1375 = vxor.u32 %v1350, 2147483648
    %v1376 = vmul.f32 %v1375, 1.442695
    %v1377 = vpow.pop %v1376
    %v1378 = vadd.f32 %v1377, 1.0
    %v1379 = vrcp.pop %v1378
    %v1380 = vmul.f32 1.0, %v1379
    %v1381 = vtanh.pop %v1350
    %v1382 = vmul.f32 %v1380, %v1243
    %1384 = vrot.lane.b32.xlu0 %v1381, 64
    %v1385 = vpop.permute.xlu0 %1384
    %v1387 = vmul.f32 %v1380, %v1385
    %1389 = vrot.lane.b32.xlu0 %v1387, 32
    %v1390 = vpop.permute.xlu0 %1389
    %v1392 = vadd.f32 %v1382, %v1390
    %v1393 = vtanh.pop %v1392
    %1395 = vrot.lane.b32.xlu0 %v1393, 64
    %v1396 = vpop.permute.xlu0 %1395
    %v1398 = vmul.f32 %v1380, %v1396
    %1400 = vrot.lane.b32.xlu0 %v1374, 32
    %v1401 = vpop.permute.xlu0 %1400
    %1404 = vrot.lane.b32.xlu0 %v1398, 64
    %v1405 = vpop.permute.xlu0 %1404
    %v1407 = vsel %vm282, %v1401, %v1405
    %v1408 = vpack.c.bf16 %v1407, %v1407
    %v1410 = vsel %vm325, %v1408, 0
    %1412 = vmatprep.subr.bf16.mxu0 %v310
    %1413 = vmatpush1.bf16.msra.mxu0 %v309
    %1414 = vmatprep.subr.bf16.mxu0 %v312
    %1415 = vmatpush1.bf16.msra.mxu0 %v311
    %1416 = vmatprep.subr.bf16.mxu0 %v314
    %1417 = vmatpush1.bf16.msra.mxu0 %v313
    %1418 = vmatprep.subr.bf16.mxu0 %v316
    %1419 = vmatpush1.bf16.msra.mxu0 %v315
    %1420 = vmatprep.subr.bf16.mxu0 0
    %1421 = vmatpush1.bf16.msra.mxu0 0
    %1422 = vmatprep.subr.bf16.mxu0 0
    %1423 = vmatpush1.bf16.msra.mxu0 0
    %1424 = vmatprep.subr.bf16.mxu0 0
    %1425 = vmatpush1.bf16.msra.mxu0 0
    %1426 = vmatprep.subr.bf16.mxu0 0
    %1427 = vmatpush1.bf16.msra.mxu0 0
    %1428 = vmatprep.subr.bf16.mxu0 0
    %1429 = vmatpush1.bf16.msra.mxu0 0
    %1430 = vmatprep.subr.bf16.mxu0 0
    %1431 = vmatpush1.bf16.msra.mxu0 0
    %1432 = vmatprep.subr.bf16.mxu0 0
    %1433 = vmatpush1.bf16.msra.mxu0 0
    %1434 = vmatprep.subr.bf16.mxu0 0
    %1435 = vmatpush1.bf16.msra.mxu0 0
    %1436 = vmatprep.subr.bf16.mxu0 0
    %1437 = vmatpush1.bf16.msra.mxu0 0
    %1438 = vmatprep.subr.bf16.mxu0 0
    %1439 = vmatpush1.bf16.msra.mxu0 0
    %1440 = vmatprep.subr.bf16.mxu0 0
    %1441 = vmatpush1.bf16.msra.mxu0 0
    %1442 = vmatprep.subr.bf16.mxu0 0
    %1443 = vmatpush1.bf16.msra.mxu0 0
    %1444 = vmatprep.mubr.bf16.mxu0 0
    %1445 = vmatmul.mubr.bf16.gmra.mrb[0].mxu0 %v1410
    %v1446 = vpop.f32.mrb[0].mxu0
    %v1447 = vadd.f32 0.0, %v1446
    %v1448 = vpop.f32.mrb[0].mxu0
    %v1449 = vadd.f32 0.0, %v1448
    %v1450 = vpop.f32.mrb[0].mxu0
    %v1451 = vpop.f32.mrb[0].mxu0
    %1452 = vdwg.mxu0
    %1453 = vst [vmem:[#allocation3 + $0x70] sm:$0xff] %v1447
    %1454 = vst [vmem:[#allocation3 + $0x8] sm:$0xff] %v1449
    %v1455 = vld [vmem:[#allocation3 + $0x70] sm:$0xff]
    %v1456 = vld [vmem:[#allocation3 + $0x78] sm:$0xff]
    %v1457 = vadd.f32 %v1455, %v1456
    %v1459 = vlaneseq
    %v1460 = vshrl.u32 %v1459, 7
    %v1461 = vsub.s32 0, %v1460
    %v1462 = vrot.slane %v223, %v1461
    %v1464 = vadd.f32 %v1457, %v1462
    %v1465 = vxor.u32 %v1464, 2147483648
    %v1466 = vmul.f32 %v1465, 1.442695
    %v1467 = vpow.pop %v1466
    %v1468 = vadd.f32 %v1467, 1.0
    %v1469 = vrcp.pop %v1468
    %v1470 = vmul.f32 1.0, %v1469
    %v1471 = vtanh.pop %v1464
    %v1472 = vmul.f32 %v1470, 0.0
    %1474 = vrot.lane.b32.xlu0 %v1471, 64
    %v1475 = vpop.permute.xlu0 %1474
    %v1477 = vmul.f32 %v1470, %v1475
    %1479 = vrot.lane.b32.xlu0 %v1477, 32
    %v1480 = vpop.permute.xlu0 %1479
    %v1482 = vadd.f32 %v1472, %v1480
    %v1483 = vtanh.pop %v1482
    %1485 = vrot.lane.b32.xlu0 %v1483, 64
    %v1486 = vpop.permute.xlu0 %1485
    %v1488 = vmul.f32 %v1470, %v1486
    %v1489 = vld [vmem:[#allocation3 + $0x60] sm:$0xff]
    %v1490 = vld [vmem:[#allocation3 + $0x68] sm:$0xff]
    %v1491 = vadd.f32 %v1489, %v1490
    %v1492 = vadd.f32 %v1491, %v1462
    %v1493 = vpack.c.bf16 %v1488, %v1488
    %1495 = vrot.lane.b32.xlu0 %v1493, 32
    %v1496 = vpop.permute.xlu0 %1495
    %v1501 = vunpack.c.l.b16 %v219
    %v1502 = vunpack.c.l.b16 %v220
    %v1503 = vunpack.c.l.b16 %v221
    %v1504 = vunpack.c.l.b16 %v222
    %v1505 = vpack.c.b16 %v1502, %v1501
    %v1506 = vpack.c.b16 %v1504, %v1503
    %v1510 = vsel %vm282, %v1496, 0
    %1512 = vmatprep.subr.bf16.mxu0 0
    %1513 = vmatpush1.bf16.msra.mxu0 %v1505
    %1514 = vmatprep.subr.bf16.mxu0 0
    %1515 = vmatpush1.bf16.msra.mxu0 %v1506
    %1516 = vmatprep.subr.bf16.mxu0 0
    %1517 = vmatpush1.bf16.msra.mxu0 0
    %1518 = vmatprep.subr.bf16.mxu0 0
    %1519 = vmatpush1.bf16.msra.mxu0 0
    %1520 = vmatprep.subr.bf16.mxu0 0
    %1521 = vmatpush1.bf16.msra.mxu0 0
    %1522 = vmatprep.subr.bf16.mxu0 0
    %1523 = vmatpush1.bf16.msra.mxu0 0
    %1524 = vmatprep.subr.bf16.mxu0 0
    %1525 = vmatpush1.bf16.msra.mxu0 0
    %1526 = vmatprep.subr.bf16.mxu0 0
    %1527 = vmatpush1.bf16.msra.mxu0 0
    %1528 = vmatprep.subr.bf16.mxu0 0
    %1529 = vmatpush1.bf16.msra.mxu0 0
    %1530 = vmatprep.subr.bf16.mxu0 0
    %1531 = vmatpush1.bf16.msra.mxu0 0
    %1532 = vmatprep.subr.bf16.mxu0 0
    %1533 = vmatpush1.bf16.msra.mxu0 0
    %1534 = vmatprep.subr.bf16.mxu0 0
    %1535 = vmatpush1.bf16.msra.mxu0 0
    %1536 = vmatprep.subr.bf16.mxu0 0
    %1537 = vmatpush1.bf16.msra.mxu0 0
    %1538 = vmatprep.subr.bf16.mxu0 0
    %1539 = vmatpush1.bf16.msra.mxu0 0
    %1540 = vmatprep.subr.bf16.mxu0 0
    %1541 = vmatpush1.bf16.msra.mxu0 0
    %1542 = vmatprep.subr.bf16.mxu0 0
    %1543 = vmatpush1.bf16.msra.mxu0 0
    %1544 = vmatprep.mubr.bf16.mxu0 0
    %1545 = vmatmul.mubr.bf16.gmra.mrb[0].mxu0 %v1510
    %v1546 = vpop.f32.mrb[0].mxu0
    %v1547 = vadd.f32 0.0, %v1546
    %v1548 = vpop.f32.mrb[0].mxu0
    %v1549 = vpop.f32.mrb[0].mxu0
    %v1550 = vpop.f32.mrb[0].mxu0
    %1551 = vdwg.mxu0
    %v1552 = vadd.f32 %v1492, %v1547
    %v1553 = vxor.u32 %v1552, 2147483648
    %v1554 = vmul.f32 %v1553, 1.442695
    %v1555 = vpow.pop %v1554
    %v1556 = vadd.f32 %v1555, 1.0
    %v1557 = vrcp.pop %v1556
    %v1558 = vmul.f32 1.0, %v1557
    %v1559 = vtanh.pop %v1552
    %v1560 = vmul.f32 %v1558, %v1482
    %1562 = vrot.lane.b32.xlu0 %v1559, 64
    %v1563 = vpop.permute.xlu0 %1562
    %v1565 = vmul.f32 %v1558, %v1563
    %1567 = vrot.lane.b32.xlu0 %v1565, 32
    %v1568 = vpop.permute.xlu0 %1567
    %v1570 = vadd.f32 %v1560, %v1568
    %v1571 = vtanh.pop %v1570
    %1573 = vrot.lane.b32.xlu0 %v1571, 64
    %v1574 = vpop.permute.xlu0 %1573
    %v1576 = vmul.f32 %v1558, %v1574
    %v1577 = vld [vmem:[#allocation3 + $0x50] sm:$0xff]
    %v1578 = vld [vmem:[#allocation3 + $0x58] sm:$0xff]
    %v1579 = vadd.f32 %v1577, %v1578
    %v1580 = vadd.f32 %v1579, %v1462
    %v1581 = vpack.c.bf16 %v1576, %v1576
    %1583 = vrot.lane.b32.xlu0 %v1581, 32
    %v1584 = vpop.permute.xlu0 %1583
    %v1586 = vsel %vm282, %v1584, 0
    %1588 = vmatprep.subr.bf16.mxu0 0
    %1589 = vmatpush1.bf16.msra.mxu0 %v1505
    %1590 = vmatprep.subr.bf16.mxu0 0
    %1591 = vmatpush1.bf16.msra.mxu0 %v1506
    %1592 = vmatprep.subr.bf16.mxu0 0
    %1593 = vmatpush1.bf16.msra.mxu0 0
    %1594 = vmatprep.subr.bf16.mxu0 0
    %1595 = vmatpush1.bf16.msra.mxu0 0
    %1596 = vmatprep.subr.bf16.mxu0 0
    %1597 = vmatpush1.bf16.msra.mxu0 0
    %1598 = vmatprep.subr.bf16.mxu0 0
    %1599 = vmatpush1.bf16.msra.mxu0 0
    %1600 = vmatprep.subr.bf16.mxu0 0
    %1601 = vmatpush1.bf16.msra.mxu0 0
    %1602 = vmatprep.subr.bf16.mxu0 0
    %1603 = vmatpush1.bf16.msra.mxu0 0
    %1604 = vmatprep.subr.bf16.mxu0 0
    %1605 = vmatpush1.bf16.msra.mxu0 0
    %1606 = vmatprep.subr.bf16.mxu0 0
    %1607 = vmatpush1.bf16.msra.mxu0 0
    %1608 = vmatprep.subr.bf16.mxu0 0
    %1609 = vmatpush1.bf16.msra.mxu0 0
    %1610 = vmatprep.subr.bf16.mxu0 0
    %1611 = vmatpush1.bf16.msra.mxu0 0
    %1612 = vmatprep.subr.bf16.mxu0 0
    %1613 = vmatpush1.bf16.msra.mxu0 0
    %1614 = vmatprep.subr.bf16.mxu0 0
    %1615 = vmatpush1.bf16.msra.mxu0 0
    %1616 = vmatprep.subr.bf16.mxu0 0
    %1617 = vmatpush1.bf16.msra.mxu0 0
    %1618 = vmatprep.subr.bf16.mxu0 0
    %1619 = vmatpush1.bf16.msra.mxu0 0
    %1620 = vmatprep.mubr.bf16.mxu0 0
    %1621 = vmatmul.mubr.bf16.gmra.mrb[0].mxu0 %v1586
    %v1622 = vpop.f32.mrb[0].mxu0
    %v1623 = vadd.f32 0.0, %v1622
    %v1624 = vpop.f32.mrb[0].mxu0
    %v1625 = vpop.f32.mrb[0].mxu0
    %v1626 = vpop.f32.mrb[0].mxu0
    %1627 = vdwg.mxu0
    %v1628 = vadd.f32 %v1580, %v1623
    %v1629 = vxor.u32 %v1628, 2147483648
    %v1630 = vmul.f32 %v1629, 1.442695
    %v1631 = vpow.pop %v1630
    %v1632 = vadd.f32 %v1631, 1.0
    %v1633 = vrcp.pop %v1632
    %v1634 = vmul.f32 1.0, %v1633
    %v1635 = vtanh.pop %v1628
    %v1636 = vmul.f32 %v1634, %v1570
    %1638 = vrot.lane.b32.xlu0 %v1635, 64
    %v1639 = vpop.permute.xlu0 %1638
    %v1641 = vmul.f32 %v1634, %v1639
    %1643 = vrot.lane.b32.xlu0 %v1641, 32
    %v1644 = vpop.permute.xlu0 %1643
    %v1646 = vadd.f32 %v1636, %v1644
    %v1647 = vtanh.pop %v1646
    %1649 = vrot.lane.b32.xlu0 %v1647, 64
    %v1650 = vpop.permute.xlu0 %1649
    %v1652 = vmul.f32 %v1634, %v1650
    %v1653 = vld [vmem:[#allocation3 + $0x40] sm:$0xff]
    %v1654 = vld [vmem:[#allocation3 + $0x48] sm:$0xff]
    %v1655 = vadd.f32 %v1653, %v1654
    %v1656 = vadd.f32 %v1655, %v1462
    %v1657 = vpack.c.bf16 %v1652, %v1652
    %1659 = vrot.lane.b32.xlu0 %v1657, 32
    %v1660 = vpop.permute.xlu0 %1659
    %v1662 = vsel %vm282, %v1660, 0
    %1664 = vmatprep.subr.bf16.mxu0 0
    %1665 = vmatpush1.bf16.msra.mxu0 %v1505
    %1666 = vmatprep.subr.bf16.mxu0 0
    %1667 = vmatpush1.bf16.msra.mxu0 %v1506
    %1668 = vmatprep.subr.bf16.mxu0 0
    %1669 = vmatpush1.bf16.msra.mxu0 0
    %1670 = vmatprep.subr.bf16.mxu0 0
    %1671 = vmatpush1.bf16.msra.mxu0 0
    %1672 = vmatprep.subr.bf16.mxu0 0
    %1673 = vmatpush1.bf16.msra.mxu0 0
    %1674 = vmatprep.subr.bf16.mxu0 0
    %1675 = vmatpush1.bf16.msra.mxu0 0
    %1676 = vmatprep.subr.bf16.mxu0 0
    %1677 = vmatpush1.bf16.msra.mxu0 0
    %1678 = vmatprep.subr.bf16.mxu0 0
    %1679 = vmatpush1.bf16.msra.mxu0 0
    %1680 = vmatprep.subr.bf16.mxu0 0
    %1681 = vmatpush1.bf16.msra.mxu0 0
    %1682 = vmatprep.subr.bf16.mxu0 0
    %1683 = vmatpush1.bf16.msra.mxu0 0
    %1684 = vmatprep.subr.bf16.mxu0 0
    %1685 = vmatpush1.bf16.msra.mxu0 0
    %1686 = vmatprep.subr.bf16.mxu0 0
    %1687 = vmatpush1.bf16.msra.mxu0 0
    %1688 = vmatprep.subr.bf16.mxu0 0
    %1689 = vmatpush1.bf16.msra.mxu0 0
    %1690 = vmatprep.subr.bf16.mxu0 0
    %1691 = vmatpush1.bf16.msra.mxu0 0
    %1692 = vmatprep.subr.bf16.mxu0 0
    %1693 = vmatpush1.bf16.msra.mxu0 0
    %1694 = vmatprep.subr.bf16.mxu0 0
    %1695 = vmatpush1.bf16.msra.mxu0 0
    %1696 = vmatprep.mubr.bf16.mxu0 0
    %1697 = vmatmul.mubr.bf16.gmra.mrb[0].mxu0 %v1662
    %v1698 = vpop.f32.mrb[0].mxu0
    %v1699 = vadd.f32 0.0, %v1698
    %v1700 = vpop.f32.mrb[0].mxu0
    %v1701 = vpop.f32.mrb[0].mxu0
    %v1702 = vpop.f32.mrb[0].mxu0
    %1703 = vdwg.mxu0
    %v1704 = vadd.f32 %v1656, %v1699
    %v1705 = vxor.u32 %v1704, 2147483648
    %v1706 = vmul.f32 %v1705, 1.442695
    %v1707 = vpow.pop %v1706
    %v1708 = vadd.f32 %v1707, 1.0
    %v1709 = vrcp.pop %v1708
    %v1710 = vmul.f32 1.0, %v1709
    %v1711 = vtanh.pop %v1704
    %v1712 = vmul.f32 %v1710, %v1646
    %1714 = vrot.lane.b32.xlu0 %v1711, 64
    %v1715 = vpop.permute.xlu0 %1714
    %v1717 = vmul.f32 %v1710, %v1715
    %1719 = vrot.lane.b32.xlu0 %v1717, 32
    %v1720 = vpop.permute.xlu0 %1719
    %v1722 = vadd.f32 %v1712, %v1720
    %v1723 = vtanh.pop %v1722
    %1725 = vrot.lane.b32.xlu0 %v1723, 64
    %v1726 = vpop.permute.xlu0 %1725
    %v1728 = vmul.f32 %v1710, %v1726
    %v1729 = vld [vmem:[#allocation3 + $0x30] sm:$0xff]
    %v1730 = vld [vmem:[#allocation3 + $0x38] sm:$0xff]
    %v1731 = vadd.f32 %v1729, %v1730
    %v1732 = vadd.f32 %v1731, %v1462
    %v1733 = vpack.c.bf16 %v1728, %v1728
    %1735 = vrot.lane.b32.xlu0 %v1733, 32
    %v1736 = vpop.permute.xlu0 %1735
    %v1738 = vsel %vm282, %v1736, 0
    %1740 = vmatprep.subr.bf16.mxu0 0
    %1741 = vmatpush1.bf16.msra.mxu0 %v1505
    %1742 = vmatprep.subr.bf16.mxu0 0
    %1743 = vmatpush1.bf16.msra.mxu0 %v1506
    %1744 = vmatprep.subr.bf16.mxu0 0
    %1745 = vmatpush1.bf16.msra.mxu0 0
    %1746 = vmatprep.subr.bf16.mxu0 0
    %1747 = vmatpush1.bf16.msra.mxu0 0
    %1748 = vmatprep.subr.bf16.mxu0 0
    %1749 = vmatpush1.bf16.msra.mxu0 0
    %1750 = vmatprep.subr.bf16.mxu0 0
    %1751 = vmatpush1.bf16.msra.mxu0 0
    %1752 = vmatprep.subr.bf16.mxu0 0
    %1753 = vmatpush1.bf16.msra.mxu0 0
    %1754 = vmatprep.subr.bf16.mxu0 0
    %1755 = vmatpush1.bf16.msra.mxu0 0
    %1756 = vmatprep.subr.bf16.mxu0 0
    %1757 = vmatpush1.bf16.msra.mxu0 0
    %1758 = vmatprep.subr.bf16.mxu0 0
    %1759 = vmatpush1.bf16.msra.mxu0 0
    %1760 = vmatprep.subr.bf16.mxu0 0
    %1761 = vmatpush1.bf16.msra.mxu0 0
    %1762 = vmatprep.subr.bf16.mxu0 0
    %1763 = vmatpush1.bf16.msra.mxu0 0
    %1764 = vmatprep.subr.bf16.mxu0 0
    %1765 = vmatpush1.bf16.msra.mxu0 0
    %1766 = vmatprep.subr.bf16.mxu0 0
    %1767 = vmatpush1.bf16.msra.mxu0 0
    %1768 = vmatprep.subr.bf16.mxu0 0
    %1769 = vmatpush1.bf16.msra.mxu0 0
    %1770 = vmatprep.subr.bf16.mxu0 0
    %1771 = vmatpush1.bf16.msra.mxu0 0
    %1772 = vmatprep.mubr.bf16.mxu0 0
    %1773 = vmatmul.mubr.bf16.gmra.mrb[0].mxu0 %v1738
    %v1774 = vpop.f32.mrb[0].mxu0
    %v1775 = vadd.f32 0.0, %v1774
    %v1776 = vpop.f32.mrb[0].mxu0
    %v1777 = vpop.f32.mrb[0].mxu0
    %v1778 = vpop.f32.mrb[0].mxu0
    %1779 = vdwg.mxu0
    %v1780 = vadd.f32 %v1732, %v1775
    %v1781 = vxor.u32 %v1780, 2147483648
    %v1782 = vmul.f32 %v1781, 1.442695
    %v1783 = vpow.pop %v1782
    %v1784 = vadd.f32 %v1783, 1.0
    %v1785 = vrcp.pop %v1784
    %v1786 = vmul.f32 1.0, %v1785
    %v1787 = vtanh.pop %v1780
    %v1788 = vmul.f32 %v1786, %v1722
    %1790 = vrot.lane.b32.xlu0 %v1787, 64
    %v1791 = vpop.permute.xlu0 %1790
    %v1793 = vmul.f32 %v1786, %v1791
    %1795 = vrot.lane.b32.xlu0 %v1793, 32
    %v1796 = vpop.permute.xlu0 %1795
    %v1798 = vadd.f32 %v1788, %v1796
    %v1799 = vtanh.pop %v1798
    %1801 = vrot.lane.b32.xlu0 %v1799, 64
    %v1802 = vpop.permute.xlu0 %1801
    %v1804 = vmul.f32 %v1786, %v1802
    %v1805 = vld [vmem:[#allocation3 + $0x20] sm:$0xff]
    %v1806 = vld [vmem:[#allocation3 + $0x28] sm:$0xff]
    %v1807 = vadd.f32 %v1805, %v1806
    %v1808 = vadd.f32 %v1807, %v1462
    %v1809 = vpack.c.bf16 %v1804, %v1804
    %1811 = vrot.lane.b32.xlu0 %v1809, 32
    %v1812 = vpop.permute.xlu0 %1811
    %v1814 = vsel %vm282, %v1812, 0
    %1816 = vmatprep.subr.bf16.mxu0 0
    %1817 = vmatpush1.bf16.msra.mxu0 %v1505
    %1818 = vmatprep.subr.bf16.mxu0 0
    %1819 = vmatpush1.bf16.msra.mxu0 %v1506
    %1820 = vmatprep.subr.bf16.mxu0 0
    %1821 = vmatpush1.bf16.msra.mxu0 0
    %1822 = vmatprep.subr.bf16.mxu0 0
    %1823 = vmatpush1.bf16.msra.mxu0 0
    %1824 = vmatprep.subr.bf16.mxu0 0
    %1825 = vmatpush1.bf16.msra.mxu0 0
    %1826 = vmatprep.subr.bf16.mxu0 0
    %1827 = vmatpush1.bf16.msra.mxu0 0
    %1828 = vmatprep.subr.bf16.mxu0 0
    %1829 = vmatpush1.bf16.msra.mxu0 0
    %1830 = vmatprep.subr.bf16.mxu0 0
    %1831 = vmatpush1.bf16.msra.mxu0 0
    %1832 = vmatprep.subr.bf16.mxu0 0
    %1833 = vmatpush1.bf16.msra.mxu0 0
    %1834 = vmatprep.subr.bf16.mxu0 0
    %1835 = vmatpush1.bf16.msra.mxu0 0
    %1836 = vmatprep.subr.bf16.mxu0 0
    %1837 = vmatpush1.bf16.msra.mxu0 0
    %1838 = vmatprep.subr.bf16.mxu0 0
    %1839 = vmatpush1.bf16.msra.mxu0 0
    %1840 = vmatprep.subr.bf16.mxu0 0
    %1841 = vmatpush1.bf16.msra.mxu0 0
    %1842 = vmatprep.subr.bf16.mxu0 0
    %1843 = vmatpush1.bf16.msra.mxu0 0
    %1844 = vmatprep.subr.bf16.mxu0 0
    %1845 = vmatpush1.bf16.msra.mxu0 0
    %1846 = vmatprep.subr.bf16.mxu0 0
    %1847 = vmatpush1.bf16.msra.mxu0 0
    %1848 = vmatprep.mubr.bf16.mxu0 0
    %1849 = vmatmul.mubr.bf16.gmra.mrb[0].mxu0 %v1814
    %v1850 = vpop.f32.mrb[0].mxu0
    %v1851 = vadd.f32 0.0, %v1850
    %v1852 = vpop.f32.mrb[0].mxu0
    %v1853 = vpop.f32.mrb[0].mxu0
    %v1854 = vpop.f32.mrb[0].mxu0
    %1855 = vdwg.mxu0
    %v1856 = vadd.f32 %v1808, %v1851
    %v1857 = vxor.u32 %v1856, 2147483648
    %v1858 = vmul.f32 %v1857, 1.442695
    %v1859 = vpow.pop %v1858
    %v1860 = vadd.f32 %v1859, 1.0
    %v1861 = vrcp.pop %v1860
    %v1862 = vmul.f32 1.0, %v1861
    %v1863 = vtanh.pop %v1856
    %v1864 = vmul.f32 %v1862, %v1798
    %1866 = vrot.lane.b32.xlu0 %v1863, 64
    %v1867 = vpop.permute.xlu0 %1866
    %v1869 = vmul.f32 %v1862, %v1867
    %1871 = vrot.lane.b32.xlu0 %v1869, 32
    %v1872 = vpop.permute.xlu0 %1871
    %v1874 = vadd.f32 %v1864, %v1872
    %v1875 = vtanh.pop %v1874
    %1877 = vrot.lane.b32.xlu0 %v1875, 64
    %v1878 = vpop.permute.xlu0 %1877
    %v1880 = vmul.f32 %v1862, %v1878
    %v1881 = vld [vmem:[#allocation3 + $0x10] sm:$0xff]
    %v1882 = vld [vmem:[#allocation3 + $0x18] sm:$0xff]
    %v1883 = vadd.f32 %v1881, %v1882
    %v1884 = vadd.f32 %v1883, %v1462
    %v1885 = vpack.c.bf16 %v1880, %v1880
    %1887 = vrot.lane.b32.xlu0 %v1885, 32
    %v1888 = vpop.permute.xlu0 %1887
    %v1890 = vsel %vm282, %v1888, 0
    %1892 = vmatprep.subr.bf16.mxu0 0
    %1893 = vmatpush1.bf16.msra.mxu0 %v1505
    %1894 = vmatprep.subr.bf16.mxu0 0
    %1895 = vmatpush1.bf16.msra.mxu0 %v1506
    %1896 = vmatprep.subr.bf16.mxu0 0
    %1897 = vmatpush1.bf16.msra.mxu0 0
    %1898 = vmatprep.subr.bf16.mxu0 0
    %1899 = vmatpush1.bf16.msra.mxu0 0
    %1900 = vmatprep.subr.bf16.mxu0 0
    %1901 = vmatpush1.bf16.msra.mxu0 0
    %1902 = vmatprep.subr.bf16.mxu0 0
    %1903 = vmatpush1.bf16.msra.mxu0 0
    %1904 = vmatprep.subr.bf16.mxu0 0
    %1905 = vmatpush1.bf16.msra.mxu0 0
    %1906 = vmatprep.subr.bf16.mxu0 0
    %1907 = vmatpush1.bf16.msra.mxu0 0
    %1908 = vmatprep.subr.bf16.mxu0 0
    %1909 = vmatpush1.bf16.msra.mxu0 0
    %1910 = vmatprep.subr.bf16.mxu0 0
    %1911 = vmatpush1.bf16.msra.mxu0 0
    %1912 = vmatprep.subr.bf16.mxu0 0
    %1913 = vmatpush1.bf16.msra.mxu0 0
    %1914 = vmatprep.subr.bf16.mxu0 0
    %1915 = vmatpush1.bf16.msra.mxu0 0
    %1916 = vmatprep.subr.bf16.mxu0 0
    %1917 = vmatpush1.bf16.msra.mxu0 0
    %1918 = vmatprep.subr.bf16.mxu0 0
    %1919 = vmatpush1.bf16.msra.mxu0 0
    %1920 = vmatprep.subr.bf16.mxu0 0
    %1921 = vmatpush1.bf16.msra.mxu0 0
    %1922 = vmatprep.subr.bf16.mxu0 0
    %1923 = vmatpush1.bf16.msra.mxu0 0
    %1924 = vmatprep.mubr.bf16.mxu0 0
    %1925 = vmatmul.mubr.bf16.gmra.mrb[0].mxu0 %v1890
    %v1926 = vpop.f32.mrb[0].mxu0
    %v1927 = vadd.f32 0.0, %v1926
    %v1928 = vpop.f32.mrb[0].mxu0
    %v1929 = vpop.f32.mrb[0].mxu0
    %v1930 = vpop.f32.mrb[0].mxu0
    %1931 = vdwg.mxu0
    %v1932 = vadd.f32 %v1884, %v1927
    %v1933 = vxor.u32 %v1932, 2147483648
    %v1934 = vmul.f32 %v1933, 1.442695
    %v1935 = vpow.pop %v1934
    %v1936 = vadd.f32 %v1935, 1.0
    %v1937 = vrcp.pop %v1936
    %v1938 = vmul.f32 1.0, %v1937
    %v1939 = vtanh.pop %v1932
    %v1940 = vmul.f32 %v1938, %v1874
    %1942 = vrot.lane.b32.xlu0 %v1939, 64
    %v1943 = vpop.permute.xlu0 %1942
    %v1945 = vmul.f32 %v1938, %v1943
    %1947 = vrot.lane.b32.xlu0 %v1945, 32
    %v1948 = vpop.permute.xlu0 %1947
    %v1950 = vadd.f32 %v1940, %v1948
    %v1951 = vtanh.pop %v1950
    %1953 = vrot.lane.b32.xlu0 %v1951, 64
    %v1954 = vpop.permute.xlu0 %1953
    %v1956 = vmul.f32 %v1938, %v1954
    %v1957 = vld [vmem:[#allocation3] sm:$0xff]
    %v1958 = vld [vmem:[#allocation3 + $0x8] sm:$0xff]
    %v1959 = vadd.f32 %v1957, %v1958
    %v1960 = vadd.f32 %v1959, %v1462
    %v1961 = vpack.c.bf16 %v1956, %v1956
    %1963 = vrot.lane.b32.xlu0 %v1961, 32
    %v1964 = vpop.permute.xlu0 %1963
    %v1966 = vsel %vm282, %v1964, 0
    %1968 = vmatprep.subr.bf16.mxu0 0
    %1969 = vmatpush1.bf16.msra.mxu0 %v1505
    %1970 = vmatprep.subr.bf16.mxu0 0
    %1971 = vmatpush1.bf16.msra.mxu0 %v1506
    %1972 = vmatprep.subr.bf16.mxu0 0
    %1973 = vmatpush1.bf16.msra.mxu0 0
    %1974 = vmatprep.subr.bf16.mxu0 0
    %1975 = vmatpush1.bf16.msra.mxu0 0
    %1976 = vmatprep.subr.bf16.mxu0 0
    %1977 = vmatpush1.bf16.msra.mxu0 0
    %1978 = vmatprep.subr.bf16.mxu0 0
    %1979 = vmatpush1.bf16.msra.mxu0 0
    %1980 = vmatprep.subr.bf16.mxu0 0
    %1981 = vmatpush1.bf16.msra.mxu0 0
    %1982 = vmatprep.subr.bf16.mxu0 0
    %1983 = vmatpush1.bf16.msra.mxu0 0
    %1984 = vmatprep.subr.bf16.mxu0 0
    %1985 = vmatpush1.bf16.msra.mxu0 0
    %1986 = vmatprep.subr.bf16.mxu0 0
    %1987 = vmatpush1.bf16.msra.mxu0 0
    %1988 = vmatprep.subr.bf16.mxu0 0
    %1989 = vmatpush1.bf16.msra.mxu0 0
    %1990 = vmatprep.subr.bf16.mxu0 0
    %1991 = vmatpush1.bf16.msra.mxu0 0
    %1992 = vmatprep.subr.bf16.mxu0 0
    %1993 = vmatpush1.bf16.msra.mxu0 0
    %1994 = vmatprep.subr.bf16.mxu0 0
    %1995 = vmatpush1.bf16.msra.mxu0 0
    %1996 = vmatprep.subr.bf16.mxu0 0
    %1997 = vmatpush1.bf16.msra.mxu0 0
    %1998 = vmatprep.subr.bf16.mxu0 0
    %1999 = vmatpush1.bf16.msra.mxu0 0
    %2000 = vmatprep.mubr.bf16.mxu0 0
    %2001 = vmatmul.mubr.bf16.gmra.mrb[0].mxu0 %v1966
    %v2002 = vpop.f32.mrb[0].mxu0
    %v2003 = vadd.f32 0.0, %v2002
    %v2004 = vpop.f32.mrb[0].mxu0
    %v2005 = vpop.f32.mrb[0].mxu0
    %v2006 = vpop.f32.mrb[0].mxu0
    %2007 = vdwg.mxu0
    %v2008 = vadd.f32 %v1960, %v2003
    %v2009 = vxor.u32 %v2008, 2147483648
    %v2010 = vmul.f32 %v2009, 1.442695
    %v2011 = vpow.pop %v2010
    %v2012 = vadd.f32 %v2011, 1.0
    %v2013 = vrcp.pop %v2012
    %v2014 = vmul.f32 1.0, %v2013
    %v2015 = vtanh.pop %v2008
    %v2016 = vmul.f32 %v2014, %v1950
    %2018 = vrot.lane.b32.xlu0 %v2015, 64
    %v2019 = vpop.permute.xlu0 %2018
    %v2021 = vmul.f32 %v2014, %v2019
    %2023 = vrot.lane.b32.xlu0 %v2021, 32
    %v2024 = vpop.permute.xlu0 %2023
    %v2026 = vadd.f32 %v2016, %v2024
    %v2027 = vtanh.pop %v2026
    %2029 = vrot.lane.b32.xlu0 %v2027, 64
    %v2030 = vpop.permute.xlu0 %2029
    %v2032 = vmul.f32 %v2014, %v2030
    %v2033 = vld [vmem:[%s7] sm:$0xff]
    %v2034 = vld [vmem:[%s7 + $0x8] sm:$0xff]
    %v2035 = vld [vmem:[%s7 + $0x10] sm:$0xff]
    %v2036 = vld [vmem:[%s7 + $0x18] sm:$0xff]
    %v2037 = vld [vmem:[#allocation4] sm:$0x1]
    %v2039 = vlaneseq
    %v2040 = vshrl.u32 %v2039, 7
    %v2041 = vsub.s32 0, %v2040
    %v2042 = vrot.slane %v2037, %v2041
    %2045 = vrot.lane.b32.xlu0 %v2032, 32
    %v2046 = vpop.permute.xlu0 %2045
    %v2047 = vsel %vm282, %v2046, 0
    %2049 = vmatprep.subr.mxu0 0.0
    %2050 = vmatpush1.msra.mxu0 %v2033
    %2051 = vmatprep.subr.mxu0 0.0
    %2052 = vmatpush1.msra.mxu0 %v2034
    %2053 = vmatprep.subr.mxu0 0.0
    %2054 = vmatpush1.msra.mxu0 %v2035
    %2055 = vmatprep.subr.mxu0 0.0
    %2056 = vmatpush1.msra.mxu0 %v2036
    %2057 = vmatprep.subr.mxu0 0.0
    %2058 = vmatpush1.msra.mxu0 0.0
    %2059 = vmatprep.subr.mxu0 0.0
    %2060 = vmatpush1.msra.mxu0 0.0
    %2061 = vmatprep.subr.mxu0 0.0
    %2062 = vmatpush1.msra.mxu0 0.0
    %2063 = vmatprep.subr.mxu0 0.0
    %2064 = vmatpush1.msra.mxu0 0.0
    %2065 = vmatprep.subr.mxu0 0.0
    %2066 = vmatpush1.msra.mxu0 0.0
    %2067 = vmatprep.subr.mxu0 0.0
    %2068 = vmatpush1.msra.mxu0 0.0
    %2069 = vmatprep.subr.mxu0 0.0
    %2070 = vmatpush1.msra.mxu0 0.0
    %2071 = vmatprep.subr.mxu0 0.0
    %2072 = vmatpush1.msra.mxu0 0.0
    %2073 = vmatprep.subr.mxu0 0.0
    %2074 = vmatpush1.msra.mxu0 0.0
    %2075 = vmatprep.subr.mxu0 0.0
    %2076 = vmatpush1.msra.mxu0 0.0
    %2077 = vmatprep.subr.mxu0 0.0
    %2078 = vmatpush1.msra.mxu0 0.0
    %2079 = vmatprep.subr.mxu0 0.0
    %2080 = vmatpush1.msra.mxu0 0.0
    %2081 = vmatprep.subr.mxu0 0.0
    %2082 = vmatpush1.msra.mxu0 0.0
    %2083 = vmatprep.subr.mxu0 0.0
    %2084 = vmatpush1.msra.mxu0 0.0
    %2085 = vmatprep.subr.mxu0 0.0
    %2086 = vmatpush1.msra.mxu0 0.0
    %2087 = vmatprep.subr.mxu0 0.0
    %2088 = vmatpush1.msra.mxu0 0.0
    %2089 = vmatprep.subr.mxu0 0.0
    %2090 = vmatpush1.msra.mxu0 0.0
    %2091 = vmatprep.subr.mxu0 0.0
    %2092 = vmatpush1.msra.mxu0 0.0
    %2093 = vmatprep.subr.mxu0 0.0
    %2094 = vmatpush1.msra.mxu0 0.0
    %2095 = vmatprep.subr.mxu0 0.0
    %2096 = vmatpush1.msra.mxu0 0.0
    %2097 = vmatprep.subr.mxu0 0.0
    %2098 = vmatpush1.msra.mxu0 0.0
    %2099 = vmatprep.subr.mxu0 0.0
    %2100 = vmatpush1.msra.mxu0 0.0
    %2101 = vmatprep.subr.mxu0 0.0
    %2102 = vmatpush1.msra.mxu0 0.0
    %2103 = vmatprep.subr.mxu0 0.0
    %2104 = vmatpush1.msra.mxu0 0.0
    %2105 = vmatprep.subr.mxu0 0.0
    %2106 = vmatpush1.msra.mxu0 0.0
    %2107 = vmatprep.subr.mxu0 0.0
    %2108 = vmatpush1.msra.mxu0 0.0
    %2109 = vmatprep.subr.mxu0 0.0
    %2110 = vmatpush1.msra.mxu0 0.0
    %2111 = vmatprep.subr.mxu0 0.0
    %2112 = vmatpush1.msra.mxu0 0.0
    %2113 = vmatprep.mubr.f32.mxu0 0.0
    %2114 = vmatmul.mubr.f32.gmra.mrb[0].mxu0 %v2047
    %v2115 = vpop.f32.mrb[0].mxu0
    %v2116 = vadd.f32 %v2042, %v2115
    %v2117 = vpop.f32.mrb[0].mxu0
    %2118 = vdwg.mxu0
    %vm2119 = vcmask 7168
    %2120 = vst.msk [vmem:[%s9] sm:$0xff] %vm2119, %v2116
    // Predicated region
    $region42: #{tpu_custom_call.1} parent=1 // pred_check
      _
    $region43: #{tpu_custom_call.1} parent=1 // pred_check_branch
      %2122 = sbr.rel (0) target = $region45
    $region44: #{tpu_custom_call.1} parent=1 // pred_region
      _
    $region45: #{tpu_custom_call.1} parent=1 // pred_fallthru
      _
    // Predicated region
    $region46: #{tpu_custom_call.1} parent=1 // pred_check
      _
    $region47: #{tpu_custom_call.1} parent=1 // pred_check_branch
      %2124 = sbr.rel (0) target = $region49
    $region48: #{tpu_custom_call.1} parent=1 // pred_region
      _
    $region49: #{tpu_custom_call.1} parent=1 // pred_fallthru
      _
    %2125 = vsyncpa [#allocation6], 1

</llo_original>
